<compile_context>
chip_gen: v7x
topology: tpu7x:2x2x1
jax: 0.10.0
libtpu: 0.0.40
codegen_flags: <defaults>
</compile_context>

<pallas_src>
import jax
import jax.numpy as jnp
from jax import lax
from jax.experimental import pallas as pl
from jax.experimental.pallas import tpu as pltpu

BN_EPS = 1e-5
_IW = 8  # interior column offset inside the padded scratch (sublane aligned)


def _dpcb_conv_kernel(x_ref, w0_ref, w1_ref, w2_ref,
                      pre_ref, sum_ref, sq_ref, pad_ref):
    """One batch sample per grid step.

    x_ref   : (1, H, W, Cin)        input tile (NHWC)
    w0_ref  : (Cin, Cout)           1x1 pointwise conv weight
    w1_ref  : (3, 3, Cout)          depthwise 3x3, dilation 1
    w2_ref  : (3, 3, Cout)          depthwise 3x3, dilation 2
    pre_ref : (1, H, W, Cout)       pre-BatchNorm activations (output)
    sum_ref : (1, 1, Cout)          per-sample channel sum (output)
    sq_ref  : (1, 1, Cout)          per-sample channel sum of squares (output)
    pad_ref : (H+4, _IW+W+2, Cout)  zero-halo scratch for the shift-and-MAC
    """
    H = x_ref.shape[1]
    W = x_ref.shape[2]
    Cin = x_ref.shape[3]
    Cout = w0_ref.shape[1]

    # Zero only the halo ring (interior is fully rewritten below); the read
    # window is rows [0, H+4) x cols [_IW-2, _IW+W+2).
    pad_ref[0:2, :, :] = jnp.zeros((2, pad_ref.shape[1], Cout), jnp.float32)
    pad_ref[2 + H:4 + H, :, :] = jnp.zeros((2, pad_ref.shape[1], Cout), jnp.float32)
    pad_ref[:, _IW - 2:_IW, :] = jnp.zeros((pad_ref.shape[0], 2, Cout), jnp.float32)
    pad_ref[:, _IW + W:_IW + W + 2, :] = jnp.zeros((pad_ref.shape[0], 2, Cout),
                                                   jnp.float32)

    # --- conv0: 1x1 pointwise conv == (H*W, Cin) x (Cin, Cout) matmul ---
    # TODO(synk): for production Cin/Cout >= 128 feed bf16 operands here (keep
    # f32 accumulation); f32 kept to match the f32 PyTorch module exactly.
    x = x_ref[0]                                            # (H, W, Cin)
    y = jnp.dot(x.reshape(H * W, Cin), w0_ref[...],
                preferred_element_type=jnp.float32).reshape(H, W, Cout)

    # Sublane-aligned (offset _IW=8), unmasked interior store.
    pad_ref[2:2 + H, _IW:_IW + W, :] = y

    w1 = w1_ref[...]
    w2 = w2_ref[...]

    # --- depthwise 3x3 dil=1 + 3x3 dil=2 via shift-and-MAC.
    # Center taps of the two branches coincide -> merged (17 taps, not 18).
    # Two independent accumulator chains expose ILP across the VALU slots.
    acc_a = y * (w1[1, 1, :] + w2[1, 1, :])                 # merged center tap
    acc_b = None
    for ky in range(3):
        for kx in range(3):
            if ky == 1 and kx == 1:
                continue
            # dilation 1, padding 1: offset (ky-1, kx-1)
            t1 = pad_ref[1 + ky:1 + ky + H,
                         _IW - 1 + kx:_IW - 1 + kx + W, :] * w1[ky, kx, :]
            # dilation 2, padding 2: offset (2*(ky-1), 2*(kx-1))
            t2 = pad_ref[2 * ky:2 * ky + H,
                         _IW - 2 + 2 * kx:_IW - 2 + 2 * kx + W, :] * w2[ky, kx, :]
            acc_a = acc_a + t1
            acc_b = t2 if acc_b is None else acc_b + t2
    pre = acc_a + acc_b
    pre_ref[0] = pre

    # --- fused BatchNorm statistics (avoids a second full activation read) ---
    sum_ref[0] = jnp.sum(jnp.sum(pre, axis=0), axis=0, keepdims=True)
    sq_ref[0] = jnp.sum(jnp.sum(pre * pre, axis=0), axis=0, keepdims=True)


def _bn_affine_kernel(pre_ref, scale_ref, shift_ref, out_ref):
    """Folded BN affine: out = pre * scale + shift.

    Operates on a lane-dense (H, W*Cout) view so stores are wide and unmasked.
    scale/shift are the per-channel vectors tiled W times to match the
    flattened lane axis.
    """
    out_ref[0] = pre_ref[0] * scale_ref[...] + shift_ref[...]


def dilated_parallel_conv_block_d2(x_nchw, w0, w1, w2, gamma, beta):
    """x_nchw: (N,Cin,H,W); w0: (Cout,Cin,1,1); w1,w2: (Cout,1,3,3);
    gamma,beta: (Cout,).  Returns (N,Cout,H,W) (training-mode BN forward)."""
    N, Cin, H, W = x_nchw.shape
    Cout = w0.shape[0]

    # TODO(synk): if the surrounding model can run NHWC end-to-end, drop these
    # boundary transposes (each is a full-tensor HBM pass).
    x = jnp.transpose(x_nchw, (0, 2, 3, 1)).astype(jnp.float32)            # NHWC
    w0_m = jnp.transpose(w0[:, :, 0, 0], (1, 0)).astype(jnp.float32)       # (Cin,Cout)
    w1_m = jnp.transpose(w1[:, 0, :, :], (1, 2, 0)).astype(jnp.float32)    # (3,3,Cout)
    w2_m = jnp.transpose(w2[:, 0, :, :], (1, 2, 0)).astype(jnp.float32)

    cparams = pltpu.CompilerParams(
        dimension_semantics=("parallel",),       # batch axis -> 2 TCs on v7x
        vmem_limit_bytes=32 * 1024 * 1024)       # explicit budget, < v7x 64 MiB

    vmem_full = pl.BlockSpec(memory_space=pltpu.MemorySpace.VMEM)

    pre, ssum, ssq = pl.pallas_call(
        _dpcb_conv_kernel,
        out_shape=[
            jax.ShapeDtypeStruct((N, H, W, Cout), jnp.float32),   # pre-BN act
            jax.ShapeDtypeStruct((N, 1, Cout), jnp.float32),      # per-sample sum
            jax.ShapeDtypeStruct((N, 1, Cout), jnp.float32),      # per-sample sumsq
        ],
        grid=(N,),
        in_specs=[
            pl.BlockSpec((1, H, W, Cin), lambda n: (n, 0, 0, 0)),
            vmem_full,   # w0
            vmem_full,   # w1
            vmem_full,   # w2
        ],
        out_specs=[
            pl.BlockSpec((1, H, W, Cout), lambda n: (n, 0, 0, 0)),
            pl.BlockSpec((1, 1, Cout), lambda n: (n, 0, 0)),
            pl.BlockSpec((1, 1, Cout), lambda n: (n, 0, 0)),
        ],
        scratch_shapes=[pltpu.VMEM((H + 4, _IW + W + 2, Cout), jnp.float32)],
        compiler_params=cparams,
    )(x, w0_m, w1_m, w2_m)

    # --- fold BatchNorm (training forward: batch mean, biased variance) into a
    #     per-channel scale/shift, computed on tiny (Cout,) vectors. ---
    cnt = jnp.float32(N * H * W)
    mean = jnp.sum(ssum[:, 0, :], axis=0) / cnt
    var = jnp.sum(ssq[:, 0, :], axis=0) / cnt - mean * mean
    var = jnp.maximum(var, 0.0)                       # guard f32 cancellation
    scale = gamma.astype(jnp.float32) * lax.rsqrt(var + BN_EPS)
    shift = beta.astype(jnp.float32) - mean * scale

    # Lane-dense affine pass: last dim = W*Cout (contiguous reshape, no copy).
    scale_t = jnp.tile(scale, W).reshape(1, W * Cout)
    shift_t = jnp.tile(shift, W).reshape(1, W * Cout)
    pre_flat = pre.reshape(N, H, W * Cout)

    out_flat = pl.pallas_call(
        _bn_affine_kernel,
        out_shape=jax.ShapeDtypeStruct((N, H, W * Cout), jnp.float32),
        grid=(N,),
        in_specs=[
            pl.BlockSpec((1, H, W * Cout), lambda n: (n, 0, 0)),
            vmem_full,   # scale (tiled)
            vmem_full,   # shift (tiled)
        ],
        out_specs=pl.BlockSpec((1, H, W * Cout), lambda n: (n, 0, 0)),
        compiler_params=cparams,
    )(pre_flat, scale_t, shift_t)

    out_nhwc = out_flat.reshape(N, H, W, Cout)
    return jnp.transpose(out_nhwc, (0, 3, 1, 2))      # back to NCHW


def _reference(x_nchw, w0, w1, w2, gamma, beta):
    """Pure-JAX reference (lax convs) of the PyTorch forward."""
    Cout = w0.shape[0]
    x = jnp.transpose(x_nchw, (0, 2, 3, 1))
    dn = ('NHWC', 'HWIO', 'NHWC')
    y = lax.conv_general_dilated(x, jnp.transpose(w0, (2, 3, 1, 0)),
                                 (1, 1), 'VALID', dimension_numbers=dn)
    d1 = lax.conv_general_dilated(y, jnp.transpose(w1, (2, 3, 1, 0)),
                                  (1, 1), [(1, 1), (1, 1)],
                                  dimension_numbers=dn, feature_group_count=Cout)
    d2 = lax.conv_general_dilated(y, jnp.transpose(w2, (2, 3, 1, 0)),
                                  (1, 1), [(2, 2), (2, 2)],
                                  rhs_dilation=(2, 2),
                                  dimension_numbers=dn, feature_group_count=Cout)
    pre = d1 + d2
    mean = jnp.mean(pre, axis=(0, 1, 2))
    var = jnp.var(pre, axis=(0, 1, 2))
    out = (pre - mean) * lax.rsqrt(var + BN_EPS) * gamma + beta
    return jnp.transpose(out, (0, 3, 1, 2))


if __name__ == "__main__":
    N, Cin, Cout, H, W = 2, 8, 32, 16, 16
    key = jax.random.PRNGKey(0)
    kx, k0, k1, k2, kg, kb = jax.random.split(key, 6)

    x = jax.random.normal(kx, (N, Cin, H, W), jnp.float32)
    w0 = jax.random.normal(k0, (Cout, Cin, 1, 1), jnp.float32) * 0.3
    w1 = jax.random.normal(k1, (Cout, 1, 3, 3), jnp.float32) * 0.3
    w2 = jax.random.normal(k2, (Cout, 1, 3, 3), jnp.float32) * 0.3
    gamma = 1.0 + 0.1 * jax.random.normal(kg, (Cout,), jnp.float32)
    beta = 0.1 * jax.random.normal(kb, (Cout,), jnp.float32)

    out = jax.jit(dilated_parallel_conv_block_d2)(x, w0, w1, w2, gamma, beta)
    out = jax.block_until_ready(out)

    ref = _reference(x, w0, w1, w2, gamma, beta)
    assert out.shape == (N, Cout, H, W)
    err = jnp.max(jnp.abs(out - ref))
    assert jnp.allclose(out, ref, atol=5e-4, rtol=5e-4), f"max abs err {err}"

    print("KERNEL_OK")
</pallas_src>

<mosaic_0001>
module attributes {stable_mosaic.version = 11 : i64} {
  func.func @_dpcb_conv_kernel(%arg0: i32, %arg1: memref<1x16x16x8xf32, #tpu.memory_space<vmem>>, %arg2: memref<8x32xf32, #tpu.memory_space<vmem>>, %arg3: memref<3x3x32xf32, #tpu.memory_space<vmem>>, %arg4: memref<3x3x32xf32, #tpu.memory_space<vmem>>, %arg5: memref<1x16x16x32xf32, #tpu.memory_space<vmem>>, %arg6: memref<1x1x32xf32, #tpu.memory_space<vmem>>, %arg7: memref<1x1x32xf32, #tpu.memory_space<vmem>>, %arg8: memref<20x26x32xf32, #tpu.memory_space<vmem>>) attributes {dimension_semantics = [#tpu.dimension_semantics<parallel>], iteration_bounds = array<i64: 2>, scalar_prefetch = 0 : i64, scratch_operands = 1 : i64, tpu.core_type = #tpu.core_type<tc>, window_params = [{transform_indices = @transform_0, window_bounds = array<i64: 1, 16, 16, 8>}, {pipeline_mode = #tpu.pipeline_mode<synchronous>, transform_indices = @transform_1, window_bounds = array<i64: 8, 32>}, {pipeline_mode = #tpu.pipeline_mode<synchronous>, transform_indices = @transform_2, window_bounds = array<i64: 3, 3, 32>}, {pipeline_mode = #tpu.pipeline_mode<synchronous>, transform_indices = @transform_3, window_bounds = array<i64: 3, 3, 32>}, {transform_indices = @transform_4, window_bounds = array<i64: 1, 16, 16, 32>}, {transform_indices = @transform_5, window_bounds = array<i64: 1, 1, 32>}, {transform_indices = @transform_6, window_bounds = array<i64: 1, 1, 32>}]} {
    %cst = arith.constant 0.000000e+00 : f32
    %0 = vector.broadcast %cst : f32 to vector<2x26x32xf32>
    %c0 = arith.constant 0 : index
    %c0_0 = arith.constant 0 : index
    %c0_1 = arith.constant 0 : index
    %1 = vector.load %arg8[%c0, %c0_0, %c0_1] : memref<20x26x32xf32, #tpu.memory_space<vmem>>, vector<2x26x32xf32>
    tpu.vector_store %arg8[%c0, %c0_0, %c0_1], %0 {strides = array<i32>} : memref<20x26x32xf32, #tpu.memory_space<vmem>>, vector<2x26x32xf32>,
    %cst_2 = arith.constant 0.000000e+00 : f32
    %2 = vector.broadcast %cst_2 : f32 to vector<2x26x32xf32>
    %c18 = arith.constant 18 : index
    %c0_3 = arith.constant 0 : index
    %c0_4 = arith.constant 0 : index
    %3 = vector.load %arg8[%c18, %c0_3, %c0_4] : memref<20x26x32xf32, #tpu.memory_space<vmem>>, vector<2x26x32xf32>
    tpu.vector_store %arg8[%c18, %c0_3, %c0_4], %2 {strides = array<i32>} : memref<20x26x32xf32, #tpu.memory_space<vmem>>, vector<2x26x32xf32>,
    %cst_5 = arith.constant 0.000000e+00 : f32
    %4 = vector.broadcast %cst_5 : f32 to vector<20x2x32xf32>
    %c0_6 = arith.constant 0 : index
    %c6 = arith.constant 6 : index
    %c0_7 = arith.constant 0 : index
    %5 = vector.load %arg8[%c0_6, %c6, %c0_7] : memref<20x26x32xf32, #tpu.memory_space<vmem>>, vector<20x2x32xf32>
    tpu.vector_store %arg8[%c0_6, %c6, %c0_7], %4 {strides = array<i32>} : memref<20x26x32xf32, #tpu.memory_space<vmem>>, vector<20x2x32xf32>,
    %cst_8 = arith.constant 0.000000e+00 : f32
    %6 = vector.broadcast %cst_8 : f32 to vector<20x2x32xf32>
    %c0_9 = arith.constant 0 : index
    %c24 = arith.constant 24 : index
    %c0_10 = arith.constant 0 : index
    %7 = vector.load %arg8[%c0_9, %c24, %c0_10] : memref<20x26x32xf32, #tpu.memory_space<vmem>>, vector<20x2x32xf32>
    tpu.vector_store %arg8[%c0_9, %c24, %c0_10], %6 {strides = array<i32>} : memref<20x26x32xf32, #tpu.memory_space<vmem>>, vector<20x2x32xf32>,
    %c0_11 = arith.constant 0 : index
    %c0_12 = arith.constant 0 : index
    %c0_13 = arith.constant 0 : index
    %c0_14 = arith.constant 0 : index
    %8 = vector.load %arg1[%c0_11, %c0_12, %c0_13, %c0_14] : memref<1x16x16x8xf32, #tpu.memory_space<vmem>>, vector<1x16x16x8xf32>
    %9 = vector.shape_cast %8 : vector<1x16x16x8xf32> to vector<16x16x8xf32>
    %10 = vector.shape_cast %9 : vector<16x16x8xf32> to vector<256x8xf32>
    %c0_15 = arith.constant 0 : index
    %c0_16 = arith.constant 0 : index
    %11 = vector.load %arg2[%c0_15, %c0_16] : memref<8x32xf32, #tpu.memory_space<vmem>>, vector<8x32xf32>
    %cst_17 = arith.constant dense<0.000000e+00> : vector<256x32xf32>
    %12 = tpu.matmul %10, %11, %cst_17 {dimension_numbers = #tpu.dot_dimension_numbers<[1], [0], [0], [1], [0, 0, 1, 1], [], []>} : vector<256x8xf32>, vector<8x32xf32>, vector<256x32xf32> -> vector<256x32xf32>
    %13 = vector.shape_cast %12 : vector<256x32xf32> to vector<16x16x32xf32>
    %c2 = arith.constant 2 : index
    %c8 = arith.constant 8 : index
    %c0_18 = arith.constant 0 : index
    %14 = vector.load %arg8[%c2, %c8, %c0_18] : memref<20x26x32xf32, #tpu.memory_space<vmem>>, vector<16x16x32xf32>
    tpu.vector_store %arg8[%c2, %c8, %c0_18], %13 {strides = array<i32>} : memref<20x26x32xf32, #tpu.memory_space<vmem>>, vector<16x16x32xf32>,
    %c0_19 = arith.constant 0 : index
    %c0_20 = arith.constant 0 : index
    %c0_21 = arith.constant 0 : index
    %15 = vector.load %arg3[%c0_19, %c0_20, %c0_21] : memref<3x3x32xf32, #tpu.memory_space<vmem>>, vector<3x3x32xf32>
    %c0_22 = arith.constant 0 : index
    %c0_23 = arith.constant 0 : index
    %c0_24 = arith.constant 0 : index
    %16 = vector.load %arg4[%c0_22, %c0_23, %c0_24] : memref<3x3x32xf32, #tpu.memory_space<vmem>>, vector<3x3x32xf32>
    %17 = vector.extract_strided_slice %15 {offsets = [1, 1, 0], sizes = [1, 1, 32], strides = [1, 1, 1]} : vector<3x3x32xf32> to vector<1x1x32xf32>
    %18 = vector.shape_cast %17 : vector<1x1x32xf32> to vector<32xf32>
    %19 = vector.extract_strided_slice %16 {offsets = [1, 1, 0], sizes = [1, 1, 32], strides = [1, 1, 1]} : vector<3x3x32xf32> to vector<1x1x32xf32>
    %20 = vector.shape_cast %19 : vector<1x1x32xf32> to vector<32xf32>
    %21 = arith.addf %18, %20 : vector<32xf32>
    %22 = vector.shape_cast %21 : vector<32xf32> to vector<1x1x32xf32>
    %23 = vector.broadcast %22 : vector<1x1x32xf32> to vector<16x16x32xf32>
    %24 = arith.mulf %13, %23 : vector<16x16x32xf32>
    %c1 = arith.constant 1 : index
    %c7 = arith.constant 7 : index
    %c0_25 = arith.constant 0 : index
    %25 = vector.load %arg8[%c1, %c7, %c0_25] : memref<20x26x32xf32, #tpu.memory_space<vmem>>, vector<16x16x32xf32>
    %26 = vector.extract_strided_slice %15 {offsets = [0, 0, 0], sizes = [1, 1, 32], strides = [1, 1, 1]} : vector<3x3x32xf32> to vector<1x1x32xf32>
    %27 = vector.shape_cast %26 : vector<1x1x32xf32> to vector<32xf32>
    %28 = vector.shape_cast %27 : vector<32xf32> to vector<1x1x32xf32>
    %29 = vector.broadcast %28 : vector<1x1x32xf32> to vector<16x16x32xf32>
    %30 = arith.mulf %25, %29 : vector<16x16x32xf32>
    %c0_26 = arith.constant 0 : index
    %c6_27 = arith.constant 6 : index
    %c0_28 = arith.constant 0 : index
    %31 = vector.load %arg8[%c0_26, %c6_27, %c0_28] : memref<20x26x32xf32, #tpu.memory_space<vmem>>, vector<16x16x32xf32>
    %32 = vector.extract_strided_slice %16 {offsets = [0, 0, 0], sizes = [1, 1, 32], strides = [1, 1, 1]} : vector<3x3x32xf32> to vector<1x1x32xf32>
    %33 = vector.shape_cast %32 : vector<1x1x32xf32> to vector<32xf32>
    %34 = vector.shape_cast %33 : vector<32xf32> to vector<1x1x32xf32>
    %35 = vector.broadcast %34 : vector<1x1x32xf32> to vector<16x16x32xf32>
    %36 = arith.mulf %31, %35 : vector<16x16x32xf32>
    %37 = arith.addf %24, %30 : vector<16x16x32xf32>
    %c1_29 = arith.constant 1 : index
    %c8_30 = arith.constant 8 : index
    %c0_31 = arith.constant 0 : index
    %38 = vector.load %arg8[%c1_29, %c8_30, %c0_31] : memref<20x26x32xf32, #tpu.memory_space<vmem>>, vector<16x16x32xf32>
    %39 = vector.extract_strided_slice %15 {offsets = [0, 1, 0], sizes = [1, 1, 32], strides = [1, 1, 1]} : vector<3x3x32xf32> to vector<1x1x32xf32>
    %40 = vector.shape_cast %39 : vector<1x1x32xf32> to vector<32xf32>
    %41 = vector.shape_cast %40 : vector<32xf32> to vector<1x1x32xf32>
    %42 = vector.broadcast %41 : vector<1x1x32xf32> to vector<16x16x32xf32>
    %43 = arith.mulf %38, %42 : vector<16x16x32xf32>
    %c0_32 = arith.constant 0 : index
    %c8_33 = arith.constant 8 : index
    %c0_34 = arith.constant 0 : index
    %44 = vector.load %arg8[%c0_32, %c8_33, %c0_34] : memref<20x26x32xf32, #tpu.memory_space<vmem>>, vector<16x16x32xf32>
    %45 = vector.extract_strided_slice %16 {offsets = [0, 1, 0], sizes = [1, 1, 32], strides = [1, 1, 1]} : vector<3x3x32xf32> to vector<1x1x32xf32>
    %46 = vector.shape_cast %45 : vector<1x1x32xf32> to vector<32xf32>
    %47 = vector.shape_cast %46 : vector<32xf32> to vector<1x1x32xf32>
    %48 = vector.broadcast %47 : vector<1x1x32xf32> to vector<16x16x32xf32>
    %49 = arith.mulf %44, %48 : vector<16x16x32xf32>
    %50 = arith.addf %37, %43 : vector<16x16x32xf32>
    %51 = arith.addf %36, %49 : vector<16x16x32xf32>
    %c1_35 = arith.constant 1 : index
    %c9 = arith.constant 9 : index
    %c0_36 = arith.constant 0 : index
    %52 = vector.load %arg8[%c1_35, %c9, %c0_36] : memref<20x26x32xf32, #tpu.memory_space<vmem>>, vector<16x16x32xf32>
    %53 = vector.extract_strided_slice %15 {offsets = [0, 2, 0], sizes = [1, 1, 32], strides = [1, 1, 1]} : vector<3x3x32xf32> to vector<1x1x32xf32>
    %54 = vector.shape_cast %53 : vector<1x1x32xf32> to vector<32xf32>
    %55 = vector.shape_cast %54 : vector<32xf32> to vector<1x1x32xf32>
    %56 = vector.broadcast %55 : vector<1x1x32xf32> to vector<16x16x32xf32>
    %57 = arith.mulf %52, %56 : vector<16x16x32xf32>
    %c0_37 = arith.constant 0 : index
    %c10 = arith.constant 10 : index
    %c0_38 = arith.constant 0 : index
    %58 = vector.load %arg8[%c0_37, %c10, %c0_38] : memref<20x26x32xf32, #tpu.memory_space<vmem>>, vector<16x16x32xf32>
    %59 = vector.extract_strided_slice %16 {offsets = [0, 2, 0], sizes = [1, 1, 32], strides = [1, 1, 1]} : vector<3x3x32xf32> to vector<1x1x32xf32>
    %60 = vector.shape_cast %59 : vector<1x1x32xf32> to vector<32xf32>
    %61 = vector.shape_cast %60 : vector<32xf32> to vector<1x1x32xf32>
    %62 = vector.broadcast %61 : vector<1x1x32xf32> to vector<16x16x32xf32>
    %63 = arith.mulf %58, %62 : vector<16x16x32xf32>
    %64 = arith.addf %50, %57 : vector<16x16x32xf32>
    %65 = arith.addf %51, %63 : vector<16x16x32xf32>
    %c2_39 = arith.constant 2 : index
    %c7_40 = arith.constant 7 : index
    %c0_41 = arith.constant 0 : index
    %66 = vector.load %arg8[%c2_39, %c7_40, %c0_41] : memref<20x26x32xf32, #tpu.memory_space<vmem>>, vector<16x16x32xf32>
    %67 = vector.extract_strided_slice %15 {offsets = [1, 0, 0], sizes = [1, 1, 32], strides = [1, 1, 1]} : vector<3x3x32xf32> to vector<1x1x32xf32>
    %68 = vector.shape_cast %67 : vector<1x1x32xf32> to vector<32xf32>
    %69 = vector.shape_cast %68 : vector<32xf32> to vector<1x1x32xf32>
    %70 = vector.broadcast %69 : vector<1x1x32xf32> to vector<16x16x32xf32>
    %71 = arith.mulf %66, %70 : vector<16x16x32xf32>
    %c2_42 = arith.constant 2 : index
    %c6_43 = arith.constant 6 : index
    %c0_44 = arith.constant 0 : index
    %72 = vector.load %arg8[%c2_42, %c6_43, %c0_44] : memref<20x26x32xf32, #tpu.memory_space<vmem>>, vector<16x16x32xf32>
    %73 = vector.extract_strided_slice %16 {offsets = [1, 0, 0], sizes = [1, 1, 32], strides = [1, 1, 1]} : vector<3x3x32xf32> to vector<1x1x32xf32>
    %74 = vector.shape_cast %73 : vector<1x1x32xf32> to vector<32xf32>
    %75 = vector.shape_cast %74 : vector<32xf32> to vector<1x1x32xf32>
    %76 = vector.broadcast %75 : vector<1x1x32xf32> to vector<16x16x32xf32>
    %77 = arith.mulf %72, %76 : vector<16x16x32xf32>
    %78 = arith.addf %64, %71 : vector<16x16x32xf32>
    %79 = arith.addf %65, %77 : vector<16x16x32xf32>
    %c2_45 = arith.constant 2 : index
    %c9_46 = arith.constant 9 : index
    %c0_47 = arith.constant 0 : index
    %80 = vector.load %arg8[%c2_45, %c9_46, %c0_47] : memref<20x26x32xf32, #tpu.memory_space<vmem>>, vector<16x16x32xf32>
    %81 = vector.extract_strided_slice %15 {offsets = [1, 2, 0], sizes = [1, 1, 32], strides = [1, 1, 1]} : vector<3x3x32xf32> to vector<1x1x32xf32>
    %82 = vector.shape_cast %81 : vector<1x1x32xf32> to vector<32xf32>
    %83 = vector.shape_cast %82 : vector<32xf32> to vector<1x1x32xf32>
    %84 = vector.broadcast %83 : vector<1x1x32xf32> to vector<16x16x32xf32>
    %85 = arith.mulf %80, %84 : vector<16x16x32xf32>
    %c2_48 = arith.constant 2 : index
    %c10_49 = arith.constant 10 : index
    %c0_50 = arith.constant 0 : index
    %86 = vector.load %arg8[%c2_48, %c10_49, %c0_50] : memref<20x26x32xf32, #tpu.memory_space<vmem>>, vector<16x16x32xf32>
    %87 = vector.extract_strided_slice %16 {offsets = [1, 2, 0], sizes = [1, 1, 32], strides = [1, 1, 1]} : vector<3x3x32xf32> to vector<1x1x32xf32>
    %88 = vector.shape_cast %87 : vector<1x1x32xf32> to vector<32xf32>
    %89 = vector.shape_cast %88 : vector<32xf32> to vector<1x1x32xf32>
    %90 = vector.broadcast %89 : vector<1x1x32xf32> to vector<16x16x32xf32>
    %91 = arith.mulf %86, %90 : vector<16x16x32xf32>
    %92 = arith.addf %78, %85 : vector<16x16x32xf32>
    %93 = arith.addf %79, %91 : vector<16x16x32xf32>
    %c3 = arith.constant 3 : index
    %c7_51 = arith.constant 7 : index
    %c0_52 = arith.constant 0 : index
    %94 = vector.load %arg8[%c3, %c7_51, %c0_52] : memref<20x26x32xf32, #tpu.memory_space<vmem>>, vector<16x16x32xf32>
    %95 = vector.extract_strided_slice %15 {offsets = [2, 0, 0], sizes = [1, 1, 32], strides = [1, 1, 1]} : vector<3x3x32xf32> to vector<1x1x32xf32>
    %96 = vector.shape_cast %95 : vector<1x1x32xf32> to vector<32xf32>
    %97 = vector.shape_cast %96 : vector<32xf32> to vector<1x1x32xf32>
    %98 = vector.broadcast %97 : vector<1x1x32xf32> to vector<16x16x32xf32>
    %99 = arith.mulf %94, %98 : vector<16x16x32xf32>
    %c4 = arith.constant 4 : index
    %c6_53 = arith.constant 6 : index
    %c0_54 = arith.constant 0 : index
    %100 = vector.load %arg8[%c4, %c6_53, %c0_54] : memref<20x26x32xf32, #tpu.memory_space<vmem>>, vector<16x16x32xf32>
    %101 = vector.extract_strided_slice %16 {offsets = [2, 0, 0], sizes = [1, 1, 32], strides = [1, 1, 1]} : vector<3x3x32xf32> to vector<1x1x32xf32>
    %102 = vector.shape_cast %101 : vector<1x1x32xf32> to vector<32xf32>
    %103 = vector.shape_cast %102 : vector<32xf32> to vector<1x1x32xf32>
    %104 = vector.broadcast %103 : vector<1x1x32xf32> to vector<16x16x32xf32>
    %105 = arith.mulf %100, %104 : vector<16x16x32xf32>
    %106 = arith.addf %92, %99 : vector<16x16x32xf32>
    %107 = arith.addf %93, %105 : vector<16x16x32xf32>
    %c3_55 = arith.constant 3 : index
    %c8_56 = arith.constant 8 : index
    %c0_57 = arith.constant 0 : index
    %108 = vector.load %arg8[%c3_55, %c8_56, %c0_57] : memref<20x26x32xf32, #tpu.memory_space<vmem>>, vector<16x16x32xf32>
    %109 = vector.extract_strided_slice %15 {offsets = [2, 1, 0], sizes = [1, 1, 32], strides = [1, 1, 1]} : vector<3x3x32xf32> to vector<1x1x32xf32>
    %110 = vector.shape_cast %109 : vector<1x1x32xf32> to vector<32xf32>
    %111 = vector.shape_cast %110 : vector<32xf32> to vector<1x1x32xf32>
    %112 = vector.broadcast %111 : vector<1x1x32xf32> to vector<16x16x32xf32>
    %113 = arith.mulf %108, %112 : vector<16x16x32xf32>
    %c4_58 = arith.constant 4 : index
    %c8_59 = arith.constant 8 : index
    %c0_60 = arith.constant 0 : index
    %114 = vector.load %arg8[%c4_58, %c8_59, %c0_60] : memref<20x26x32xf32, #tpu.memory_space<vmem>>, vector<16x16x32xf32>
    %115 = vector.extract_strided_slice %16 {offsets = [2, 1, 0], sizes = [1, 1, 32], strides = [1, 1, 1]} : vector<3x3x32xf32> to vector<1x1x32xf32>
    %116 = vector.shape_cast %115 : vector<1x1x32xf32> to vector<32xf32>
    %117 = vector.shape_cast %116 : vector<32xf32> to vector<1x1x32xf32>
    %118 = vector.broadcast %117 : vector<1x1x32xf32> to vector<16x16x32xf32>
    %119 = arith.mulf %114, %118 : vector<16x16x32xf32>
    %120 = arith.addf %106, %113 : vector<16x16x32xf32>
    %121 = arith.addf %107, %119 : vector<16x16x32xf32>
    %c3_61 = arith.constant 3 : index
    %c9_62 = arith.constant 9 : index
    %c0_63 = arith.constant 0 : index
    %122 = vector.load %arg8[%c3_61, %c9_62, %c0_63] : memref<20x26x32xf32, #tpu.memory_space<vmem>>, vector<16x16x32xf32>
    %123 = vector.extract_strided_slice %15 {offsets = [2, 2, 0], sizes = [1, 1, 32], strides = [1, 1, 1]} : vector<3x3x32xf32> to vector<1x1x32xf32>
    %124 = vector.shape_cast %123 : vector<1x1x32xf32> to vector<32xf32>
    %125 = vector.shape_cast %124 : vector<32xf32> to vector<1x1x32xf32>
    %126 = vector.broadcast %125 : vector<1x1x32xf32> to vector<16x16x32xf32>
    %127 = arith.mulf %122, %126 : vector<16x16x32xf32>
    %c4_64 = arith.constant 4 : index
    %c10_65 = arith.constant 10 : index
    %c0_66 = arith.constant 0 : index
    %128 = vector.load %arg8[%c4_64, %c10_65, %c0_66] : memref<20x26x32xf32, #tpu.memory_space<vmem>>, vector<16x16x32xf32>
    %129 = vector.extract_strided_slice %16 {offsets = [2, 2, 0], sizes = [1, 1, 32], strides = [1, 1, 1]} : vector<3x3x32xf32> to vector<1x1x32xf32>
    %130 = vector.shape_cast %129 : vector<1x1x32xf32> to vector<32xf32>
    %131 = vector.shape_cast %130 : vector<32xf32> to vector<1x1x32xf32>
    %132 = vector.broadcast %131 : vector<1x1x32xf32> to vector<16x16x32xf32>
    %133 = arith.mulf %128, %132 : vector<16x16x32xf32>
    %134 = arith.addf %120, %127 : vector<16x16x32xf32>
    %135 = arith.addf %121, %133 : vector<16x16x32xf32>
    %136 = arith.addf %134, %135 : vector<16x16x32xf32>
    %c0_67 = arith.constant 0 : index
    %c0_68 = arith.constant 0 : index
    %c0_69 = arith.constant 0 : index
    %c0_70 = arith.constant 0 : index
    %137 = vector.load %arg5[%c0_67, %c0_68, %c0_69, %c0_70] : memref<1x16x16x32xf32, #tpu.memory_space<vmem>>, vector<1x16x16x32xf32>
    %138 = vector.shape_cast %137 : vector<1x16x16x32xf32> to vector<16x16x32xf32>
    %139 = vector.shape_cast %136 : vector<16x16x32xf32> to vector<1x16x16x32xf32>
    tpu.vector_store %arg5[%c0_67, %c0_68, %c0_69, %c0_70], %139 {strides = array<i32>} : memref<1x16x16x32xf32, #tpu.memory_space<vmem>>, vector<1x16x16x32xf32>,
    %cst_71 = arith.constant dense<0.000000e+00> : vector<16x32xf32>
    %140 = vector.multi_reduction <add>, %136, %cst_71 [0] : vector<16x16x32xf32> to vector<16x32xf32>
    %cst_72 = arith.constant dense<0.000000e+00> : vector<32xf32>
    %141 = vector.multi_reduction <add>, %140, %cst_72 [0] : vector<16x32xf32> to vector<32xf32>
    %142 = vector.shape_cast %141 : vector<32xf32> to vector<1x32xf32>
    %c0_73 = arith.constant 0 : index
    %c0_74 = arith.constant 0 : index
    %c0_75 = arith.constant 0 : index
    %143 = vector.load %arg6[%c0_73, %c0_74, %c0_75] : memref<1x1x32xf32, #tpu.memory_space<vmem>>, vector<1x1x32xf32>
    %144 = vector.shape_cast %143 : vector<1x1x32xf32> to vector<1x32xf32>
    %145 = vector.shape_cast %142 : vector<1x32xf32> to vector<1x1x32xf32>
    tpu.vector_store %arg6[%c0_73, %c0_74, %c0_75], %145 {strides = array<i32>} : memref<1x1x32xf32, #tpu.memory_space<vmem>>, vector<1x1x32xf32>,
    %146 = arith.mulf %136, %136 : vector<16x16x32xf32>
    %cst_76 = arith.constant dense<0.000000e+00> : vector<16x32xf32>
    %147 = vector.multi_reduction <add>, %146, %cst_76 [0] : vector<16x16x32xf32> to vector<16x32xf32>
    %cst_77 = arith.constant dense<0.000000e+00> : vector<32xf32>
    %148 = vector.multi_reduction <add>, %147, %cst_77 [0] : vector<16x32xf32> to vector<32xf32>
    %149 = vector.shape_cast %148 : vector<32xf32> to vector<1x32xf32>
    %c0_78 = arith.constant 0 : index
    %c0_79 = arith.constant 0 : index
    %c0_80 = arith.constant 0 : index
    %150 = vector.load %arg7[%c0_78, %c0_79, %c0_80] : memref<1x1x32xf32, #tpu.memory_space<vmem>>, vector<1x1x32xf32>
    %151 = vector.shape_cast %150 : vector<1x1x32xf32> to vector<1x32xf32>
    %152 = vector.shape_cast %149 : vector<1x32xf32> to vector<1x1x32xf32>
    tpu.vector_store %arg7[%c0_78, %c0_79, %c0_80], %152 {strides = array<i32>} : memref<1x1x32xf32, #tpu.memory_space<vmem>>, vector<1x1x32xf32>,
    return
  }
  func.func @transform_0(%arg0: i32) -> (i32, i32, i32, i32) {
    %c0_i32 = arith.constant 0 : i32
    %c0_i32_0 = arith.constant 0 : i32
    %c0_i32_1 = arith.constant 0 : i32
    %c0_i32_2 = arith.constant 0 : i32
    return %arg0, %c0_i32, %c0_i32_0, %c0_i32_1 : i32, i32, i32, i32
  }
  func.func @transform_1(%arg0: i32) -> (i32, i32) {
    %c0_i32 = arith.constant 0 : i32
    %c0_i32_0 = arith.constant 0 : i32
    %c0_i32_1 = arith.constant 0 : i32
    return %c0_i32, %c0_i32_0 : i32, i32
  }
  func.func @transform_2(%arg0: i32) -> (i32, i32, i32) {
    %c0_i32 = arith.constant 0 : i32
    %c0_i32_0 = arith.constant 0 : i32
    %c0_i32_1 = arith.constant 0 : i32
    %c0_i32_2 = arith.constant 0 : i32
    return %c0_i32, %c0_i32_0, %c0_i32_1 : i32, i32, i32
  }
  func.func @transform_3(%arg0: i32) -> (i32, i32, i32) {
    %c0_i32 = arith.constant 0 : i32
    %c0_i32_0 = arith.constant 0 : i32
    %c0_i32_1 = arith.constant 0 : i32
    %c0_i32_2 = arith.constant 0 : i32
    return %c0_i32, %c0_i32_0, %c0_i32_1 : i32, i32, i32
  }
  func.func @transform_4(%arg0: i32) -> (i32, i32, i32, i32) {
    %c0_i32 = arith.constant 0 : i32
    %c0_i32_0 = arith.constant 0 : i32
    %c0_i32_1 = arith.constant 0 : i32
    %c0_i32_2 = arith.constant 0 : i32
    return %arg0, %c0_i32, %c0_i32_0, %c0_i32_1 : i32, i32, i32, i32
  }
  func.func @transform_5(%arg0: i32) -> (i32, i32, i32) {
    %c0_i32 = arith.constant 0 : i32
    %c0_i32_0 = arith.constant 0 : i32
    %c0_i32_1 = arith.constant 0 : i32
    return %arg0, %c0_i32, %c0_i32_0 : i32, i32, i32
  }
  func.func @transform_6(%arg0: i32) -> (i32, i32, i32) {
    %c0_i32 = arith.constant 0 : i32
    %c0_i32_0 = arith.constant 0 : i32
    %c0_i32_1 = arith.constant 0 : i32
    return %arg0, %c0_i32, %c0_i32_0 : i32, i32, i32
  }
}

module attributes {stable_mosaic.version = 11 : i64} {
  func.func @_bn_affine_kernel(%arg0: i32, %arg1: memref<1x16x512xf32, #tpu.memory_space<vmem>>, %arg2: memref<1x512xf32, #tpu.memory_space<vmem>>, %arg3: memref<1x512xf32, #tpu.memory_space<vmem>>, %arg4: memref<1x16x512xf32, #tpu.memory_space<vmem>>) attributes {dimension_semantics = [#tpu.dimension_semantics<parallel>], iteration_bounds = array<i64: 2>, scalar_prefetch = 0 : i64, scratch_operands = 0 : i64, tpu.core_type = #tpu.core_type<tc>, window_params = [{transform_indices = @transform_0, window_bounds = array<i64: 1, 16, 512>}, {pipeline_mode = #tpu.pipeline_mode<synchronous>, transform_indices = @transform_1, window_bounds = array<i64: 1, 512>}, {pipeline_mode = #tpu.pipeline_mode<synchronous>, transform_indices = @transform_2, window_bounds = array<i64: 1, 512>}, {transform_indices = @transform_3, window_bounds = array<i64: 1, 16, 512>}]} {
    %c0 = arith.constant 0 : index
    %c0_0 = arith.constant 0 : index
    %c0_1 = arith.constant 0 : index
    %0 = vector.load %arg1[%c0, %c0_0, %c0_1] : memref<1x16x512xf32, #tpu.memory_space<vmem>>, vector<1x16x512xf32>
    %1 = vector.shape_cast %0 : vector<1x16x512xf32> to vector<16x512xf32>
    %c0_2 = arith.constant 0 : index
    %c0_3 = arith.constant 0 : index
    %2 = vector.load %arg2[%c0_2, %c0_3] : memref<1x512xf32, #tpu.memory_space<vmem>>, vector<1x512xf32>
    %3 = vector.broadcast %2 : vector<1x512xf32> to vector<16x512xf32>
    %4 = arith.mulf %1, %3 : vector<16x512xf32>
    %c0_4 = arith.constant 0 : index
    %c0_5 = arith.constant 0 : index
    %5 = vector.load %arg3[%c0_4, %c0_5] : memref<1x512xf32, #tpu.memory_space<vmem>>, vector<1x512xf32>
    %6 = vector.broadcast %5 : vector<1x512xf32> to vector<16x512xf32>
    %7 = arith.addf %4, %6 : vector<16x512xf32>
    %c0_6 = arith.constant 0 : index
    %c0_7 = arith.constant 0 : index
    %c0_8 = arith.constant 0 : index
    %8 = vector.load %arg4[%c0_6, %c0_7, %c0_8] : memref<1x16x512xf32, #tpu.memory_space<vmem>>, vector<1x16x512xf32>
    %9 = vector.shape_cast %8 : vector<1x16x512xf32> to vector<16x512xf32>
    %10 = vector.shape_cast %7 : vector<16x512xf32> to vector<1x16x512xf32>
    tpu.vector_store %arg4[%c0_6, %c0_7, %c0_8], %10 {strides = array<i32>} : memref<1x16x512xf32, #tpu.memory_space<vmem>>, vector<1x16x512xf32>,
    return
  }
  func.func @transform_0(%arg0: i32) -> (i32, i32, i32) {
    %c0_i32 = arith.constant 0 : i32
    %c0_i32_0 = arith.constant 0 : i32
    %c0_i32_1 = arith.constant 0 : i32
    return %arg0, %c0_i32, %c0_i32_0 : i32, i32, i32
  }
  func.func @transform_1(%arg0: i32) -> (i32, i32) {
    %c0_i32 = arith.constant 0 : i32
    %c0_i32_0 = arith.constant 0 : i32
    %c0_i32_1 = arith.constant 0 : i32
    return %c0_i32, %c0_i32_0 : i32, i32
  }
  func.func @transform_2(%arg0: i32) -> (i32, i32) {
    %c0_i32 = arith.constant 0 : i32
    %c0_i32_0 = arith.constant 0 : i32
    %c0_i32_1 = arith.constant 0 : i32
    return %c0_i32, %c0_i32_0 : i32, i32
  }
  func.func @transform_3(%arg0: i32) -> (i32, i32, i32) {
    %c0_i32 = arith.constant 0 : i32
    %c0_i32_0 = arith.constant 0 : i32
    %c0_i32_1 = arith.constant 0 : i32
    return %arg0, %c0_i32, %c0_i32_0 : i32, i32, i32
  }
}

</mosaic_0001>

<llo_original>
// kernel: tile.19
$region0: #{tile.19}
  %s0 = inlined_call_operand.vmem [shape: f32[16,32], index: 0, kind: input, shape index: {}]
  %s1 = inlined_call_operand.vmem [shape: f32[1,512], index: 1, kind: output, shape index: {}]
  $region1: #{tile.19} parent=0
    #allocation0 [shape = 'u8[16384]{0}', space=vmem, size = 0x4000, scoped, tag = 'scoped mem for output reshape']
    %v2 = vld [vmem:[%s0] ss:$4 sm:$0xf]
    %vm3 = vcmask 261120
    %4 = vst.msk [vmem:[#allocation0] ss:$8 sm:$0xf] %vm3, %v2
    %s5 = scalar_lea.vmem %s0, 3
    %v6 = vld [vmem:[%s5] ss:$4 sm:$0xf]
    %7 = vrot.lane.b32.xlu0 %v6, 96
    %v8 = vpop.permute.xlu0 %7
    %vm9 = vcmask 1048320
    %10 = vst.msk [vmem:[#allocation0] ss:$8 sm:$0xf] %vm9, %v8
    %s11 = scalar_lea.vmem %s0, 2
    %v12 = vld [vmem:[%s11] ss:$4 sm:$0xf]
    %13 = vrot.lane.b32.xlu0 %v12, 64
    %v14 = vpop.permute.xlu0 %13
    %vm15 = vcmask 785920
    %16 = vst.msk [vmem:[#allocation0] ss:$8 sm:$0xf] %vm15, %v14
    %s17 = scalar_lea.vmem %s0, 1
    %v18 = vld [vmem:[%s17] ss:$4 sm:$0xf]
    %19 = vrot.lane.b32.xlu0 %v18, 32
    %v20 = vpop.permute.xlu0 %19
    %vm21 = vcmask 523520
    %22 = vst.msk [vmem:[#allocation0] ss:$8 sm:$0xf] %vm21, %v20
    %s24 = sshllo.u32 0, 1
    %v26 = vld [vmem:[#allocation0] sm:%s24]
    %s27 = sshllo.u32 0, 1
    %28 = vst [vmem:[%s1] sm:%s27] %v26
    %s29 = scalar_lea.vmem [#allocation0], 8
    %v30 = vld [vmem:[%s29] sm:%s24]
    %s31 = sshllo.u32 0, 1
    %s32 = scalar_lea.vmem %s1, 1
    %33 = vst [vmem:[%s32] sm:%s31] %v30
    %s34 = scalar_lea.vmem [#allocation0], 16
    %v35 = vld [vmem:[%s34] sm:%s24]
    %s36 = sshllo.u32 0, 1
    %s37 = smul.addr 1, 2
    %s38 = scalar_lea.vmem %s1, %s37
    %39 = vst [vmem:[%s38] sm:%s36] %v35
    %s40 = scalar_lea.vmem [#allocation0], 24
    %v41 = vld [vmem:[%s40] sm:%s24]
    %s42 = sshllo.u32 0, 1
    %s43 = smul.addr 1, 3
    %s44 = scalar_lea.vmem %s1, %s43
    %45 = vst [vmem:[%s44] sm:%s42] %v41

// kernel: tile.18
$region0: #{tile.18}
  #allocation0 [shape = 's32[1]{0}', space=sflag, size = 0x4, scoped, tag = 'scoped memory for tile.18']
  %s0 = inlined_call_operand.vmem [shape: f32[32], index: 0, kind: input, shape index: {}]
  %s1 = inlined_call_operand.vmem [shape: f32[16,32], index: 1, kind: output, shape index: {}]
  // Predicated region
  $region2: #{tile.18} parent=0 // pred_check
    _
  $region3: #{tile.18} parent=0 // pred_check_branch
    %3 = sbr.rel (0) target = $region5
  $region4: #{tile.18} parent=0 // pred_region
    _
  $region5: #{tile.18} parent=0 // pred_fallthru
    _
  %v4 = vld [vmem:[%s0] ss:$0 sm:$0xff]
  %5 = vst [vmem:[%s1] sm:$0xff] %v4
  %s6 = scalar_lea.vmem %s1, 8
  %7 = vst [vmem:[%s6] sm:$0xff] %v4

// kernel: dilated_parallel_conv_block_d2.3
$region0: #{dilated_parallel_conv_block_d2.3}
  #allocation0 [shape = 'u32[]', space=smem, size = 0x4, offset = 0x4, fixed_abs, tag = 'smem constant byte address 0x4 - core index']
  #allocation1 [shape = 'u32[144,128]{1,0:T(1,128)}', space=vmem, size = 0x12000, scoped, tag = 'internal scratch']
  %s0 = inlined_call_operand.vmem [shape: f32[2,16,512], index: 0, kind: input, shape index: {}]
  %s1 = inlined_call_operand.vmem [shape: f32[1,512], index: 1, kind: input, shape index: {}]
  %s2 = inlined_call_operand.vmem [shape: f32[1,512], index: 2, kind: input, shape index: {}]
  %s3 = inlined_call_operand.vmem [shape: f32[2,16,512], index: 3, kind: output, shape index: {}]
  %s4 = sld [smem:[#allocation0]]
  $region45: #{dilated_parallel_conv_block_d2.3} parent=0
    _
  %s6 = ssub.s32 1, %s4
  %s7 = scalar_select 0, %s6, %s4
  loop: start=0, step=1, limit=4
  $region2: #{dilated_parallel_conv_block_d2.3} parent=0 // loop_pre_header
    _
  $region3: #{dilated_parallel_conv_block_d2.3} parent=0 // loop_header
    %s9 = sphi 0, %s13
    %p10 = scmp.ge.s32.totalorder %s9, 4
    %s19 = sphi 0, %s21
    %s22 = sphi 0, %s19
    %s23 = sphi 0, %s22
    %s39 = sphi 0, %s23
    %s43 = sphi 0, %s43
    %s45 = sphi 0, %s43
    %s46 = sphi 0, %s45
    %s60 = sphi 0, %s46
    %s64 = sphi 0, %s64
    %s66 = sphi 0, %s64
    %s67 = sphi 0, %s66
    %s81 = sphi 0, %s67
    %s87 = sphi 0, %s89
    %s90 = sphi 0, %s87
    %s91 = sphi 0, %s90
    %s107 = sphi 0, %s91
  $region4: #{dilated_parallel_conv_block_d2.3} parent=0 // loop_header_branch
    %12 = sbr.rel (%p10) target = $region8
  $region5: #{dilated_parallel_conv_block_d2.3} parent=0 // loop_body
    %s14 = ssub.s32 %s9, 1
    %s15 = ssub.s32 %s9, 2
    %s16 = sadd.s32 %s9, 1
    %s17 = ssub.s32 %s9, %s16
    %p18 = scmp.eq.s32.totalorder %s17, 0
    %s20 = sadd.s32 %s19, 1
    %s21 = scalar_select %p18, %s19, %s20
    %p24 = pneg %p18
    %p25 = scmp.eq.s32.totalorder %s9, 1
    %p26 = por %p24, %p25
    %p27 = scmp.ne.s32.totalorder %s19, %s22
    %p28 = scmp.eq.s32.totalorder %s9, 0
    %p29 = por %p27, %p28
    %p30 = scmp.ne.s32.totalorder %s19, %s22
    %p31 = scmp.eq.s32.totalorder %s14, 1
    %p32 = por %p30, %p31
    %p33 = scmp.ne.s32.totalorder %s22, %s23
    %p34 = scmp.eq.s32.totalorder %s14, 0
    %p35 = por %p33, %p34
    %p36 = scmp.ne.s32.totalorder %s22, %s23
    %p37 = scmp.eq.s32.totalorder %s15, 1
    %p38 = por %p36, %p37
    %p40 = scmp.ne.s32.totalorder %s23, %s39
    %p41 = scmp.eq.s32.totalorder %s15, 0
    %p42 = por %p40, %p41
    %s44 = sadd.s32 %s43, 1
    %p47 = scmp.eq.s32.totalorder %s9, 1
    %p48 = scmp.ne.s32.totalorder %s43, %s45
    %p49 = scmp.eq.s32.totalorder %s9, 0
    %p50 = por %p48, %p49
    %p51 = scmp.ne.s32.totalorder %s43, %s45
    %p52 = scmp.eq.s32.totalorder %s14, 1
    %p53 = por %p51, %p52
    %p54 = scmp.ne.s32.totalorder %s45, %s46
    %p55 = scmp.eq.s32.totalorder %s14, 0
    %p56 = por %p54, %p55
    %p57 = scmp.ne.s32.totalorder %s45, %s46
    %p58 = scmp.eq.s32.totalorder %s15, 1
    %p59 = por %p57, %p58
    %p61 = scmp.ne.s32.totalorder %s46, %s60
    %p62 = scmp.eq.s32.totalorder %s15, 0
    %p63 = por %p61, %p62
    %s65 = sadd.s32 %s64, 1
    %p68 = scmp.eq.s32.totalorder %s9, 1
    %p69 = scmp.ne.s32.totalorder %s64, %s66
    %p70 = scmp.eq.s32.totalorder %s9, 0
    %p71 = por %p69, %p70
    %p72 = scmp.ne.s32.totalorder %s64, %s66
    %p73 = scmp.eq.s32.totalorder %s14, 1
    %p74 = por %p72, %p73
    %p75 = scmp.ne.s32.totalorder %s66, %s67
    %p76 = scmp.eq.s32.totalorder %s14, 0
    %p77 = por %p75, %p76
    %p78 = scmp.ne.s32.totalorder %s66, %s67
    %p79 = scmp.eq.s32.totalorder %s15, 1
    %p80 = por %p78, %p79
    %p82 = scmp.ne.s32.totalorder %s67, %s81
    %p83 = scmp.eq.s32.totalorder %s15, 0
    %p84 = por %p82, %p83
    %s85 = ssub.s32 %s9, %s16
    %p86 = scmp.eq.s32.totalorder %s85, 0
    %s88 = sadd.s32 %s87, 1
    %s89 = scalar_select %p86, %s87, %s88
    %p92 = pneg %p86
    %p93 = scmp.eq.s32.totalorder %s9, 1
    %p94 = por %p92, %p93
    %p95 = scmp.ne.s32.totalorder %s87, %s90
    %p96 = scmp.eq.s32.totalorder %s9, 0
    %p97 = por %p95, %p96
    %p98 = scmp.ne.s32.totalorder %s87, %s90
    %p99 = scmp.eq.s32.totalorder %s14, 1
    %p100 = por %p98, %p99
    %p101 = scmp.ne.s32.totalorder %s90, %s91
    %p102 = scmp.eq.s32.totalorder %s14, 0
    %p103 = por %p101, %p102
    %p104 = scmp.ne.s32.totalorder %s90, %s91
    %p105 = scmp.eq.s32.totalorder %s15, 1
    %p106 = por %p104, %p105
    %p108 = scmp.ne.s32.totalorder %s91, %s107
    %p109 = scmp.eq.s32.totalorder %s15, 0
    %p110 = por %p108, %p109
    %p111 = scmp.le.s32.totalorder 1, %s9
    %p112 = scmp.lt.s32.totalorder %s9, 3
    %p113 = pnand %p111, %p112
    %p114 = pneg %p113
    // Predicated region
    $region9: #{dilated_parallel_conv_block_d2.3} parent=5 // pred_check
      _
    $region10: #{dilated_parallel_conv_block_d2.3} parent=5 // pred_check_branch
      %116 = sbr.rel (%p113) target = $region12
    $region11: #{dilated_parallel_conv_block_d2.3} parent=5 // pred_region
      %s117 = ssub.s32 %s9, 1
      // Predicated region
      $region13: #{dilated_parallel_conv_block_d2.3} parent=11 // pred_check
        %p118 = pneg %p56
      $region14: #{dilated_parallel_conv_block_d2.3} parent=11 // pred_check_branch
        %120 = sbr.rel (%p118) target = $region16
      $region15: #{dilated_parallel_conv_block_d2.3} parent=11 // pred_region
        _
      $region16: #{dilated_parallel_conv_block_d2.3} parent=11 // pred_fallthru
        _
      // Predicated region
      $region17: #{dilated_parallel_conv_block_d2.3} parent=11 // pred_check
        %p121 = pneg %p77
      $region18: #{dilated_parallel_conv_block_d2.3} parent=11 // pred_check_branch
        %123 = sbr.rel (%p121) target = $region20
      $region19: #{dilated_parallel_conv_block_d2.3} parent=11 // pred_region
        _
      $region20: #{dilated_parallel_conv_block_d2.3} parent=11 // pred_fallthru
        _
    $region12: #{dilated_parallel_conv_block_d2.3} parent=5 // pred_fallthru
      _
    %p124 = scmp.lt.s32.totalorder %s9, 2
    // Predicated region
    $region21: #{dilated_parallel_conv_block_d2.3} parent=5 // pred_check
      %p125 = pneg %p124
    $region22: #{dilated_parallel_conv_block_d2.3} parent=5 // pred_check_branch
      %127 = sbr.rel (%p125) target = $region24
    $region23: #{dilated_parallel_conv_block_d2.3} parent=5 // pred_region
      // Predicated region
      $region25: #{dilated_parallel_conv_block_d2.3} parent=23 // pred_check
        %p128 = pneg %p29
      $region26: #{dilated_parallel_conv_block_d2.3} parent=23 // pred_check_branch
        %130 = sbr.rel (%p128) target = $region28
      $region27: #{dilated_parallel_conv_block_d2.3} parent=23 // pred_region
        %p131 = scmp.lt.s32.totalorder %s9, 1
        %s132 = scalar_select %p131, %s9, 1
        %s133 = smul.addr %s132, 8
        %s134 = smul.addr %s133, 8
        %s135 = scalar_lea.vmem %s0, %s134
      $region28: #{dilated_parallel_conv_block_d2.3} parent=23 // pred_fallthru
        _
    $region24: #{dilated_parallel_conv_block_d2.3} parent=5 // pred_fallthru
      _
    %p136 = scmp.le.s32.totalorder 1, %s9
    %p137 = scmp.lt.s32.totalorder %s9, 3
    %p138 = pnand %p136, %p137
    %p139 = pneg %p138
    // Predicated region
    $region29: #{dilated_parallel_conv_block_d2.3} parent=5 // pred_check
      _
    $region30: #{dilated_parallel_conv_block_d2.3} parent=5 // pred_check_branch
      %141 = sbr.rel (%p138) target = $region32
    $region31: #{dilated_parallel_conv_block_d2.3} parent=5 // pred_region
      %s142 = ssub.s32 %s9, 1
      %p143 = scmp.lt.s32.totalorder %s14, 1
      %s144 = scalar_select %p143, %s14, 1
      %s145 = smul.addr %s144, 8
      %s146 = smul.addr %s145, 8
      %s147 = scalar_lea.vmem %s0, %s146
      %p148 = pneg %p35
      %p149 = pneg %p32
      %p150 = pneg %p56
      %p151 = pneg %p53
      %p152 = pneg %p77
      %p153 = pneg %p74
      %p154 = pneg %p103
      %p155 = pneg %p100
      %p156 = scmp.lt.s32.totalorder %s14, 1
      %s157 = scalar_select %p156, %s14, 1
      %s158 = smul.addr %s157, 8
      %s159 = smul.addr %s158, 8
      %s160 = scalar_lea.vmem %s3, %s159
      %p161 = scmp.lt.s32.totalorder %s14, 1
      %s162 = scalar_select %p161, %s14, 1
      %s163 = smul.addr %s162, 8
      %s164 = smul.addr %s163, 8
      %s165 = scalar_lea.vmem %s0, %s164
      %p166 = scmp.lt.s32.totalorder %s14, 1
      %s167 = scalar_select %p166, %s14, 1
      %s168 = smul.addr %s167, 8
      %s169 = smul.addr %s168, 8
      %s170 = scalar_lea.vmem %s3, %s169
      %v171 = vld [vmem:[%s165] sm:$0xff]
      %v172 = vld [vmem:[%s165 + $0x8] sm:$0xff]
      %v173 = vld [vmem:[%s165 + $0x10] sm:$0xff]
      %v174 = vld [vmem:[%s165 + $0x18] sm:$0xff]
      %v175 = vld [vmem:[%s165 + $0x20] sm:$0xff]
      %v176 = vld [vmem:[%s165 + $0x28] sm:$0xff]
      %v177 = vld [vmem:[%s165 + $0x30] sm:$0xff]
      %v178 = vld [vmem:[%s165 + $0x38] sm:$0xff]
      %v179 = vld [vmem:[%s1] sm:$0xf]
      %v181 = vlaneseq
      %v182 = vshrl.u32 %v181, 7
      %v183 = vsub.s32 0, %v182
      %v184 = vrot.slane %v179, %v183
      %v185 = vlaneseq
      %v186 = vshrl.u32 %v185, 7
      %v187 = vsub.s32 1, %v186
      %v188 = vrot.slane %v179, %v187
      %v189 = vlaneseq
      %v190 = vshrl.u32 %v189, 7
      %v191 = vsub.s32 2, %v190
      %v192 = vrot.slane %v179, %v191
      %v193 = vlaneseq
      %v194 = vshrl.u32 %v193, 7
      %v195 = vsub.s32 3, %v194
      %v196 = vrot.slane %v179, %v195
      %v201 = vmul.f32 %v171, %v184
      %v202 = vmul.f32 %v172, %v188
      %v203 = vmul.f32 %v173, %v192
      %v204 = vmul.f32 %v174, %v196
      %v205 = vmul.f32 %v175, %v184
      %v206 = vmul.f32 %v176, %v188
      %v207 = vmul.f32 %v177, %v192
      %v208 = vmul.f32 %v178, %v196
      %v209 = vld [vmem:[%s2] sm:$0xf]
      %v211 = vlaneseq
      %v212 = vshrl.u32 %v211, 7
      %v213 = vsub.s32 0, %v212
      %v214 = vrot.slane %v209, %v213
      %v215 = vlaneseq
      %v216 = vshrl.u32 %v215, 7
      %v217 = vsub.s32 1, %v216
      %v218 = vrot.slane %v209, %v217
      %v219 = vlaneseq
      %v220 = vshrl.u32 %v219, 7
      %v221 = vsub.s32 2, %v220
      %v222 = vrot.slane %v209, %v221
      %v223 = vlaneseq
      %v224 = vshrl.u32 %v223, 7
      %v225 = vsub.s32 3, %v224
      %v226 = vrot.slane %v209, %v225
      %v231 = vadd.f32 %v201, %v214
      %v232 = vadd.f32 %v202, %v218
      %v233 = vadd.f32 %v203, %v222
      %v234 = vadd.f32 %v204, %v226
      %v235 = vadd.f32 %v205, %v214
      %v236 = vadd.f32 %v206, %v218
      %v237 = vadd.f32 %v207, %v222
      %v238 = vadd.f32 %v208, %v226
      %239 = vst [vmem:[%s170] sm:$0xff] %v231
      %240 = vst [vmem:[%s170 + $0x8] sm:$0xff] %v232
      %241 = vst [vmem:[%s170 + $0x10] sm:$0xff] %v233
      %242 = vst [vmem:[%s170 + $0x18] sm:$0xff] %v234
      %243 = vst [vmem:[%s170 + $0x20] sm:$0xff] %v235
      %244 = vst [vmem:[%s170 + $0x28] sm:$0xff] %v236
      %245 = vst [vmem:[%s170 + $0x30] sm:$0xff] %v237
      %246 = vst [vmem:[%s170 + $0x38] sm:$0xff] %v238
      %p247 = scmp.lt.s32.totalorder %s14, 1
      %s248 = scalar_select %p247, %s14, 1
      %s249 = smul.addr %s248, 8
      %s250 = smul.addr %s249, 8
      %s251 = scalar_lea.vmem %s3, %s250
      // Predicated region
      $region33: #{dilated_parallel_conv_block_d2.3} parent=31 // pred_check
        %p252 = pneg %p100
      $region34: #{dilated_parallel_conv_block_d2.3} parent=31 // pred_check_branch
        %254 = sbr.rel (%p252) target = $region36
      $region35: #{dilated_parallel_conv_block_d2.3} parent=31 // pred_region
        _
      $region36: #{dilated_parallel_conv_block_d2.3} parent=31 // pred_fallthru
        _
    $region32: #{dilated_parallel_conv_block_d2.3} parent=5 // pred_fallthru
      _
    %p255 = scmp.le.s32.totalorder 2, %s9
    // Predicated region
    $region37: #{dilated_parallel_conv_block_d2.3} parent=5 // pred_check
      %p256 = pneg %p255
    $region38: #{dilated_parallel_conv_block_d2.3} parent=5 // pred_check_branch
      %258 = sbr.rel (%p256) target = $region40
    $region39: #{dilated_parallel_conv_block_d2.3} parent=5 // pred_region
      %s259 = ssub.s32 %s9, 2
      // Predicated region
      $region41: #{dilated_parallel_conv_block_d2.3} parent=39 // pred_check
        %p260 = pneg %p106
      $region42: #{dilated_parallel_conv_block_d2.3} parent=39 // pred_check_branch
        %262 = sbr.rel (%p260) target = $region44
      $region43: #{dilated_parallel_conv_block_d2.3} parent=39 // pred_region
        %p263 = scmp.lt.s32.totalorder %s15, 1
        %s264 = scalar_select %p263, %s15, 1
        %s265 = smul.addr %s264, 8
        %s266 = smul.addr %s265, 8
        %s267 = scalar_lea.vmem %s3, %s266
      $region44: #{dilated_parallel_conv_block_d2.3} parent=39 // pred_fallthru
        _
    $region40: #{dilated_parallel_conv_block_d2.3} parent=5 // pred_fallthru
      _
  $region6: #{dilated_parallel_conv_block_d2.3} parent=0 // loop_footer
    %s13 = sadd.s32 1, %s9
  $region7: #{dilated_parallel_conv_block_d2.3} parent=0 // loop_footer_branch
    %8 = sbr.rel target = $region3
  $region8: #{dilated_parallel_conv_block_d2.3} parent=0 // loop_exit
    _

// kernel: dilated_parallel_conv_block_d2.2
$region0: #{dilated_parallel_conv_block_d2.2}
  #allocation0 [shape = 'u32[]', space=smem, size = 0x4, offset = 0x4, fixed_abs, tag = 'smem constant byte address 0x4 - core index']
  #allocation1 [shape = 'u32[144,128]{1,0:T(1,128)}', space=vmem, size = 0x12000, scoped, tag = 'internal scratch']
  #allocation2 [shape = 'f32[20,26,32]{2,1,0:T(8,128)}', space=vmem, size = 0x50000, scoped, tag = 'scratch operand']
  %s0 = inlined_call_operand.vmem [shape: f32[2,16,16,8], index: 0, kind: input, shape index: {}]
  %s1 = inlined_call_operand.vmem [shape: f32[8,32], index: 1, kind: input, shape index: {}]
  %s2 = inlined_call_operand.vmem [shape: f32[3,3,32], index: 2, kind: input, shape index: {}]
  %s3 = inlined_call_operand.vmem [shape: f32[3,3,32], index: 3, kind: input, shape index: {}]
  %s4 = inlined_call_operand.vmem [shape: f32[2,16,16,32], index: 4, kind: output, shape index: {0}]
  %s5 = inlined_call_operand.vmem [shape: f32[2,1,32], index: 5, kind: output, shape index: {1}]
  %s6 = inlined_call_operand.vmem [shape: f32[2,1,32], index: 6, kind: output, shape index: {2}]
  %7 = xla_tuple %s4, %s5, %s6
  %s8 = sld [smem:[#allocation0]]
  $region65: #{dilated_parallel_conv_block_d2.2} parent=0
    _
  %s10 = ssub.s32 1, %s8
  %s11 = scalar_select 0, %s10, %s8
  loop: start=0, step=1, limit=4
  $region2: #{dilated_parallel_conv_block_d2.2} parent=0 // loop_pre_header
    _
  $region3: #{dilated_parallel_conv_block_d2.2} parent=0 // loop_header
    %s13 = sphi 0, %s17
    %p14 = scmp.ge.s32.totalorder %s13, 4
    %s23 = sphi 0, %s25
    %s26 = sphi 0, %s23
    %s27 = sphi 0, %s26
    %s43 = sphi 0, %s27
    %s47 = sphi 0, %s47
    %s49 = sphi 0, %s47
    %s50 = sphi 0, %s49
    %s64 = sphi 0, %s50
    %s68 = sphi 0, %s68
    %s70 = sphi 0, %s68
    %s71 = sphi 0, %s70
    %s85 = sphi 0, %s71
    %s89 = sphi 0, %s89
    %s91 = sphi 0, %s89
    %s92 = sphi 0, %s91
    %s106 = sphi 0, %s92
    %s112 = sphi 0, %s114
    %s115 = sphi 0, %s112
    %s116 = sphi 0, %s115
    %s132 = sphi 0, %s116
    %s138 = sphi 0, %s140
    %s141 = sphi 0, %s138
    %s142 = sphi 0, %s141
    %s158 = sphi 0, %s142
    %s164 = sphi 0, %s166
    %s167 = sphi 0, %s164
    %s168 = sphi 0, %s167
    %s184 = sphi 0, %s168
  $region4: #{dilated_parallel_conv_block_d2.2} parent=0 // loop_header_branch
    %16 = sbr.rel (%p14) target = $region8
  $region5: #{dilated_parallel_conv_block_d2.2} parent=0 // loop_body
    %s18 = ssub.s32 %s13, 1
    %s19 = ssub.s32 %s13, 2
    %s20 = sadd.s32 %s13, 1
    %s21 = ssub.s32 %s13, %s20
    %p22 = scmp.eq.s32.totalorder %s21, 0
    %s24 = sadd.s32 %s23, 1
    %s25 = scalar_select %p22, %s23, %s24
    %p28 = pneg %p22
    %p29 = scmp.eq.s32.totalorder %s13, 1
    %p30 = por %p28, %p29
    %p31 = scmp.ne.s32.totalorder %s23, %s26
    %p32 = scmp.eq.s32.totalorder %s13, 0
    %p33 = por %p31, %p32
    %p34 = scmp.ne.s32.totalorder %s23, %s26
    %p35 = scmp.eq.s32.totalorder %s18, 1
    %p36 = por %p34, %p35
    %p37 = scmp.ne.s32.totalorder %s26, %s27
    %p38 = scmp.eq.s32.totalorder %s18, 0
    %p39 = por %p37, %p38
    %p40 = scmp.ne.s32.totalorder %s26, %s27
    %p41 = scmp.eq.s32.totalorder %s19, 1
    %p42 = por %p40, %p41
    %p44 = scmp.ne.s32.totalorder %s27, %s43
    %p45 = scmp.eq.s32.totalorder %s19, 0
    %p46 = por %p44, %p45
    %s48 = sadd.s32 %s47, 1
    %p51 = scmp.eq.s32.totalorder %s13, 1
    %p52 = scmp.ne.s32.totalorder %s47, %s49
    %p53 = scmp.eq.s32.totalorder %s13, 0
    %p54 = por %p52, %p53
    %p55 = scmp.ne.s32.totalorder %s47, %s49
    %p56 = scmp.eq.s32.totalorder %s18, 1
    %p57 = por %p55, %p56
    %p58 = scmp.ne.s32.totalorder %s49, %s50
    %p59 = scmp.eq.s32.totalorder %s18, 0
    %p60 = por %p58, %p59
    %p61 = scmp.ne.s32.totalorder %s49, %s50
    %p62 = scmp.eq.s32.totalorder %s19, 1
    %p63 = por %p61, %p62
    %p65 = scmp.ne.s32.totalorder %s50, %s64
    %p66 = scmp.eq.s32.totalorder %s19, 0
    %p67 = por %p65, %p66
    %s69 = sadd.s32 %s68, 1
    %p72 = scmp.eq.s32.totalorder %s13, 1
    %p73 = scmp.ne.s32.totalorder %s68, %s70
    %p74 = scmp.eq.s32.totalorder %s13, 0
    %p75 = por %p73, %p74
    %p76 = scmp.ne.s32.totalorder %s68, %s70
    %p77 = scmp.eq.s32.totalorder %s18, 1
    %p78 = por %p76, %p77
    %p79 = scmp.ne.s32.totalorder %s70, %s71
    %p80 = scmp.eq.s32.totalorder %s18, 0
    %p81 = por %p79, %p80
    %p82 = scmp.ne.s32.totalorder %s70, %s71
    %p83 = scmp.eq.s32.totalorder %s19, 1
    %p84 = por %p82, %p83
    %p86 = scmp.ne.s32.totalorder %s71, %s85
    %p87 = scmp.eq.s32.totalorder %s19, 0
    %p88 = por %p86, %p87
    %s90 = sadd.s32 %s89, 1
    %p93 = scmp.eq.s32.totalorder %s13, 1
    %p94 = scmp.ne.s32.totalorder %s89, %s91
    %p95 = scmp.eq.s32.totalorder %s13, 0
    %p96 = por %p94, %p95
    %p97 = scmp.ne.s32.totalorder %s89, %s91
    %p98 = scmp.eq.s32.totalorder %s18, 1
    %p99 = por %p97, %p98
    %p100 = scmp.ne.s32.totalorder %s91, %s92
    %p101 = scmp.eq.s32.totalorder %s18, 0
    %p102 = por %p100, %p101
    %p103 = scmp.ne.s32.totalorder %s91, %s92
    %p104 = scmp.eq.s32.totalorder %s19, 1
    %p105 = por %p103, %p104
    %p107 = scmp.ne.s32.totalorder %s92, %s106
    %p108 = scmp.eq.s32.totalorder %s19, 0
    %p109 = por %p107, %p108
    %s110 = ssub.s32 %s13, %s20
    %p111 = scmp.eq.s32.totalorder %s110, 0
    %s113 = sadd.s32 %s112, 1
    %s114 = scalar_select %p111, %s112, %s113
    %p117 = pneg %p111
    %p118 = scmp.eq.s32.totalorder %s13, 1
    %p119 = por %p117, %p118
    %p120 = scmp.ne.s32.totalorder %s112, %s115
    %p121 = scmp.eq.s32.totalorder %s13, 0
    %p122 = por %p120, %p121
    %p123 = scmp.ne.s32.totalorder %s112, %s115
    %p124 = scmp.eq.s32.totalorder %s18, 1
    %p125 = por %p123, %p124
    %p126 = scmp.ne.s32.totalorder %s115, %s116
    %p127 = scmp.eq.s32.totalorder %s18, 0
    %p128 = por %p126, %p127
    %p129 = scmp.ne.s32.totalorder %s115, %s116
    %p130 = scmp.eq.s32.totalorder %s19, 1
    %p131 = por %p129, %p130
    %p133 = scmp.ne.s32.totalorder %s116, %s132
    %p134 = scmp.eq.s32.totalorder %s19, 0
    %p135 = por %p133, %p134
    %s136 = ssub.s32 %s13, %s20
    %p137 = scmp.eq.s32.totalorder %s136, 0
    %s139 = sadd.s32 %s138, 1
    %s140 = scalar_select %p137, %s138, %s139
    %p143 = pneg %p137
    %p144 = scmp.eq.s32.totalorder %s13, 1
    %p145 = por %p143, %p144
    %p146 = scmp.ne.s32.totalorder %s138, %s141
    %p147 = scmp.eq.s32.totalorder %s13, 0
    %p148 = por %p146, %p147
    %p149 = scmp.ne.s32.totalorder %s138, %s141
    %p150 = scmp.eq.s32.totalorder %s18, 1
    %p151 = por %p149, %p150
    %p152 = scmp.ne.s32.totalorder %s141, %s142
    %p153 = scmp.eq.s32.totalorder %s18, 0
    %p154 = por %p152, %p153
    %p155 = scmp.ne.s32.totalorder %s141, %s142
    %p156 = scmp.eq.s32.totalorder %s19, 1
    %p157 = por %p155, %p156
    %p159 = scmp.ne.s32.totalorder %s142, %s158
    %p160 = scmp.eq.s32.totalorder %s19, 0
    %p161 = por %p159, %p160
    %s162 = ssub.s32 %s13, %s20
    %p163 = scmp.eq.s32.totalorder %s162, 0
    %s165 = sadd.s32 %s164, 1
    %s166 = scalar_select %p163, %s164, %s165
    %p169 = pneg %p163
    %p170 = scmp.eq.s32.totalorder %s13, 1
    %p171 = por %p169, %p170
    %p172 = scmp.ne.s32.totalorder %s164, %s167
    %p173 = scmp.eq.s32.totalorder %s13, 0
    %p174 = por %p172, %p173
    %p175 = scmp.ne.s32.totalorder %s164, %s167
    %p176 = scmp.eq.s32.totalorder %s18, 1
    %p177 = por %p175, %p176
    %p178 = scmp.ne.s32.totalorder %s167, %s168
    %p179 = scmp.eq.s32.totalorder %s18, 0
    %p180 = por %p178, %p179
    %p181 = scmp.ne.s32.totalorder %s167, %s168
    %p182 = scmp.eq.s32.totalorder %s19, 1
    %p183 = por %p181, %p182
    %p185 = scmp.ne.s32.totalorder %s168, %s184
    %p186 = scmp.eq.s32.totalorder %s19, 0
    %p187 = por %p185, %p186
    %p188 = scmp.le.s32.totalorder 1, %s13
    %p189 = scmp.lt.s32.totalorder %s13, 3
    %p190 = pnand %p188, %p189
    %p191 = pneg %p190
    // Predicated region
    $region9: #{dilated_parallel_conv_block_d2.2} parent=5 // pred_check
      _
    $region10: #{dilated_parallel_conv_block_d2.2} parent=5 // pred_check_branch
      %193 = sbr.rel (%p190) target = $region12
    $region11: #{dilated_parallel_conv_block_d2.2} parent=5 // pred_region
      %s194 = ssub.s32 %s13, 1
      // Predicated region
      $region13: #{dilated_parallel_conv_block_d2.2} parent=11 // pred_check
        %p195 = pneg %p60
      $region14: #{dilated_parallel_conv_block_d2.2} parent=11 // pred_check_branch
        %197 = sbr.rel (%p195) target = $region16
      $region15: #{dilated_parallel_conv_block_d2.2} parent=11 // pred_region
        _
      $region16: #{dilated_parallel_conv_block_d2.2} parent=11 // pred_fallthru
        _
      // Predicated region
      $region17: #{dilated_parallel_conv_block_d2.2} parent=11 // pred_check
        %p198 = pneg %p81
      $region18: #{dilated_parallel_conv_block_d2.2} parent=11 // pred_check_branch
        %200 = sbr.rel (%p198) target = $region20
      $region19: #{dilated_parallel_conv_block_d2.2} parent=11 // pred_region
        _
      $region20: #{dilated_parallel_conv_block_d2.2} parent=11 // pred_fallthru
        _
      // Predicated region
      $region21: #{dilated_parallel_conv_block_d2.2} parent=11 // pred_check
        %p201 = pneg %p102
      $region22: #{dilated_parallel_conv_block_d2.2} parent=11 // pred_check_branch
        %203 = sbr.rel (%p201) target = $region24
      $region23: #{dilated_parallel_conv_block_d2.2} parent=11 // pred_region
        _
      $region24: #{dilated_parallel_conv_block_d2.2} parent=11 // pred_fallthru
        _
    $region12: #{dilated_parallel_conv_block_d2.2} parent=5 // pred_fallthru
      _
    %p204 = scmp.lt.s32.totalorder %s13, 2
    // Predicated region
    $region25: #{dilated_parallel_conv_block_d2.2} parent=5 // pred_check
      %p205 = pneg %p204
    $region26: #{dilated_parallel_conv_block_d2.2} parent=5 // pred_check_branch
      %207 = sbr.rel (%p205) target = $region28
    $region27: #{dilated_parallel_conv_block_d2.2} parent=5 // pred_region
      // Predicated region
      $region29: #{dilated_parallel_conv_block_d2.2} parent=27 // pred_check
        %p208 = pneg %p33
      $region30: #{dilated_parallel_conv_block_d2.2} parent=27 // pred_check_branch
        %210 = sbr.rel (%p208) target = $region32
      $region31: #{dilated_parallel_conv_block_d2.2} parent=27 // pred_region
        %p211 = scmp.lt.s32.totalorder %s13, 1
        %s212 = scalar_select %p211, %s13, 1
        %s213 = smul.addr %s212, 32
        %s214 = smul.addr %s213, 8
        %s215 = scalar_lea.vmem %s0, %s214
      $region32: #{dilated_parallel_conv_block_d2.2} parent=27 // pred_fallthru
        _
    $region28: #{dilated_parallel_conv_block_d2.2} parent=5 // pred_fallthru
      _
    %p216 = scmp.le.s32.totalorder 1, %s13
    %p217 = scmp.lt.s32.totalorder %s13, 3
    %p218 = pnand %p216, %p217
    %p219 = pneg %p218
    // Predicated region
    $region33: #{dilated_parallel_conv_block_d2.2} parent=5 // pred_check
      _
    $region34: #{dilated_parallel_conv_block_d2.2} parent=5 // pred_check_branch
      %221 = sbr.rel (%p218) target = $region36
    $region35: #{dilated_parallel_conv_block_d2.2} parent=5 // pred_region
      %s222 = ssub.s32 %s13, 1
      %p223 = scmp.lt.s32.totalorder %s18, 1
      %s224 = scalar_select %p223, %s18, 1
      %s225 = smul.addr %s224, 32
      %s226 = smul.addr %s225, 8
      %s227 = scalar_lea.vmem %s0, %s226
      %p228 = pneg %p39
      %p229 = pneg %p36
      %p230 = pneg %p60
      %p231 = pneg %p57
      %p232 = pneg %p81
      %p233 = pneg %p78
      %p234 = pneg %p102
      %p235 = pneg %p99
      %p236 = pneg %p128
      %p237 = pneg %p125
      %p238 = scmp.lt.s32.totalorder %s18, 1
      %s239 = scalar_select %p238, %s18, 1
      %s240 = smul.addr %s239, 32
      %s241 = smul.addr %s240, 8
      %s242 = scalar_lea.vmem %s4, %s241
      %p243 = pneg %p154
      %p244 = pneg %p151
      %p245 = scmp.lt.s32.totalorder %s18, 1
      %s246 = scalar_select %p245, %s18, 1
      %s247 = scalar_lea.vmem %s5, %s246
      %p248 = pneg %p180
      %p249 = pneg %p177
      %p250 = scmp.lt.s32.totalorder %s18, 1
      %s251 = scalar_select %p250, %s18, 1
      %s252 = scalar_lea.vmem %s6, %s251
      %p253 = scmp.lt.s32.totalorder %s18, 1
      %s254 = scalar_select %p253, %s18, 1
      %s255 = smul.addr %s254, 32
      %s256 = smul.addr %s255, 8
      %s257 = scalar_lea.vmem %s0, %s256
      %p258 = scmp.lt.s32.totalorder %s18, 1
      %s259 = scalar_select %p258, %s18, 1
      %s260 = smul.addr %s259, 32
      %s261 = smul.addr %s260, 8
      %s262 = scalar_lea.vmem %s4, %s261
      %p263 = scmp.lt.s32.totalorder %s18, 1
      %s264 = scalar_select %p263, %s18, 1
      %s265 = scalar_lea.vmem %s5, %s264
      %p266 = scmp.lt.s32.totalorder %s18, 1
      %s267 = scalar_select %p266, %s18, 1
      %s268 = scalar_lea.vmem %s6, %s267
      %vm269 = vcmask 261120
      %270 = vst.msk [vmem:[#allocation2] sm:$0xff] %vm269, 0.0
      %271 = vst.msk [vmem:[#allocation2 + $0x8] sm:$0xff] %vm269, 0.0
      %272 = vst.msk [vmem:[#allocation2 + $0x10] sm:$0xff] %vm269, 0.0
      %vm273 = vcmask 254976
      %274 = vst.msk [vmem:[#allocation2 + $0x18] sm:$0x3] %vm273, 0.0
      %275 = vst.msk [vmem:[#allocation2 + $0x20] sm:$0xff] %vm269, 0.0
      %276 = vst.msk [vmem:[#allocation2 + $0x28] sm:$0xff] %vm269, 0.0
      %277 = vst.msk [vmem:[#allocation2 + $0x30] sm:$0xff] %vm269, 0.0
      %278 = vst.msk [vmem:[#allocation2 + $0x38] sm:$0x3] %vm273, 0.0
      %s279 = scalar_lea.vmem [#allocation2], 576
      %280 = vst.msk [vmem:[%s279] sm:$0xff] %vm269, 0.0
      %281 = vst.msk [vmem:[%s279 + $0x8] sm:$0xff] %vm269, 0.0
      %282 = vst.msk [vmem:[%s279 + $0x10] sm:$0xff] %vm269, 0.0
      %283 = vst.msk [vmem:[%s279 + $0x18] sm:$0x3] %vm273, 0.0
      %284 = vst.msk [vmem:[%s279 + $0x20] sm:$0xff] %vm269, 0.0
      %285 = vst.msk [vmem:[%s279 + $0x28] sm:$0xff] %vm269, 0.0
      %286 = vst.msk [vmem:[%s279 + $0x30] sm:$0xff] %vm269, 0.0
      %287 = vst.msk [vmem:[%s279 + $0x38] sm:$0x3] %vm273, 0.0
      %288 = vst.msk [vmem:[#allocation2 + $0x6] sm:$0x3] %vm273, 0.0
      %289 = vst.msk [vmem:[#allocation2 + $0x26] sm:$0x3] %vm273, 0.0
      %290 = vst.msk [vmem:[#allocation2 + $0x46] sm:$0x3] %vm273, 0.0
      %291 = vst.msk [vmem:[#allocation2 + $0x66] sm:$0x3] %vm273, 0.0
      %292 = vst.msk [vmem:[#allocation2 + $0x86] sm:$0x3] %vm273, 0.0
      %293 = vst.msk [vmem:[#allocation2 + $0xa6] sm:$0x3] %vm273, 0.0
      %294 = vst.msk [vmem:[#allocation2 + $0xc6] sm:$0x3] %vm273, 0.0
      %295 = vst.msk [vmem:[#allocation2 + $0xe6] sm:$0x3] %vm273, 0.0
      %296 = vst.msk [vmem:[#allocation2 + $0x106] sm:$0x3] %vm273, 0.0
      %297 = vst.msk [vmem:[#allocation2 + $0x126] sm:$0x3] %vm273, 0.0
      %298 = vst.msk [vmem:[#allocation2 + $0x146] sm:$0x3] %vm273, 0.0
      %299 = vst.msk [vmem:[#allocation2 + $0x166] sm:$0x3] %vm273, 0.0
      %300 = vst.msk [vmem:[#allocation2 + $0x186] sm:$0x3] %vm273, 0.0
      %301 = vst.msk [vmem:[#allocation2 + $0x1a6] sm:$0x3] %vm273, 0.0
      %302 = vst.msk [vmem:[#allocation2 + $0x1c6] sm:$0x3] %vm273, 0.0
      %303 = vst.msk [vmem:[#allocation2 + $0x1e6] sm:$0x3] %vm273, 0.0
      %304 = vst.msk [vmem:[#allocation2 + $0x206] sm:$0x3] %vm273, 0.0
      %305 = vst.msk [vmem:[#allocation2 + $0x226] sm:$0x3] %vm273, 0.0
      %306 = vst.msk [vmem:[#allocation2 + $0x246] sm:$0x3] %vm273, 0.0
      %307 = vst.msk [vmem:[#allocation2 + $0x266] sm:$0x3] %vm273, 0.0
      %308 = vst.msk [vmem:[#allocation2 + $0x18] sm:$0x3] %vm273, 0.0
      %309 = vst.msk [vmem:[#allocation2 + $0x38] sm:$0x3] %vm273, 0.0
      %310 = vst.msk [vmem:[#allocation2 + $0x58] sm:$0x3] %vm273, 0.0
      %311 = vst.msk [vmem:[#allocation2 + $0x78] sm:$0x3] %vm273, 0.0
      %312 = vst.msk [vmem:[#allocation2 + $0x98] sm:$0x3] %vm273, 0.0
      %313 = vst.msk [vmem:[#allocation2 + $0xb8] sm:$0x3] %vm273, 0.0
      %314 = vst.msk [vmem:[#allocation2 + $0xd8] sm:$0x3] %vm273, 0.0
      %315 = vst.msk [vmem:[#allocation2 + $0xf8] sm:$0x3] %vm273, 0.0
      %316 = vst.msk [vmem:[#allocation2 + $0x118] sm:$0x3] %vm273, 0.0
      %317 = vst.msk [vmem:[#allocation2 + $0x138] sm:$0x3] %vm273, 0.0
      %318 = vst.msk [vmem:[#allocation2 + $0x158] sm:$0x3] %vm273, 0.0
      %319 = vst.msk [vmem:[#allocation2 + $0x178] sm:$0x3] %vm273, 0.0
      %320 = vst.msk [vmem:[#allocation2 + $0x198] sm:$0x3] %vm273, 0.0
      %321 = vst.msk [vmem:[#allocation2 + $0x1b8] sm:$0x3] %vm273, 0.0
      %322 = vst.msk [vmem:[#allocation2 + $0x1d8] sm:$0x3] %vm273, 0.0
      %323 = vst.msk [vmem:[#allocation2 + $0x1f8] sm:$0x3] %vm273, 0.0
      %324 = vst.msk [vmem:[#allocation2 + $0x218] sm:$0x3] %vm273, 0.0
      %325 = vst.msk [vmem:[#allocation2 + $0x238] sm:$0x3] %vm273, 0.0
      %326 = vst.msk [vmem:[#allocation2 + $0x258] sm:$0x3] %vm273, 0.0
      %327 = vst.msk [vmem:[#allocation2 + $0x278] sm:$0x3] %vm273, 0.0
      %v328 = vld [vmem:[%s257] sm:$0xff]
      %v329 = vld [vmem:[%s257 + $0x8] sm:$0xff]
      %v330 = vld [vmem:[%s257 + $0x10] sm:$0xff]
      %v331 = vld [vmem:[%s257 + $0x18] sm:$0xff]
      %v332 = vld [vmem:[%s257 + $0x20] sm:$0xff]
      %v333 = vld [vmem:[%s257 + $0x28] sm:$0xff]
      %v334 = vld [vmem:[%s257 + $0x30] sm:$0xff]
      %v335 = vld [vmem:[%s257 + $0x38] sm:$0xff]
      %v336 = vld [vmem:[%s257 + $0x40] sm:$0xff]
      %v337 = vld [vmem:[%s257 + $0x48] sm:$0xff]
      %v338 = vld [vmem:[%s257 + $0x50] sm:$0xff]
      %v339 = vld [vmem:[%s257 + $0x58] sm:$0xff]
      %v340 = vld [vmem:[%s257 + $0x60] sm:$0xff]
      %v341 = vld [vmem:[%s257 + $0x68] sm:$0xff]
      %v342 = vld [vmem:[%s257 + $0x70] sm:$0xff]
      %v343 = vld [vmem:[%s257 + $0x78] sm:$0xff]
      %v344 = vld [vmem:[%s257 + $0x80] sm:$0xff]
      %v345 = vld [vmem:[%s257 + $0x88] sm:$0xff]
      %v346 = vld [vmem:[%s257 + $0x90] sm:$0xff]
      %v347 = vld [vmem:[%s257 + $0x98] sm:$0xff]
      %v348 = vld [vmem:[%s257 + $0xa0] sm:$0xff]
      %v349 = vld [vmem:[%s257 + $0xa8] sm:$0xff]
      %v350 = vld [vmem:[%s257 + $0xb0] sm:$0xff]
      %v351 = vld [vmem:[%s257 + $0xb8] sm:$0xff]
      %v352 = vld [vmem:[%s257 + $0xc0] sm:$0xff]
      %v353 = vld [vmem:[%s257 + $0xc8] sm:$0xff]
      %v354 = vld [vmem:[%s257 + $0xd0] sm:$0xff]
      %v355 = vld [vmem:[%s257 + $0xd8] sm:$0xff]
      %v356 = vld [vmem:[%s257 + $0xe0] sm:$0xff]
      %v357 = vld [vmem:[%s257 + $0xe8] sm:$0xff]
      %v358 = vld [vmem:[%s257 + $0xf0] sm:$0xff]
      %v359 = vld [vmem:[%s257 + $0xf8] sm:$0xff]
      %v360 = vld [vmem:[%s1] sm:$0xff]
      %vm361 = vcmask 64512
      %v363 = vsel %vm361, %v328, 0
      %v366 = vsel %vm361, %v329, 0
      %v369 = vsel %vm361, %v330, 0
      %v372 = vsel %vm361, %v331, 0
      %v375 = vsel %vm361, %v332, 0
      %v378 = vsel %vm361, %v333, 0
      %v381 = vsel %vm361, %v334, 0
      %v384 = vsel %vm361, %v335, 0
      %v387 = vsel %vm361, %v336, 0
      %v390 = vsel %vm361, %v337, 0
      %v393 = vsel %vm361, %v338, 0
      %v396 = vsel %vm361, %v339, 0
      %v399 = vsel %vm361, %v340, 0
      %v402 = vsel %vm361, %v341, 0
      %v405 = vsel %vm361, %v342, 0
      %v408 = vsel %vm361, %v343, 0
      %v411 = vsel %vm361, %v344, 0
      %v414 = vsel %vm361, %v345, 0
      %v417 = vsel %vm361, %v346, 0
      %v420 = vsel %vm361, %v347, 0
      %v423 = vsel %vm361, %v348, 0
      %v426 = vsel %vm361, %v349, 0
      %v429 = vsel %vm361, %v350, 0
      %v432 = vsel %vm361, %v351, 0
      %v435 = vsel %vm361, %v352, 0
      %v438 = vsel %vm361, %v353, 0
      %v441 = vsel %vm361, %v354, 0
      %v444 = vsel %vm361, %v355, 0
      %v447 = vsel %vm361, %v356, 0
      %v450 = vsel %vm361, %v357, 0
      %v453 = vsel %vm361, %v358, 0
      %v456 = vsel %vm361, %v359, 0
      %458 = vmatprep.subr.mxu0 0.0
      %459 = vmatpush1.msra.mxu0 %v360
      %460 = vmatprep.subr.mxu0 0.0
      %461 = vmatpush1.msra.mxu0 0.0
      %462 = vmatprep.subr.mxu0 0.0
      %463 = vmatpush1.msra.mxu0 0.0
      %464 = vmatprep.subr.mxu0 0.0
      %465 = vmatpush1.msra.mxu0 0.0
      %466 = vmatprep.subr.mxu0 0.0
      %467 = vmatpush1.msra.mxu0 0.0
      %468 = vmatprep.subr.mxu0 0.0
      %469 = vmatpush1.msra.mxu0 0.0
      %470 = vmatprep.subr.mxu0 0.0
      %471 = vmatpush1.msra.mxu0 0.0
      %472 = vmatprep.subr.mxu0 0.0
      %473 = vmatpush1.msra.mxu0 0.0
      %474 = vmatprep.subr.mxu0 0.0
      %475 = vmatpush1.msra.mxu0 0.0
      %476 = vmatprep.subr.mxu0 0.0
      %477 = vmatpush1.msra.mxu0 0.0
      %478 = vmatprep.subr.mxu0 0.0
      %479 = vmatpush1.msra.mxu0 0.0
      %480 = vmatprep.subr.mxu0 0.0
      %481 = vmatpush1.msra.mxu0 0.0
      %482 = vmatprep.subr.mxu0 0.0
      %483 = vmatpush1.msra.mxu0 0.0
      %484 = vmatprep.subr.mxu0 0.0
      %485 = vmatpush1.msra.mxu0 0.0
      %486 = vmatprep.subr.mxu0 0.0
      %487 = vmatpush1.msra.mxu0 0.0
      %488 = vmatprep.subr.mxu0 0.0
      %489 = vmatpush1.msra.mxu0 0.0
      %490 = vmatprep.subr.mxu0 0.0
      %491 = vmatpush1.msra.mxu0 0.0
      %492 = vmatprep.subr.mxu0 0.0
      %493 = vmatpush1.msra.mxu0 0.0
      %494 = vmatprep.subr.mxu0 0.0
      %495 = vmatpush1.msra.mxu0 0.0
      %496 = vmatprep.subr.mxu0 0.0
      %497 = vmatpush1.msra.mxu0 0.0
      %498 = vmatprep.subr.mxu0 0.0
      %499 = vmatpush1.msra.mxu0 0.0
      %500 = vmatprep.subr.mxu0 0.0
      %501 = vmatpush1.msra.mxu0 0.0
      %502 = vmatprep.subr.mxu0 0.0
      %503 = vmatpush1.msra.mxu0 0.0
      %504 = vmatprep.subr.mxu0 0.0
      %505 = vmatpush1.msra.mxu0 0.0
      %506 = vmatprep.subr.mxu0 0.0
      %507 = vmatpush1.msra.mxu0 0.0
      %508 = vmatprep.subr.mxu0 0.0
      %509 = vmatpush1.msra.mxu0 0.0
      %510 = vmatprep.subr.mxu0 0.0
      %511 = vmatpush1.msra.mxu0 0.0
      %512 = vmatprep.subr.mxu0 0.0
      %513 = vmatpush1.msra.mxu0 0.0
      %514 = vmatprep.subr.mxu0 0.0
      %515 = vmatpush1.msra.mxu0 0.0
      %516 = vmatprep.subr.mxu0 0.0
      %517 = vmatpush1.msra.mxu0 0.0
      %518 = vmatprep.subr.mxu0 0.0
      %519 = vmatpush1.msra.mxu0 0.0
      %520 = vmatprep.subr.mxu0 0.0
      %521 = vmatpush1.msra.mxu0 0.0
      %522 = vmatprep.mubr.f32.mxu0 0.0
      %523 = vmatmul.mubr.f32.gmra.mrb[0].mxu0 %v363
      %v524 = vpop.f32.mrb[0].mxu0
      %v525 = vadd.f32 0.0, %v524
      %v526 = vpop.f32.mrb[0].mxu0
      %527 = vmatprep.mubr.f32.mxu0 0.0
      %528 = vmatmul.mubr.f32.gmra.mrb[0].mxu0 %v366
      %v529 = vpop.f32.mrb[0].mxu0
      %v530 = vadd.f32 0.0, %v529
      %v531 = vpop.f32.mrb[0].mxu0
      %532 = vmatprep.mubr.f32.mxu0 0.0
      %533 = vmatmul.mubr.f32.gmra.mrb[0].mxu0 %v369
      %v534 = vpop.f32.mrb[0].mxu0
      %v535 = vadd.f32 0.0, %v534
      %v536 = vpop.f32.mrb[0].mxu0
      %537 = vmatprep.mubr.f32.mxu0 0.0
      %538 = vmatmul.mubr.f32.gmra.mrb[0].mxu0 %v372
      %v539 = vpop.f32.mrb[0].mxu0
      %v540 = vadd.f32 0.0, %v539
      %v541 = vpop.f32.mrb[0].mxu0
      %542 = vmatprep.mubr.f32.mxu0 0.0
      %543 = vmatmul.mubr.f32.gmra.mrb[0].mxu0 %v375
      %v544 = vpop.f32.mrb[0].mxu0
      %v545 = vadd.f32 0.0, %v544
      %v546 = vpop.f32.mrb[0].mxu0
      %547 = vmatprep.mubr.f32.mxu0 0.0
      %548 = vmatmul.mubr.f32.gmra.mrb[0].mxu0 %v378
      %v549 = vpop.f32.mrb[0].mxu0
      %v550 = vadd.f32 0.0, %v549
      %v551 = vpop.f32.mrb[0].mxu0
      %552 = vmatprep.mubr.f32.mxu0 0.0
      %553 = vmatmul.mubr.f32.gmra.mrb[0].mxu0 %v381
      %v554 = vpop.f32.mrb[0].mxu0
      %v555 = vadd.f32 0.0, %v554
      %v556 = vpop.f32.mrb[0].mxu0
      %557 = vmatprep.mubr.f32.mxu0 0.0
      %558 = vmatmul.mubr.f32.gmra.mrb[0].mxu0 %v384
      %v559 = vpop.f32.mrb[0].mxu0
      %v560 = vadd.f32 0.0, %v559
      %v561 = vpop.f32.mrb[0].mxu0
      %562 = vmatprep.mubr.f32.mxu0 0.0
      %563 = vmatmul.mubr.f32.gmra.mrb[0].mxu0 %v387
      %v564 = vpop.f32.mrb[0].mxu0
      %v565 = vadd.f32 0.0, %v564
      %v566 = vpop.f32.mrb[0].mxu0
      %567 = vmatprep.mubr.f32.mxu0 0.0
      %568 = vmatmul.mubr.f32.gmra.mrb[0].mxu0 %v390
      %v569 = vpop.f32.mrb[0].mxu0
      %v570 = vadd.f32 0.0, %v569
      %v571 = vpop.f32.mrb[0].mxu0
      %572 = vmatprep.mubr.f32.mxu0 0.0
      %573 = vmatmul.mubr.f32.gmra.mrb[0].mxu0 %v393
      %v574 = vpop.f32.mrb[0].mxu0
      %v575 = vadd.f32 0.0, %v574
      %v576 = vpop.f32.mrb[0].mxu0
      %577 = vmatprep.mubr.f32.mxu0 0.0
      %578 = vmatmul.mubr.f32.gmra.mrb[0].mxu0 %v396
      %v579 = vpop.f32.mrb[0].mxu0
      %v580 = vadd.f32 0.0, %v579
      %v581 = vpop.f32.mrb[0].mxu0
      %582 = vmatprep.mubr.f32.mxu0 0.0
      %583 = vmatmul.mubr.f32.gmra.mrb[0].mxu0 %v399
      %v584 = vpop.f32.mrb[0].mxu0
      %v585 = vadd.f32 0.0, %v584
      %v586 = vpop.f32.mrb[0].mxu0
      %587 = vmatprep.mubr.f32.mxu0 0.0
      %588 = vmatmul.mubr.f32.gmra.mrb[0].mxu0 %v402
      %v589 = vpop.f32.mrb[0].mxu0
      %v590 = vadd.f32 0.0, %v589
      %v591 = vpop.f32.mrb[0].mxu0
      %592 = vmatprep.mubr.f32.mxu0 0.0
      %593 = vmatmul.mubr.f32.gmra.mrb[0].mxu0 %v405
      %v594 = vpop.f32.mrb[0].mxu0
      %v595 = vadd.f32 0.0, %v594
      %v596 = vpop.f32.mrb[0].mxu0
      %597 = vmatprep.mubr.f32.mxu0 0.0
      %598 = vmatmul.mubr.f32.gmra.mrb[0].mxu0 %v408
      %v599 = vpop.f32.mrb[0].mxu0
      %v600 = vadd.f32 0.0, %v599
      %v601 = vpop.f32.mrb[0].mxu0
      %602 = vmatprep.mubr.f32.mxu0 0.0
      %603 = vmatmul.mubr.f32.gmra.mrb[0].mxu0 %v411
      %v604 = vpop.f32.mrb[0].mxu0
      %v605 = vadd.f32 0.0, %v604
      %v606 = vpop.f32.mrb[0].mxu0
      %607 = vmatprep.mubr.f32.mxu0 0.0
      %608 = vmatmul.mubr.f32.gmra.mrb[0].mxu0 %v414
      %v609 = vpop.f32.mrb[0].mxu0
      %v610 = vadd.f32 0.0, %v609
      %v611 = vpop.f32.mrb[0].mxu0
      %612 = vmatprep.mubr.f32.mxu0 0.0
      %613 = vmatmul.mubr.f32.gmra.mrb[0].mxu0 %v417
      %v614 = vpop.f32.mrb[0].mxu0
      %v615 = vadd.f32 0.0, %v614
      %v616 = vpop.f32.mrb[0].mxu0
      %617 = vmatprep.mubr.f32.mxu0 0.0
      %618 = vmatmul.mubr.f32.gmra.mrb[0].mxu0 %v420
      %v619 = vpop.f32.mrb[0].mxu0
      %v620 = vadd.f32 0.0, %v619
      %v621 = vpop.f32.mrb[0].mxu0
      %622 = vmatprep.mubr.f32.mxu0 0.0
      %623 = vmatmul.mubr.f32.gmra.mrb[0].mxu0 %v423
      %v624 = vpop.f32.mrb[0].mxu0
      %v625 = vadd.f32 0.0, %v624
      %v626 = vpop.f32.mrb[0].mxu0
      %627 = vmatprep.mubr.f32.mxu0 0.0
      %628 = vmatmul.mubr.f32.gmra.mrb[0].mxu0 %v426
      %v629 = vpop.f32.mrb[0].mxu0
      %v630 = vadd.f32 0.0, %v629
      %v631 = vpop.f32.mrb[0].mxu0
      %632 = vmatprep.mubr.f32.mxu0 0.0
      %633 = vmatmul.mubr.f32.gmra.mrb[0].mxu0 %v429
      %v634 = vpop.f32.mrb[0].mxu0
      %v635 = vadd.f32 0.0, %v634
      %v636 = vpop.f32.mrb[0].mxu0
      %637 = vmatprep.mubr.f32.mxu0 0.0
      %638 = vmatmul.mubr.f32.gmra.mrb[0].mxu0 %v432
      %v639 = vpop.f32.mrb[0].mxu0
      %v640 = vadd.f32 0.0, %v639
      %v641 = vpop.f32.mrb[0].mxu0
      %642 = vmatprep.mubr.f32.mxu0 0.0
      %643 = vmatmul.mubr.f32.gmra.mrb[0].mxu0 %v435
      %v644 = vpop.f32.mrb[0].mxu0
      %v645 = vadd.f32 0.0, %v644
      %v646 = vpop.f32.mrb[0].mxu0
      %647 = vmatprep.mubr.f32.mxu0 0.0
      %648 = vmatmul.mubr.f32.gmra.mrb[0].mxu0 %v438
      %v649 = vpop.f32.mrb[0].mxu0
      %v650 = vadd.f32 0.0, %v649
      %v651 = vpop.f32.mrb[0].mxu0
      %652 = vmatprep.mubr.f32.mxu0 0.0
      %653 = vmatmul.mubr.f32.gmra.mrb[0].mxu0 %v441
      %v654 = vpop.f32.mrb[0].mxu0
      %v655 = vadd.f32 0.0, %v654
      %v656 = vpop.f32.mrb[0].mxu0
      %657 = vmatprep.mubr.f32.mxu0 0.0
      %658 = vmatmul.mubr.f32.gmra.mrb[0].mxu0 %v444
      %v659 = vpop.f32.mrb[0].mxu0
      %v660 = vadd.f32 0.0, %v659
      %v661 = vpop.f32.mrb[0].mxu0
      %662 = vmatprep.mubr.f32.mxu0 0.0
      %663 = vmatmul.mubr.f32.gmra.mrb[0].mxu0 %v447
      %v664 = vpop.f32.mrb[0].mxu0
      %v665 = vadd.f32 0.0, %v664
      %v666 = vpop.f32.mrb[0].mxu0
      %667 = vmatprep.mubr.f32.mxu0 0.0
      %668 = vmatmul.mubr.f32.gmra.mrb[0].mxu0 %v450
      %v669 = vpop.f32.mrb[0].mxu0
      %v670 = vadd.f32 0.0, %v669
      %v671 = vpop.f32.mrb[0].mxu0
      %672 = vmatprep.mubr.f32.mxu0 0.0
      %673 = vmatmul.mubr.f32.gmra.mrb[0].mxu0 %v453
      %v674 = vpop.f32.mrb[0].mxu0
      %v675 = vadd.f32 0.0, %v674
      %v676 = vpop.f32.mrb[0].mxu0
      %677 = vmatprep.mubr.f32.mxu0 0.0
      %678 = vmatmul.mubr.f32.gmra.mrb[0].mxu0 %v456
      %v679 = vpop.f32.mrb[0].mxu0
      %v680 = vadd.f32 0.0, %v679
      %v681 = vpop.f32.mrb[0].mxu0
      %682 = vdwg.mxu0
      %s683 = scalar_lea.vmem [#allocation2], 64
      %684 = vst.msk [vmem:[%s683 + $0x8] sm:$0xff] %vm269, %v525
      %685 = vst.msk [vmem:[%s683 + $0x10] sm:$0xff] %vm269, %v530
      %686 = vst.msk [vmem:[%s683 + $0x28] sm:$0xff] %vm269, %v535
      %687 = vst.msk [vmem:[%s683 + $0x30] sm:$0xff] %vm269, %v540
      %688 = vst.msk [vmem:[%s683 + $0x48] sm:$0xff] %vm269, %v545
      %689 = vst.msk [vmem:[%s683 + $0x50] sm:$0xff] %vm269, %v550
      %690 = vst.msk [vmem:[%s683 + $0x68] sm:$0xff] %vm269, %v555
      %691 = vst.msk [vmem:[%s683 + $0x70] sm:$0xff] %vm269, %v560
      %692 = vst.msk [vmem:[%s683 + $0x88] sm:$0xff] %vm269, %v565
      %693 = vst.msk [vmem:[%s683 + $0x90] sm:$0xff] %vm269, %v570
      %694 = vst.msk [vmem:[%s683 + $0xa8] sm:$0xff] %vm269, %v575
      %695 = vst.msk [vmem:[%s683 + $0xb0] sm:$0xff] %vm269, %v580
      %696 = vst.msk [vmem:[%s683 + $0xc8] sm:$0xff] %vm269, %v585
      %697 = vst.msk [vmem:[%s683 + $0xd0] sm:$0xff] %vm269, %v590
      %698 = vst.msk [vmem:[%s683 + $0xe8] sm:$0xff] %vm269, %v595
      %699 = vst.msk [vmem:[%s683 + $0xf0] sm:$0xff] %vm269, %v600
      %700 = vst.msk [vmem:[%s683 + $0x108] sm:$0xff] %vm269, %v605
      %701 = vst.msk [vmem:[%s683 + $0x110] sm:$0xff] %vm269, %v610
      %702 = vst.msk [vmem:[%s683 + $0x128] sm:$0xff] %vm269, %v615
      %703 = vst.msk [vmem:[%s683 + $0x130] sm:$0xff] %vm269, %v620
      %704 = vst.msk [vmem:[%s683 + $0x148] sm:$0xff] %vm269, %v625
      %705 = vst.msk [vmem:[%s683 + $0x150] sm:$0xff] %vm269, %v630
      %706 = vst.msk [vmem:[%s683 + $0x168] sm:$0xff] %vm269, %v635
      %707 = vst.msk [vmem:[%s683 + $0x170] sm:$0xff] %vm269, %v640
      %708 = vst.msk [vmem:[%s683 + $0x188] sm:$0xff] %vm269, %v645
      %709 = vst.msk [vmem:[%s683 + $0x190] sm:$0xff] %vm269, %v650
      %710 = vst.msk [vmem:[%s683 + $0x1a8] sm:$0xff] %vm269, %v655
      %711 = vst.msk [vmem:[%s683 + $0x1b0] sm:$0xff] %vm269, %v660
      %712 = vst.msk [vmem:[%s683 + $0x1c8] sm:$0xff] %vm269, %v665
      %713 = vst.msk [vmem:[%s683 + $0x1d0] sm:$0xff] %vm269, %v670
      %714 = vst.msk [vmem:[%s683 + $0x1e8] sm:$0xff] %vm269, %v675
      %715 = vst.msk [vmem:[%s683 + $0x1f0] sm:$0xff] %vm269, %v680
      %v716 = vld [vmem:[%s2] sm:$0x7]
      %v717 = vld [vmem:[%s2 + $0x4] sm:$0x7]
      %v718 = vld [vmem:[%s2 + $0x8] sm:$0x7]
      %v719 = vld [vmem:[%s3] sm:$0x7]
      %v720 = vld [vmem:[%s3 + $0x4] sm:$0x7]
      %v721 = vld [vmem:[%s3 + $0x8] sm:$0x7]
      %v722 = vadd.f32 %v717, %v720
      %v723 = vlaneseq
      %v724 = vshrl.u32 %v723, 7
      %v725 = vsub.s32 1, %v724
      %v726 = vrot.slane %v722, %v725
      %v727 = vmul.f32 %v525, %v726
      %v728 = vmul.f32 %v530, %v726
      %v729 = vmul.f32 %v535, %v726
      %v730 = vmul.f32 %v540, %v726
      %v731 = vmul.f32 %v545, %v726
      %v732 = vmul.f32 %v550, %v726
      %v733 = vmul.f32 %v555, %v726
      %v734 = vmul.f32 %v560, %v726
      %v735 = vmul.f32 %v565, %v726
      %v736 = vmul.f32 %v570, %v726
      %v737 = vmul.f32 %v575, %v726
      %v738 = vmul.f32 %v580, %v726
      %v739 = vmul.f32 %v585, %v726
      %v740 = vmul.f32 %v590, %v726
      %v741 = vmul.f32 %v595, %v726
      %v742 = vmul.f32 %v600, %v726
      %v743 = vmul.f32 %v605, %v726
      %v744 = vmul.f32 %v610, %v726
      %v745 = vmul.f32 %v615, %v726
      %v746 = vmul.f32 %v620, %v726
      %v747 = vmul.f32 %v625, %v726
      %v748 = vmul.f32 %v630, %v726
      %v749 = vmul.f32 %v635, %v726
      %v750 = vmul.f32 %v640, %v726
      %v751 = vmul.f32 %v645, %v726
      %v752 = vmul.f32 %v650, %v726
      %v753 = vmul.f32 %v655, %v726
      %v754 = vmul.f32 %v660, %v726
      %v755 = vmul.f32 %v665, %v726
      %v756 = vmul.f32 %v670, %v726
      %v757 = vmul.f32 %v675, %v726
      %v758 = vmul.f32 %v680, %v726
      %s759 = scalar_lea.vmem [#allocation2], 32
      %v760 = vld [vmem:[%s759 + $0x7] sm:$0xff]
      %v761 = vld [vmem:[%s759 + $0xf] sm:$0xff]
      %v762 = vld [vmem:[%s759 + $0x27] sm:$0xff]
      %v763 = vld [vmem:[%s759 + $0x2f] sm:$0xff]
      %v764 = vld [vmem:[%s759 + $0x47] sm:$0xff]
      %v765 = vld [vmem:[%s759 + $0x4f] sm:$0xff]
      %v766 = vld [vmem:[%s759 + $0x67] sm:$0xff]
      %v767 = vld [vmem:[%s759 + $0x6f] sm:$0xff]
      %v768 = vld [vmem:[%s759 + $0x87] sm:$0xff]
      %v769 = vld [vmem:[%s759 + $0x8f] sm:$0xff]
      %v770 = vld [vmem:[%s759 + $0xa7] sm:$0xff]
      %v771 = vld [vmem:[%s759 + $0xaf] sm:$0xff]
      %v772 = vld [vmem:[%s759 + $0xc7] sm:$0xff]
      %v773 = vld [vmem:[%s759 + $0xcf] sm:$0xff]
      %v774 = vld [vmem:[%s759 + $0xe7] sm:$0xff]
      %v775 = vld [vmem:[%s759 + $0xef] sm:$0xff]
      %v776 = vld [vmem:[%s759 + $0x107] sm:$0xff]
      %v777 = vld [vmem:[%s759 + $0x10f] sm:$0xff]
      %v778 = vld [vmem:[%s759 + $0x127] sm:$0xff]
      %v779 = vld [vmem:[%s759 + $0x12f] sm:$0xff]
      %v780 = vld [vmem:[%s759 + $0x147] sm:$0xff]
      %v781 = vld [vmem:[%s759 + $0x14f] sm:$0xff]
      %v782 = vld [vmem:[%s759 + $0x167] sm:$0xff]
      %v783 = vld [vmem:[%s759 + $0x16f] sm:$0xff]
      %v784 = vld [vmem:[%s759 + $0x187] sm:$0xff]
      %v785 = vld [vmem:[%s759 + $0x18f] sm:$0xff]
      %v786 = vld [vmem:[%s759 + $0x1a7] sm:$0xff]
      %v787 = vld [vmem:[%s759 + $0x1af] sm:$0xff]
      %v788 = vld [vmem:[%s759 + $0x1c7] sm:$0xff]
      %v789 = vld [vmem:[%s759 + $0x1cf] sm:$0xff]
      %v790 = vld [vmem:[%s759 + $0x1e7] sm:$0xff]
      %v791 = vld [vmem:[%s759 + $0x1ef] sm:$0xff]
      %v792 = vlaneseq
      %v793 = vshrl.u32 %v792, 7
      %v794 = vsub.s32 0, %v793
      %v795 = vrot.slane %v716, %v794
      %v796 = vmul.f32 %v760, %v795
      %v797 = vmul.f32 %v761, %v795
      %v798 = vmul.f32 %v762, %v795
      %v799 = vmul.f32 %v763, %v795
      %v800 = vmul.f32 %v764, %v795
      %v801 = vmul.f32 %v765, %v795
      %v802 = vmul.f32 %v766, %v795
      %v803 = vmul.f32 %v767, %v795
      %v804 = vmul.f32 %v768, %v795
      %v805 = vmul.f32 %v769, %v795
      %v806 = vmul.f32 %v770, %v795
      %v807 = vmul.f32 %v771, %v795
      %v808 = vmul.f32 %v772, %v795
      %v809 = vmul.f32 %v773, %v795
      %v810 = vmul.f32 %v774, %v795
      %v811 = vmul.f32 %v775, %v795
      %v812 = vmul.f32 %v776, %v795
      %v813 = vmul.f32 %v777, %v795
      %v814 = vmul.f32 %v778, %v795
      %v815 = vmul.f32 %v779, %v795
      %v816 = vmul.f32 %v780, %v795
      %v817 = vmul.f32 %v781, %v795
      %v818 = vmul.f32 %v782, %v795
      %v819 = vmul.f32 %v783, %v795
      %v820 = vmul.f32 %v784, %v795
      %v821 = vmul.f32 %v785, %v795
      %v822 = vmul.f32 %v786, %v795
      %v823 = vmul.f32 %v787, %v795
      %v824 = vmul.f32 %v788, %v795
      %v825 = vmul.f32 %v789, %v795
      %v826 = vmul.f32 %v790, %v795
      %v827 = vmul.f32 %v791, %v795
      %v828 = vld [vmem:[#allocation2 + $0x6] sm:$0xff]
      %v829 = vld [vmem:[#allocation2 + $0xe] sm:$0xff]
      %v830 = vld [vmem:[#allocation2 + $0x26] sm:$0xff]
      %v831 = vld [vmem:[#allocation2 + $0x2e] sm:$0xff]
      %v832 = vld [vmem:[#allocation2 + $0x46] sm:$0xff]
      %v833 = vld [vmem:[#allocation2 + $0x4e] sm:$0xff]
      %v834 = vld [vmem:[#allocation2 + $0x66] sm:$0xff]
      %v835 = vld [vmem:[#allocation2 + $0x6e] sm:$0xff]
      %v836 = vld [vmem:[#allocation2 + $0x86] sm:$0xff]
      %v837 = vld [vmem:[#allocation2 + $0x8e] sm:$0xff]
      %v838 = vld [vmem:[#allocation2 + $0xa6] sm:$0xff]
      %v839 = vld [vmem:[#allocation2 + $0xae] sm:$0xff]
      %v840 = vld [vmem:[#allocation2 + $0xc6] sm:$0xff]
      %v841 = vld [vmem:[#allocation2 + $0xce] sm:$0xff]
      %v842 = vld [vmem:[#allocation2 + $0xe6] sm:$0xff]
      %v843 = vld [vmem:[#allocation2 + $0xee] sm:$0xff]
      %v844 = vld [vmem:[#allocation2 + $0x106] sm:$0xff]
      %v845 = vld [vmem:[#allocation2 + $0x10e] sm:$0xff]
      %v846 = vld [vmem:[#allocation2 + $0x126] sm:$0xff]
      %v847 = vld [vmem:[#allocation2 + $0x12e] sm:$0xff]
      %v848 = vld [vmem:[#allocation2 + $0x146] sm:$0xff]
      %v849 = vld [vmem:[#allocation2 + $0x14e] sm:$0xff]
      %v850 = vld [vmem:[#allocation2 + $0x166] sm:$0xff]
      %v851 = vld [vmem:[#allocation2 + $0x16e] sm:$0xff]
      %v852 = vld [vmem:[#allocation2 + $0x186] sm:$0xff]
      %v853 = vld [vmem:[#allocation2 + $0x18e] sm:$0xff]
      %v854 = vld [vmem:[#allocation2 + $0x1a6] sm:$0xff]
      %v855 = vld [vmem:[#allocation2 + $0x1ae] sm:$0xff]
      %v856 = vld [vmem:[#allocation2 + $0x1c6] sm:$0xff]
      %v857 = vld [vmem:[#allocation2 + $0x1ce] sm:$0xff]
      %v858 = vld [vmem:[#allocation2 + $0x1e6] sm:$0xff]
      %v859 = vld [vmem:[#allocation2 + $0x1ee] sm:$0xff]
      %v860 = vlaneseq
      %v861 = vshrl.u32 %v860, 7
      %v862 = vsub.s32 0, %v861
      %v863 = vrot.slane %v719, %v862
      %v864 = vmul.f32 %v828, %v863
      %v865 = vmul.f32 %v829, %v863
      %v866 = vmul.f32 %v830, %v863
      %v867 = vmul.f32 %v831, %v863
      %v868 = vmul.f32 %v832, %v863
      %v869 = vmul.f32 %v833, %v863
      %v870 = vmul.f32 %v834, %v863
      %v871 = vmul.f32 %v835, %v863
      %v872 = vmul.f32 %v836, %v863
      %v873 = vmul.f32 %v837, %v863
      %v874 = vmul.f32 %v838, %v863
      %v875 = vmul.f32 %v839, %v863
      %v876 = vmul.f32 %v840, %v863
      %v877 = vmul.f32 %v841, %v863
      %v878 = vmul.f32 %v842, %v863
      %v879 = vmul.f32 %v843, %v863
      %v880 = vmul.f32 %v844, %v863
      %v881 = vmul.f32 %v845, %v863
      %v882 = vmul.f32 %v846, %v863
      %v883 = vmul.f32 %v847, %v863
      %v884 = vmul.f32 %v848, %v863
      %v885 = vmul.f32 %v849, %v863
      %v886 = vmul.f32 %v850, %v863
      %v887 = vmul.f32 %v851, %v863
      %v888 = vmul.f32 %v852, %v863
      %v889 = vmul.f32 %v853, %v863
      %v890 = vmul.f32 %v854, %v863
      %v891 = vmul.f32 %v855, %v863
      %v892 = vmul.f32 %v856, %v863
      %v893 = vmul.f32 %v857, %v863
      %v894 = vmul.f32 %v858, %v863
      %v895 = vmul.f32 %v859, %v863
      %v896 = vadd.f32 %v727, %v796
      %v897 = vadd.f32 %v728, %v797
      %v898 = vadd.f32 %v729, %v798
      %v899 = vadd.f32 %v730, %v799
      %v900 = vadd.f32 %v731, %v800
      %v901 = vadd.f32 %v732, %v801
      %v902 = vadd.f32 %v733, %v802
      %v903 = vadd.f32 %v734, %v803
      %v904 = vadd.f32 %v735, %v804
      %v905 = vadd.f32 %v736, %v805
      %v906 = vadd.f32 %v737, %v806
      %v907 = vadd.f32 %v738, %v807
      %v908 = vadd.f32 %v739, %v808
      %v909 = vadd.f32 %v740, %v809
      %v910 = vadd.f32 %v741, %v810
      %v911 = vadd.f32 %v742, %v811
      %v912 = vadd.f32 %v743, %v812
      %v913 = vadd.f32 %v744, %v813
      %v914 = vadd.f32 %v745, %v814
      %v915 = vadd.f32 %v746, %v815
      %v916 = vadd.f32 %v747, %v816
      %v917 = vadd.f32 %v748, %v817
      %v918 = vadd.f32 %v749, %v818
      %v919 = vadd.f32 %v750, %v819
      %v920 = vadd.f32 %v751, %v820
      %v921 = vadd.f32 %v752, %v821
      %v922 = vadd.f32 %v753, %v822
      %v923 = vadd.f32 %v754, %v823
      %v924 = vadd.f32 %v755, %v824
      %v925 = vadd.f32 %v756, %v825
      %v926 = vadd.f32 %v757, %v826
      %v927 = vadd.f32 %v758, %v827
      %v928 = vld [vmem:[%s759 + $0x8] sm:$0xff]
      %v929 = vld [vmem:[%s759 + $0x10] sm:$0xff]
      %v930 = vld [vmem:[%s759 + $0x28] sm:$0xff]
      %v931 = vld [vmem:[%s759 + $0x30] sm:$0xff]
      %v932 = vld [vmem:[%s759 + $0x48] sm:$0xff]
      %v933 = vld [vmem:[%s759 + $0x50] sm:$0xff]
      %v934 = vld [vmem:[%s759 + $0x68] sm:$0xff]
      %v935 = vld [vmem:[%s759 + $0x70] sm:$0xff]
      %v936 = vld [vmem:[%s759 + $0x88] sm:$0xff]
      %v937 = vld [vmem:[%s759 + $0x90] sm:$0xff]
      %v938 = vld [vmem:[%s759 + $0xa8] sm:$0xff]
      %v939 = vld [vmem:[%s759 + $0xb0] sm:$0xff]
      %v940 = vld [vmem:[%s759 + $0xc8] sm:$0xff]
      %v941 = vld [vmem:[%s759 + $0xd0] sm:$0xff]
      %v942 = vld [vmem:[%s759 + $0xe8] sm:$0xff]
      %v943 = vld [vmem:[%s759 + $0xf0] sm:$0xff]
      %v944 = vld [vmem:[%s759 + $0x108] sm:$0xff]
      %v945 = vld [vmem:[%s759 + $0x110] sm:$0xff]
      %v946 = vld [vmem:[%s759 + $0x128] sm:$0xff]
      %v947 = vld [vmem:[%s759 + $0x130] sm:$0xff]
      %v948 = vld [vmem:[%s759 + $0x148] sm:$0xff]
      %v949 = vld [vmem:[%s759 + $0x150] sm:$0xff]
      %v950 = vld [vmem:[%s759 + $0x168] sm:$0xff]
      %v951 = vld [vmem:[%s759 + $0x170] sm:$0xff]
      %v952 = vld [vmem:[%s759 + $0x188] sm:$0xff]
      %v953 = vld [vmem:[%s759 + $0x190] sm:$0xff]
      %v954 = vld [vmem:[%s759 + $0x1a8] sm:$0xff]
      %v955 = vld [vmem:[%s759 + $0x1b0] sm:$0xff]
      %v956 = vld [vmem:[%s759 + $0x1c8] sm:$0xff]
      %v957 = vld [vmem:[%s759 + $0x1d0] sm:$0xff]
      %v958 = vld [vmem:[%s759 + $0x1e8] sm:$0xff]
      %v959 = vld [vmem:[%s759 + $0x1f0] sm:$0xff]
      %v960 = vlaneseq
      %v961 = vshrl.u32 %v960, 7
      %v962 = vsub.s32 1, %v961
      %v963 = vrot.slane %v716, %v962
      %v964 = vmul.f32 %v928, %v963
      %v965 = vmul.f32 %v929, %v963
      %v966 = vmul.f32 %v930, %v963
      %v967 = vmul.f32 %v931, %v963
      %v968 = vmul.f32 %v932, %v963
      %v969 = vmul.f32 %v933, %v963
      %v970 = vmul.f32 %v934, %v963
      %v971 = vmul.f32 %v935, %v963
      %v972 = vmul.f32 %v936, %v963
      %v973 = vmul.f32 %v937, %v963
      %v974 = vmul.f32 %v938, %v963
      %v975 = vmul.f32 %v939, %v963
      %v976 = vmul.f32 %v940, %v963
      %v977 = vmul.f32 %v941, %v963
      %v978 = vmul.f32 %v942, %v963
      %v979 = vmul.f32 %v943, %v963
      %v980 = vmul.f32 %v944, %v963
      %v981 = vmul.f32 %v945, %v963
      %v982 = vmul.f32 %v946, %v963
      %v983 = vmul.f32 %v947, %v963
      %v984 = vmul.f32 %v948, %v963
      %v985 = vmul.f32 %v949, %v963
      %v986 = vmul.f32 %v950, %v963
      %v987 = vmul.f32 %v951, %v963
      %v988 = vmul.f32 %v952, %v963
      %v989 = vmul.f32 %v953, %v963
      %v990 = vmul.f32 %v954, %v963
      %v991 = vmul.f32 %v955, %v963
      %v992 = vmul.f32 %v956, %v963
      %v993 = vmul.f32 %v957, %v963
      %v994 = vmul.f32 %v958, %v963
      %v995 = vmul.f32 %v959, %v963
      %v996 = vld [vmem:[#allocation2 + $0x8] sm:$0xff]
      %v997 = vld [vmem:[#allocation2 + $0x10] sm:$0xff]
      %v998 = vld [vmem:[#allocation2 + $0x28] sm:$0xff]
      %v999 = vld [vmem:[#allocation2 + $0x30] sm:$0xff]
      %v1000 = vld [vmem:[#allocation2 + $0x48] sm:$0xff]
      %v1001 = vld [vmem:[#allocation2 + $0x50] sm:$0xff]
      %v1002 = vld [vmem:[#allocation2 + $0x68] sm:$0xff]
      %v1003 = vld [vmem:[#allocation2 + $0x70] sm:$0xff]
      %v1004 = vld [vmem:[#allocation2 + $0x88] sm:$0xff]
      %v1005 = vld [vmem:[#allocation2 + $0x90] sm:$0xff]
      %v1006 = vld [vmem:[#allocation2 + $0xa8] sm:$0xff]
      %v1007 = vld [vmem:[#allocation2 + $0xb0] sm:$0xff]
      %v1008 = vld [vmem:[#allocation2 + $0xc8] sm:$0xff]
      %v1009 = vld [vmem:[#allocation2 + $0xd0] sm:$0xff]
      %v1010 = vld [vmem:[#allocation2 + $0xe8] sm:$0xff]
      %v1011 = vld [vmem:[#allocation2 + $0xf0] sm:$0xff]
      %v1012 = vld [vmem:[#allocation2 + $0x108] sm:$0xff]
      %v1013 = vld [vmem:[#allocation2 + $0x110] sm:$0xff]
      %v1014 = vld [vmem:[#allocation2 + $0x128] sm:$0xff]
      %v1015 = vld [vmem:[#allocation2 + $0x130] sm:$0xff]
      %v1016 = vld [vmem:[#allocation2 + $0x148] sm:$0xff]
      %v1017 = vld [vmem:[#allocation2 + $0x150] sm:$0xff]
      %v1018 = vld [vmem:[#allocation2 + $0x168] sm:$0xff]
      %v1019 = vld [vmem:[#allocation2 + $0x170] sm:$0xff]
      %v1020 = vld [vmem:[#allocation2 + $0x188] sm:$0xff]
      %v1021 = vld [vmem:[#allocation2 + $0x190] sm:$0xff]
      %v1022 = vld [vmem:[#allocation2 + $0x1a8] sm:$0xff]
      %v1023 = vld [vmem:[#allocation2 + $0x1b0] sm:$0xff]
      %v1024 = vld [vmem:[#allocation2 + $0x1c8] sm:$0xff]
      %v1025 = vld [vmem:[#allocation2 + $0x1d0] sm:$0xff]
      %v1026 = vld [vmem:[#allocation2 + $0x1e8] sm:$0xff]
      %v1027 = vld [vmem:[#allocation2 + $0x1f0] sm:$0xff]
      %v1028 = vlaneseq
      %v1029 = vshrl.u32 %v1028, 7
      %v1030 = vsub.s32 1, %v1029
      %v1031 = vrot.slane %v719, %v1030
      %v1032 = vmul.f32 %v996, %v1031
      %v1033 = vmul.f32 %v997, %v1031
      %v1034 = vmul.f32 %v998, %v1031
      %v1035 = vmul.f32 %v999, %v1031
      %v1036 = vmul.f32 %v1000, %v1031
      %v1037 = vmul.f32 %v1001, %v1031
      %v1038 = vmul.f32 %v1002, %v1031
      %v1039 = vmul.f32 %v1003, %v1031
      %v1040 = vmul.f32 %v1004, %v1031
      %v1041 = vmul.f32 %v1005, %v1031
      %v1042 = vmul.f32 %v1006, %v1031
      %v1043 = vmul.f32 %v1007, %v1031
      %v1044 = vmul.f32 %v1008, %v1031
      %v1045 = vmul.f32 %v1009, %v1031
      %v1046 = vmul.f32 %v1010, %v1031
      %v1047 = vmul.f32 %v1011, %v1031
      %v1048 = vmul.f32 %v1012, %v1031
      %v1049 = vmul.f32 %v1013, %v1031
      %v1050 = vmul.f32 %v1014, %v1031
      %v1051 = vmul.f32 %v1015, %v1031
      %v1052 = vmul.f32 %v1016, %v1031
      %v1053 = vmul.f32 %v1017, %v1031
      %v1054 = vmul.f32 %v1018, %v1031
      %v1055 = vmul.f32 %v1019, %v1031
      %v1056 = vmul.f32 %v1020, %v1031
      %v1057 = vmul.f32 %v1021, %v1031
      %v1058 = vmul.f32 %v1022, %v1031
      %v1059 = vmul.f32 %v1023, %v1031
      %v1060 = vmul.f32 %v1024, %v1031
      %v1061 = vmul.f32 %v1025, %v1031
      %v1062 = vmul.f32 %v1026, %v1031
      %v1063 = vmul.f32 %v1027, %v1031
      %v1064 = vadd.f32 %v896, %v964
      %v1065 = vadd.f32 %v897, %v965
      %v1066 = vadd.f32 %v898, %v966
      %v1067 = vadd.f32 %v899, %v967
      %v1068 = vadd.f32 %v900, %v968
      %v1069 = vadd.f32 %v901, %v969
      %v1070 = vadd.f32 %v902, %v970
      %v1071 = vadd.f32 %v903, %v971
      %v1072 = vadd.f32 %v904, %v972
      %v1073 = vadd.f32 %v905, %v973
      %v1074 = vadd.f32 %v906, %v974
      %v1075 = vadd.f32 %v907, %v975
      %v1076 = vadd.f32 %v908, %v976
      %v1077 = vadd.f32 %v909, %v977
      %v1078 = vadd.f32 %v910, %v978
      %v1079 = vadd.f32 %v911, %v979
      %v1080 = vadd.f32 %v912, %v980
      %v1081 = vadd.f32 %v913, %v981
      %v1082 = vadd.f32 %v914, %v982
      %v1083 = vadd.f32 %v915, %v983
      %v1084 = vadd.f32 %v916, %v984
      %v1085 = vadd.f32 %v917, %v985
      %v1086 = vadd.f32 %v918, %v986
      %v1087 = vadd.f32 %v919, %v987
      %v1088 = vadd.f32 %v920, %v988
      %v1089 = vadd.f32 %v921, %v989
      %v1090 = vadd.f32 %v922, %v990
      %v1091 = vadd.f32 %v923, %v991
      %v1092 = vadd.f32 %v924, %v992
      %v1093 = vadd.f32 %v925, %v993
      %v1094 = vadd.f32 %v926, %v994
      %v1095 = vadd.f32 %v927, %v995
      %v1096 = vadd.f32 %v864, %v1032
      %v1097 = vadd.f32 %v865, %v1033
      %v1098 = vadd.f32 %v866, %v1034
      %v1099 = vadd.f32 %v867, %v1035
      %v1100 = vadd.f32 %v868, %v1036
      %v1101 = vadd.f32 %v869, %v1037
      %v1102 = vadd.f32 %v870, %v1038
      %v1103 = vadd.f32 %v871, %v1039
      %v1104 = vadd.f32 %v872, %v1040
      %v1105 = vadd.f32 %v873, %v1041
      %v1106 = vadd.f32 %v874, %v1042
      %v1107 = vadd.f32 %v875, %v1043
      %v1108 = vadd.f32 %v876, %v1044
      %v1109 = vadd.f32 %v877, %v1045
      %v1110 = vadd.f32 %v878, %v1046
      %v1111 = vadd.f32 %v879, %v1047
      %v1112 = vadd.f32 %v880, %v1048
      %v1113 = vadd.f32 %v881, %v1049
      %v1114 = vadd.f32 %v882, %v1050
      %v1115 = vadd.f32 %v883, %v1051
      %v1116 = vadd.f32 %v884, %v1052
      %v1117 = vadd.f32 %v885, %v1053
      %v1118 = vadd.f32 %v886, %v1054
      %v1119 = vadd.f32 %v887, %v1055
      %v1120 = vadd.f32 %v888, %v1056
      %v1121 = vadd.f32 %v889, %v1057
      %v1122 = vadd.f32 %v890, %v1058
      %v1123 = vadd.f32 %v891, %v1059
      %v1124 = vadd.f32 %v892, %v1060
      %v1125 = vadd.f32 %v893, %v1061
      %v1126 = vadd.f32 %v894, %v1062
      %v1127 = vadd.f32 %v895, %v1063
      %v1128 = vld [vmem:[%s759 + $0x9] sm:$0xff]
      %v1129 = vld [vmem:[%s759 + $0x11] sm:$0xff]
      %v1130 = vld [vmem:[%s759 + $0x29] sm:$0xff]
      %v1131 = vld [vmem:[%s759 + $0x31] sm:$0xff]
      %v1132 = vld [vmem:[%s759 + $0x49] sm:$0xff]
      %v1133 = vld [vmem:[%s759 + $0x51] sm:$0xff]
      %v1134 = vld [vmem:[%s759 + $0x69] sm:$0xff]
      %v1135 = vld [vmem:[%s759 + $0x71] sm:$0xff]
      %v1136 = vld [vmem:[%s759 + $0x89] sm:$0xff]
      %v1137 = vld [vmem:[%s759 + $0x91] sm:$0xff]
      %v1138 = vld [vmem:[%s759 + $0xa9] sm:$0xff]
      %v1139 = vld [vmem:[%s759 + $0xb1] sm:$0xff]
      %v1140 = vld [vmem:[%s759 + $0xc9] sm:$0xff]
      %v1141 = vld [vmem:[%s759 + $0xd1] sm:$0xff]
      %v1142 = vld [vmem:[%s759 + $0xe9] sm:$0xff]
      %v1143 = vld [vmem:[%s759 + $0xf1] sm:$0xff]
      %v1144 = vld [vmem:[%s759 + $0x109] sm:$0xff]
      %v1145 = vld [vmem:[%s759 + $0x111] sm:$0xff]
      %v1146 = vld [vmem:[%s759 + $0x129] sm:$0xff]
      %v1147 = vld [vmem:[%s759 + $0x131] sm:$0xff]
      %v1148 = vld [vmem:[%s759 + $0x149] sm:$0xff]
      %v1149 = vld [vmem:[%s759 + $0x151] sm:$0xff]
      %v1150 = vld [vmem:[%s759 + $0x169] sm:$0xff]
      %v1151 = vld [vmem:[%s759 + $0x171] sm:$0xff]
      %v1152 = vld [vmem:[%s759 + $0x189] sm:$0xff]
      %v1153 = vld [vmem:[%s759 + $0x191] sm:$0xff]
      %v1154 = vld [vmem:[%s759 + $0x1a9] sm:$0xff]
      %v1155 = vld [vmem:[%s759 + $0x1b1] sm:$0xff]
      %v1156 = vld [vmem:[%s759 + $0x1c9] sm:$0xff]
      %v1157 = vld [vmem:[%s759 + $0x1d1] sm:$0xff]
      %v1158 = vld [vmem:[%s759 + $0x1e9] sm:$0xff]
      %v1159 = vld [vmem:[%s759 + $0x1f1] sm:$0xff]
      %v1160 = vlaneseq
      %v1161 = vshrl.u32 %v1160, 7
      %v1162 = vsub.s32 2, %v1161
      %v1163 = vrot.slane %v716, %v1162
      %v1164 = vmul.f32 %v1128, %v1163
      %v1165 = vmul.f32 %v1129, %v1163
      %v1166 = vmul.f32 %v1130, %v1163
      %v1167 = vmul.f32 %v1131, %v1163
      %v1168 = vmul.f32 %v1132, %v1163
      %v1169 = vmul.f32 %v1133, %v1163
      %v1170 = vmul.f32 %v1134, %v1163
      %v1171 = vmul.f32 %v1135, %v1163
      %v1172 = vmul.f32 %v1136, %v1163
      %v1173 = vmul.f32 %v1137, %v1163
      %v1174 = vmul.f32 %v1138, %v1163
      %v1175 = vmul.f32 %v1139, %v1163
      %v1176 = vmul.f32 %v1140, %v1163
      %v1177 = vmul.f32 %v1141, %v1163
      %v1178 = vmul.f32 %v1142, %v1163
      %v1179 = vmul.f32 %v1143, %v1163
      %v1180 = vmul.f32 %v1144, %v1163
      %v1181 = vmul.f32 %v1145, %v1163
      %v1182 = vmul.f32 %v1146, %v1163
      %v1183 = vmul.f32 %v1147, %v1163
      %v1184 = vmul.f32 %v1148, %v1163
      %v1185 = vmul.f32 %v1149, %v1163
      %v1186 = vmul.f32 %v1150, %v1163
      %v1187 = vmul.f32 %v1151, %v1163
      %v1188 = vmul.f32 %v1152, %v1163
      %v1189 = vmul.f32 %v1153, %v1163
      %v1190 = vmul.f32 %v1154, %v1163
      %v1191 = vmul.f32 %v1155, %v1163
      %v1192 = vmul.f32 %v1156, %v1163
      %v1193 = vmul.f32 %v1157, %v1163
      %v1194 = vmul.f32 %v1158, %v1163
      %v1195 = vmul.f32 %v1159, %v1163
      %v1196 = vld [vmem:[#allocation2 + $0xa] sm:$0xff]
      %v1197 = vld [vmem:[#allocation2 + $0x12] sm:$0xff]
      %v1198 = vld [vmem:[#allocation2 + $0x2a] sm:$0xff]
      %v1199 = vld [vmem:[#allocation2 + $0x32] sm:$0xff]
      %v1200 = vld [vmem:[#allocation2 + $0x4a] sm:$0xff]
      %v1201 = vld [vmem:[#allocation2 + $0x52] sm:$0xff]
      %v1202 = vld [vmem:[#allocation2 + $0x6a] sm:$0xff]
      %v1203 = vld [vmem:[#allocation2 + $0x72] sm:$0xff]
      %v1204 = vld [vmem:[#allocation2 + $0x8a] sm:$0xff]
      %v1205 = vld [vmem:[#allocation2 + $0x92] sm:$0xff]
      %v1206 = vld [vmem:[#allocation2 + $0xaa] sm:$0xff]
      %v1207 = vld [vmem:[#allocation2 + $0xb2] sm:$0xff]
      %v1208 = vld [vmem:[#allocation2 + $0xca] sm:$0xff]
      %v1209 = vld [vmem:[#allocation2 + $0xd2] sm:$0xff]
      %v1210 = vld [vmem:[#allocation2 + $0xea] sm:$0xff]
      %v1211 = vld [vmem:[#allocation2 + $0xf2] sm:$0xff]
      %v1212 = vld [vmem:[#allocation2 + $0x10a] sm:$0xff]
      %v1213 = vld [vmem:[#allocation2 + $0x112] sm:$0xff]
      %v1214 = vld [vmem:[#allocation2 + $0x12a] sm:$0xff]
      %v1215 = vld [vmem:[#allocation2 + $0x132] sm:$0xff]
      %v1216 = vld [vmem:[#allocation2 + $0x14a] sm:$0xff]
      %v1217 = vld [vmem:[#allocation2 + $0x152] sm:$0xff]
      %v1218 = vld [vmem:[#allocation2 + $0x16a] sm:$0xff]
      %v1219 = vld [vmem:[#allocation2 + $0x172] sm:$0xff]
      %v1220 = vld [vmem:[#allocation2 + $0x18a] sm:$0xff]
      %v1221 = vld [vmem:[#allocation2 + $0x192] sm:$0xff]
      %v1222 = vld [vmem:[#allocation2 + $0x1aa] sm:$0xff]
      %v1223 = vld [vmem:[#allocation2 + $0x1b2] sm:$0xff]
      %v1224 = vld [vmem:[#allocation2 + $0x1ca] sm:$0xff]
      %v1225 = vld [vmem:[#allocation2 + $0x1d2] sm:$0xff]
      %v1226 = vld [vmem:[#allocation2 + $0x1ea] sm:$0xff]
      %v1227 = vld [vmem:[#allocation2 + $0x1f2] sm:$0xff]
      %v1228 = vlaneseq
      %v1229 = vshrl.u32 %v1228, 7
      %v1230 = vsub.s32 2, %v1229
      %v1231 = vrot.slane %v719, %v1230
      %v1232 = vmul.f32 %v1196, %v1231
      %v1233 = vmul.f32 %v1197, %v1231
      %v1234 = vmul.f32 %v1198, %v1231
      %v1235 = vmul.f32 %v1199, %v1231
      %v1236 = vmul.f32 %v1200, %v1231
      %v1237 = vmul.f32 %v1201, %v1231
      %v1238 = vmul.f32 %v1202, %v1231
      %v1239 = vmul.f32 %v1203, %v1231
      %v1240 = vmul.f32 %v1204, %v1231
      %v1241 = vmul.f32 %v1205, %v1231
      %v1242 = vmul.f32 %v1206, %v1231
      %v1243 = vmul.f32 %v1207, %v1231
      %v1244 = vmul.f32 %v1208, %v1231
      %v1245 = vmul.f32 %v1209, %v1231
      %v1246 = vmul.f32 %v1210, %v1231
      %v1247 = vmul.f32 %v1211, %v1231
      %v1248 = vmul.f32 %v1212, %v1231
      %v1249 = vmul.f32 %v1213, %v1231
      %v1250 = vmul.f32 %v1214, %v1231
      %v1251 = vmul.f32 %v1215, %v1231
      %v1252 = vmul.f32 %v1216, %v1231
      %v1253 = vmul.f32 %v1217, %v1231
      %v1254 = vmul.f32 %v1218, %v1231
      %v1255 = vmul.f32 %v1219, %v1231
      %v1256 = vmul.f32 %v1220, %v1231
      %v1257 = vmul.f32 %v1221, %v1231
      %v1258 = vmul.f32 %v1222, %v1231
      %v1259 = vmul.f32 %v1223, %v1231
      %v1260 = vmul.f32 %v1224, %v1231
      %v1261 = vmul.f32 %v1225, %v1231
      %v1262 = vmul.f32 %v1226, %v1231
      %v1263 = vmul.f32 %v1227, %v1231
      %v1264 = vadd.f32 %v1064, %v1164
      %v1265 = vadd.f32 %v1065, %v1165
      %v1266 = vadd.f32 %v1066, %v1166
      %v1267 = vadd.f32 %v1067, %v1167
      %v1268 = vadd.f32 %v1068, %v1168
      %v1269 = vadd.f32 %v1069, %v1169
      %v1270 = vadd.f32 %v1070, %v1170
      %v1271 = vadd.f32 %v1071, %v1171
      %v1272 = vadd.f32 %v1072, %v1172
      %v1273 = vadd.f32 %v1073, %v1173
      %v1274 = vadd.f32 %v1074, %v1174
      %v1275 = vadd.f32 %v1075, %v1175
      %v1276 = vadd.f32 %v1076, %v1176
      %v1277 = vadd.f32 %v1077, %v1177
      %v1278 = vadd.f32 %v1078, %v1178
      %v1279 = vadd.f32 %v1079, %v1179
      %v1280 = vadd.f32 %v1080, %v1180
      %v1281 = vadd.f32 %v1081, %v1181
      %v1282 = vadd.f32 %v1082, %v1182
      %v1283 = vadd.f32 %v1083, %v1183
      %v1284 = vadd.f32 %v1084, %v1184
      %v1285 = vadd.f32 %v1085, %v1185
      %v1286 = vadd.f32 %v1086, %v1186
      %v1287 = vadd.f32 %v1087, %v1187
      %v1288 = vadd.f32 %v1088, %v1188
      %v1289 = vadd.f32 %v1089, %v1189
      %v1290 = vadd.f32 %v1090, %v1190
      %v1291 = vadd.f32 %v1091, %v1191
      %v1292 = vadd.f32 %v1092, %v1192
      %v1293 = vadd.f32 %v1093, %v1193
      %v1294 = vadd.f32 %v1094, %v1194
      %v1295 = vadd.f32 %v1095, %v1195
      %v1296 = vadd.f32 %v1096, %v1232
      %v1297 = vadd.f32 %v1097, %v1233
      %v1298 = vadd.f32 %v1098, %v1234
      %v1299 = vadd.f32 %v1099, %v1235
      %v1300 = vadd.f32 %v1100, %v1236
      %v1301 = vadd.f32 %v1101, %v1237
      %v1302 = vadd.f32 %v1102, %v1238
      %v1303 = vadd.f32 %v1103, %v1239
      %v1304 = vadd.f32 %v1104, %v1240
      %v1305 = vadd.f32 %v1105, %v1241
      %v1306 = vadd.f32 %v1106, %v1242
      %v1307 = vadd.f32 %v1107, %v1243
      %v1308 = vadd.f32 %v1108, %v1244
      %v1309 = vadd.f32 %v1109, %v1245
      %v1310 = vadd.f32 %v1110, %v1246
      %v1311 = vadd.f32 %v1111, %v1247
      %v1312 = vadd.f32 %v1112, %v1248
      %v1313 = vadd.f32 %v1113, %v1249
      %v1314 = vadd.f32 %v1114, %v1250
      %v1315 = vadd.f32 %v1115, %v1251
      %v1316 = vadd.f32 %v1116, %v1252
      %v1317 = vadd.f32 %v1117, %v1253
      %v1318 = vadd.f32 %v1118, %v1254
      %v1319 = vadd.f32 %v1119, %v1255
      %v1320 = vadd.f32 %v1120, %v1256
      %v1321 = vadd.f32 %v1121, %v1257
      %v1322 = vadd.f32 %v1122, %v1258
      %v1323 = vadd.f32 %v1123, %v1259
      %v1324 = vadd.f32 %v1124, %v1260
      %v1325 = vadd.f32 %v1125, %v1261
      %v1326 = vadd.f32 %v1126, %v1262
      %v1327 = vadd.f32 %v1127, %v1263
      %v1328 = vld [vmem:[%s683 + $0x7] sm:$0xff]
      %v1329 = vld [vmem:[%s683 + $0xf] sm:$0xff]
      %v1330 = vld [vmem:[%s683 + $0x27] sm:$0xff]
      %v1331 = vld [vmem:[%s683 + $0x2f] sm:$0xff]
      %v1332 = vld [vmem:[%s683 + $0x47] sm:$0xff]
      %v1333 = vld [vmem:[%s683 + $0x4f] sm:$0xff]
      %v1334 = vld [vmem:[%s683 + $0x67] sm:$0xff]
      %v1335 = vld [vmem:[%s683 + $0x6f] sm:$0xff]
      %v1336 = vld [vmem:[%s683 + $0x87] sm:$0xff]
      %v1337 = vld [vmem:[%s683 + $0x8f] sm:$0xff]
      %v1338 = vld [vmem:[%s683 + $0xa7] sm:$0xff]
      %v1339 = vld [vmem:[%s683 + $0xaf] sm:$0xff]
      %v1340 = vld [vmem:[%s683 + $0xc7] sm:$0xff]
      %v1341 = vld [vmem:[%s683 + $0xcf] sm:$0xff]
      %v1342 = vld [vmem:[%s683 + $0xe7] sm:$0xff]
      %v1343 = vld [vmem:[%s683 + $0xef] sm:$0xff]
      %v1344 = vld [vmem:[%s683 + $0x107] sm:$0xff]
      %v1345 = vld [vmem:[%s683 + $0x10f] sm:$0xff]
      %v1346 = vld [vmem:[%s683 + $0x127] sm:$0xff]
      %v1347 = vld [vmem:[%s683 + $0x12f] sm:$0xff]
      %v1348 = vld [vmem:[%s683 + $0x147] sm:$0xff]
      %v1349 = vld [vmem:[%s683 + $0x14f] sm:$0xff]
      %v1350 = vld [vmem:[%s683 + $0x167] sm:$0xff]
      %v1351 = vld [vmem:[%s683 + $0x16f] sm:$0xff]
      %v1352 = vld [vmem:[%s683 + $0x187] sm:$0xff]
      %v1353 = vld [vmem:[%s683 + $0x18f] sm:$0xff]
      %v1354 = vld [vmem:[%s683 + $0x1a7] sm:$0xff]
      %v1355 = vld [vmem:[%s683 + $0x1af] sm:$0xff]
      %v1356 = vld [vmem:[%s683 + $0x1c7] sm:$0xff]
      %v1357 = vld [vmem:[%s683 + $0x1cf] sm:$0xff]
      %v1358 = vld [vmem:[%s683 + $0x1e7] sm:$0xff]
      %v1359 = vld [vmem:[%s683 + $0x1ef] sm:$0xff]
      %v1360 = vlaneseq
      %v1361 = vshrl.u32 %v1360, 7
      %v1362 = vsub.s32 0, %v1361
      %v1363 = vrot.slane %v717, %v1362
      %v1364 = vmul.f32 %v1328, %v1363
      %v1365 = vmul.f32 %v1329, %v1363
      %v1366 = vmul.f32 %v1330, %v1363
      %v1367 = vmul.f32 %v1331, %v1363
      %v1368 = vmul.f32 %v1332, %v1363
      %v1369 = vmul.f32 %v1333, %v1363
      %v1370 = vmul.f32 %v1334, %v1363
      %v1371 = vmul.f32 %v1335, %v1363
      %v1372 = vmul.f32 %v1336, %v1363
      %v1373 = vmul.f32 %v1337, %v1363
      %v1374 = vmul.f32 %v1338, %v1363
      %v1375 = vmul.f32 %v1339, %v1363
      %v1376 = vmul.f32 %v1340, %v1363
      %v1377 = vmul.f32 %v1341, %v1363
      %v1378 = vmul.f32 %v1342, %v1363
      %v1379 = vmul.f32 %v1343, %v1363
      %v1380 = vmul.f32 %v1344, %v1363
      %v1381 = vmul.f32 %v1345, %v1363
      %v1382 = vmul.f32 %v1346, %v1363
      %v1383 = vmul.f32 %v1347, %v1363
      %v1384 = vmul.f32 %v1348, %v1363
      %v1385 = vmul.f32 %v1349, %v1363
      %v1386 = vmul.f32 %v1350, %v1363
      %v1387 = vmul.f32 %v1351, %v1363
      %v1388 = vmul.f32 %v1352, %v1363
      %v1389 = vmul.f32 %v1353, %v1363
      %v1390 = vmul.f32 %v1354, %v1363
      %v1391 = vmul.f32 %v1355, %v1363
      %v1392 = vmul.f32 %v1356, %v1363
      %v1393 = vmul.f32 %v1357, %v1363
      %v1394 = vmul.f32 %v1358, %v1363
      %v1395 = vmul.f32 %v1359, %v1363
      %v1396 = vld [vmem:[%s683 + $0x6] sm:$0xff]
      %v1397 = vld [vmem:[%s683 + $0xe] sm:$0xff]
      %v1398 = vld [vmem:[%s683 + $0x26] sm:$0xff]
      %v1399 = vld [vmem:[%s683 + $0x2e] sm:$0xff]
      %v1400 = vld [vmem:[%s683 + $0x46] sm:$0xff]
      %v1401 = vld [vmem:[%s683 + $0x4e] sm:$0xff]
      %v1402 = vld [vmem:[%s683 + $0x66] sm:$0xff]
      %v1403 = vld [vmem:[%s683 + $0x6e] sm:$0xff]
      %v1404 = vld [vmem:[%s683 + $0x86] sm:$0xff]
      %v1405 = vld [vmem:[%s683 + $0x8e] sm:$0xff]
      %v1406 = vld [vmem:[%s683 + $0xa6] sm:$0xff]
      %v1407 = vld [vmem:[%s683 + $0xae] sm:$0xff]
      %v1408 = vld [vmem:[%s683 + $0xc6] sm:$0xff]
      %v1409 = vld [vmem:[%s683 + $0xce] sm:$0xff]
      %v1410 = vld [vmem:[%s683 + $0xe6] sm:$0xff]
      %v1411 = vld [vmem:[%s683 + $0xee] sm:$0xff]
      %v1412 = vld [vmem:[%s683 + $0x106] sm:$0xff]
      %v1413 = vld [vmem:[%s683 + $0x10e] sm:$0xff]
      %v1414 = vld [vmem:[%s683 + $0x126] sm:$0xff]
      %v1415 = vld [vmem:[%s683 + $0x12e] sm:$0xff]
      %v1416 = vld [vmem:[%s683 + $0x146] sm:$0xff]
      %v1417 = vld [vmem:[%s683 + $0x14e] sm:$0xff]
      %v1418 = vld [vmem:[%s683 + $0x166] sm:$0xff]
      %v1419 = vld [vmem:[%s683 + $0x16e] sm:$0xff]
      %v1420 = vld [vmem:[%s683 + $0x186] sm:$0xff]
      %v1421 = vld [vmem:[%s683 + $0x18e] sm:$0xff]
      %v1422 = vld [vmem:[%s683 + $0x1a6] sm:$0xff]
      %v1423 = vld [vmem:[%s683 + $0x1ae] sm:$0xff]
      %v1424 = vld [vmem:[%s683 + $0x1c6] sm:$0xff]
      %v1425 = vld [vmem:[%s683 + $0x1ce] sm:$0xff]
      %v1426 = vld [vmem:[%s683 + $0x1e6] sm:$0xff]
      %v1427 = vld [vmem:[%s683 + $0x1ee] sm:$0xff]
      %v1428 = vlaneseq
      %v1429 = vshrl.u32 %v1428, 7
      %v1430 = vsub.s32 0, %v1429
      %v1431 = vrot.slane %v720, %v1430
      %v1432 = vmul.f32 %v1396, %v1431
      %v1433 = vmul.f32 %v1397, %v1431
      %v1434 = vmul.f32 %v1398, %v1431
      %v1435 = vmul.f32 %v1399, %v1431
      %v1436 = vmul.f32 %v1400, %v1431
      %v1437 = vmul.f32 %v1401, %v1431
      %v1438 = vmul.f32 %v1402, %v1431
      %v1439 = vmul.f32 %v1403, %v1431
      %v1440 = vmul.f32 %v1404, %v1431
      %v1441 = vmul.f32 %v1405, %v1431
      %v1442 = vmul.f32 %v1406, %v1431
      %v1443 = vmul.f32 %v1407, %v1431
      %v1444 = vmul.f32 %v1408, %v1431
      %v1445 = vmul.f32 %v1409, %v1431
      %v1446 = vmul.f32 %v1410, %v1431
      %v1447 = vmul.f32 %v1411, %v1431
      %v1448 = vmul.f32 %v1412, %v1431
      %v1449 = vmul.f32 %v1413, %v1431
      %v1450 = vmul.f32 %v1414, %v1431
      %v1451 = vmul.f32 %v1415, %v1431
      %v1452 = vmul.f32 %v1416, %v1431
      %v1453 = vmul.f32 %v1417, %v1431
      %v1454 = vmul.f32 %v1418, %v1431
      %v1455 = vmul.f32 %v1419, %v1431
      %v1456 = vmul.f32 %v1420, %v1431
      %v1457 = vmul.f32 %v1421, %v1431
      %v1458 = vmul.f32 %v1422, %v1431
      %v1459 = vmul.f32 %v1423, %v1431
      %v1460 = vmul.f32 %v1424, %v1431
      %v1461 = vmul.f32 %v1425, %v1431
      %v1462 = vmul.f32 %v1426, %v1431
      %v1463 = vmul.f32 %v1427, %v1431
      %v1464 = vadd.f32 %v1264, %v1364
      %v1465 = vadd.f32 %v1265, %v1365
      %v1466 = vadd.f32 %v1266, %v1366
      %v1467 = vadd.f32 %v1267, %v1367
      %v1468 = vadd.f32 %v1268, %v1368
      %v1469 = vadd.f32 %v1269, %v1369
      %v1470 = vadd.f32 %v1270, %v1370
      %v1471 = vadd.f32 %v1271, %v1371
      %v1472 = vadd.f32 %v1272, %v1372
      %v1473 = vadd.f32 %v1273, %v1373
      %v1474 = vadd.f32 %v1274, %v1374
      %v1475 = vadd.f32 %v1275, %v1375
      %v1476 = vadd.f32 %v1276, %v1376
      %v1477 = vadd.f32 %v1277, %v1377
      %v1478 = vadd.f32 %v1278, %v1378
      %v1479 = vadd.f32 %v1279, %v1379
      %v1480 = vadd.f32 %v1280, %v1380
      %v1481 = vadd.f32 %v1281, %v1381
      %v1482 = vadd.f32 %v1282, %v1382
      %v1483 = vadd.f32 %v1283, %v1383
      %v1484 = vadd.f32 %v1284, %v1384
      %v1485 = vadd.f32 %v1285, %v1385
      %v1486 = vadd.f32 %v1286, %v1386
      %v1487 = vadd.f32 %v1287, %v1387
      %v1488 = vadd.f32 %v1288, %v1388
      %v1489 = vadd.f32 %v1289, %v1389
      %v1490 = vadd.f32 %v1290, %v1390
      %v1491 = vadd.f32 %v1291, %v1391
      %v1492 = vadd.f32 %v1292, %v1392
      %v1493 = vadd.f32 %v1293, %v1393
      %v1494 = vadd.f32 %v1294, %v1394
      %v1495 = vadd.f32 %v1295, %v1395
      %v1496 = vadd.f32 %v1296, %v1432
      %v1497 = vadd.f32 %v1297, %v1433
      %v1498 = vadd.f32 %v1298, %v1434
      %v1499 = vadd.f32 %v1299, %v1435
      %v1500 = vadd.f32 %v1300, %v1436
      %v1501 = vadd.f32 %v1301, %v1437
      %v1502 = vadd.f32 %v1302, %v1438
      %v1503 = vadd.f32 %v1303, %v1439
      %v1504 = vadd.f32 %v1304, %v1440
      %v1505 = vadd.f32 %v1305, %v1441
      %v1506 = vadd.f32 %v1306, %v1442
      %v1507 = vadd.f32 %v1307, %v1443
      %v1508 = vadd.f32 %v1308, %v1444
      %v1509 = vadd.f32 %v1309, %v1445
      %v1510 = vadd.f32 %v1310, %v1446
      %v1511 = vadd.f32 %v1311, %v1447
      %v1512 = vadd.f32 %v1312, %v1448
      %v1513 = vadd.f32 %v1313, %v1449
      %v1514 = vadd.f32 %v1314, %v1450
      %v1515 = vadd.f32 %v1315, %v1451
      %v1516 = vadd.f32 %v1316, %v1452
      %v1517 = vadd.f32 %v1317, %v1453
      %v1518 = vadd.f32 %v1318, %v1454
      %v1519 = vadd.f32 %v1319, %v1455
      %v1520 = vadd.f32 %v1320, %v1456
      %v1521 = vadd.f32 %v1321, %v1457
      %v1522 = vadd.f32 %v1322, %v1458
      %v1523 = vadd.f32 %v1323, %v1459
      %v1524 = vadd.f32 %v1324, %v1460
      %v1525 = vadd.f32 %v1325, %v1461
      %v1526 = vadd.f32 %v1326, %v1462
      %v1527 = vadd.f32 %v1327, %v1463
      %v1528 = vld [vmem:[%s683 + $0x9] sm:$0xff]
      %v1529 = vld [vmem:[%s683 + $0x11] sm:$0xff]
      %v1530 = vld [vmem:[%s683 + $0x29] sm:$0xff]
      %v1531 = vld [vmem:[%s683 + $0x31] sm:$0xff]
      %v1532 = vld [vmem:[%s683 + $0x49] sm:$0xff]
      %v1533 = vld [vmem:[%s683 + $0x51] sm:$0xff]
      %v1534 = vld [vmem:[%s683 + $0x69] sm:$0xff]
      %v1535 = vld [vmem:[%s683 + $0x71] sm:$0xff]
      %v1536 = vld [vmem:[%s683 + $0x89] sm:$0xff]
      %v1537 = vld [vmem:[%s683 + $0x91] sm:$0xff]
      %v1538 = vld [vmem:[%s683 + $0xa9] sm:$0xff]
      %v1539 = vld [vmem:[%s683 + $0xb1] sm:$0xff]
      %v1540 = vld [vmem:[%s683 + $0xc9] sm:$0xff]
      %v1541 = vld [vmem:[%s683 + $0xd1] sm:$0xff]
      %v1542 = vld [vmem:[%s683 + $0xe9] sm:$0xff]
      %v1543 = vld [vmem:[%s683 + $0xf1] sm:$0xff]
      %v1544 = vld [vmem:[%s683 + $0x109] sm:$0xff]
      %v1545 = vld [vmem:[%s683 + $0x111] sm:$0xff]
      %v1546 = vld [vmem:[%s683 + $0x129] sm:$0xff]
      %v1547 = vld [vmem:[%s683 + $0x131] sm:$0xff]
      %v1548 = vld [vmem:[%s683 + $0x149] sm:$0xff]
      %v1549 = vld [vmem:[%s683 + $0x151] sm:$0xff]
      %v1550 = vld [vmem:[%s683 + $0x169] sm:$0xff]
      %v1551 = vld [vmem:[%s683 + $0x171] sm:$0xff]
      %v1552 = vld [vmem:[%s683 + $0x189] sm:$0xff]
      %v1553 = vld [vmem:[%s683 + $0x191] sm:$0xff]
      %v1554 = vld [vmem:[%s683 + $0x1a9] sm:$0xff]
      %v1555 = vld [vmem:[%s683 + $0x1b1] sm:$0xff]
      %v1556 = vld [vmem:[%s683 + $0x1c9] sm:$0xff]
      %v1557 = vld [vmem:[%s683 + $0x1d1] sm:$0xff]
      %v1558 = vld [vmem:[%s683 + $0x1e9] sm:$0xff]
      %v1559 = vld [vmem:[%s683 + $0x1f1] sm:$0xff]
      %v1560 = vlaneseq
      %v1561 = vshrl.u32 %v1560, 7
      %v1562 = vsub.s32 2, %v1561
      %v1563 = vrot.slane %v717, %v1562
      %v1564 = vmul.f32 %v1528, %v1563
      %v1565 = vmul.f32 %v1529, %v1563
      %v1566 = vmul.f32 %v1530, %v1563
      %v1567 = vmul.f32 %v1531, %v1563
      %v1568 = vmul.f32 %v1532, %v1563
      %v1569 = vmul.f32 %v1533, %v1563
      %v1570 = vmul.f32 %v1534, %v1563
      %v1571 = vmul.f32 %v1535, %v1563
      %v1572 = vmul.f32 %v1536, %v1563
      %v1573 = vmul.f32 %v1537, %v1563
      %v1574 = vmul.f32 %v1538, %v1563
      %v1575 = vmul.f32 %v1539, %v1563
      %v1576 = vmul.f32 %v1540, %v1563
      %v1577 = vmul.f32 %v1541, %v1563
      %v1578 = vmul.f32 %v1542, %v1563
      %v1579 = vmul.f32 %v1543, %v1563
      %v1580 = vmul.f32 %v1544, %v1563
      %v1581 = vmul.f32 %v1545, %v1563
      %v1582 = vmul.f32 %v1546, %v1563
      %v1583 = vmul.f32 %v1547, %v1563
      %v1584 = vmul.f32 %v1548, %v1563
      %v1585 = vmul.f32 %v1549, %v1563
      %v1586 = vmul.f32 %v1550, %v1563
      %v1587 = vmul.f32 %v1551, %v1563
      %v1588 = vmul.f32 %v1552, %v1563
      %v1589 = vmul.f32 %v1553, %v1563
      %v1590 = vmul.f32 %v1554, %v1563
      %v1591 = vmul.f32 %v1555, %v1563
      %v1592 = vmul.f32 %v1556, %v1563
      %v1593 = vmul.f32 %v1557, %v1563
      %v1594 = vmul.f32 %v1558, %v1563
      %v1595 = vmul.f32 %v1559, %v1563
      %v1596 = vld [vmem:[%s683 + $0xa] sm:$0xff]
      %v1597 = vld [vmem:[%s683 + $0x12] sm:$0xff]
      %v1598 = vld [vmem:[%s683 + $0x2a] sm:$0xff]
      %v1599 = vld [vmem:[%s683 + $0x32] sm:$0xff]
      %v1600 = vld [vmem:[%s683 + $0x4a] sm:$0xff]
      %v1601 = vld [vmem:[%s683 + $0x52] sm:$0xff]
      %v1602 = vld [vmem:[%s683 + $0x6a] sm:$0xff]
      %v1603 = vld [vmem:[%s683 + $0x72] sm:$0xff]
      %v1604 = vld [vmem:[%s683 + $0x8a] sm:$0xff]
      %v1605 = vld [vmem:[%s683 + $0x92] sm:$0xff]
      %v1606 = vld [vmem:[%s683 + $0xaa] sm:$0xff]
      %v1607 = vld [vmem:[%s683 + $0xb2] sm:$0xff]
      %v1608 = vld [vmem:[%s683 + $0xca] sm:$0xff]
      %v1609 = vld [vmem:[%s683 + $0xd2] sm:$0xff]
      %v1610 = vld [vmem:[%s683 + $0xea] sm:$0xff]
      %v1611 = vld [vmem:[%s683 + $0xf2] sm:$0xff]
      %v1612 = vld [vmem:[%s683 + $0x10a] sm:$0xff]
      %v1613 = vld [vmem:[%s683 + $0x112] sm:$0xff]
      %v1614 = vld [vmem:[%s683 + $0x12a] sm:$0xff]
      %v1615 = vld [vmem:[%s683 + $0x132] sm:$0xff]
      %v1616 = vld [vmem:[%s683 + $0x14a] sm:$0xff]
      %v1617 = vld [vmem:[%s683 + $0x152] sm:$0xff]
      %v1618 = vld [vmem:[%s683 + $0x16a] sm:$0xff]
      %v1619 = vld [vmem:[%s683 + $0x172] sm:$0xff]
      %v1620 = vld [vmem:[%s683 + $0x18a] sm:$0xff]
      %v1621 = vld [vmem:[%s683 + $0x192] sm:$0xff]
      %v1622 = vld [vmem:[%s683 + $0x1aa] sm:$0xff]
      %v1623 = vld [vmem:[%s683 + $0x1b2] sm:$0xff]
      %v1624 = vld [vmem:[%s683 + $0x1ca] sm:$0xff]
      %v1625 = vld [vmem:[%s683 + $0x1d2] sm:$0xff]
      %v1626 = vld [vmem:[%s683 + $0x1ea] sm:$0xff]
      %v1627 = vld [vmem:[%s683 + $0x1f2] sm:$0xff]
      %v1628 = vlaneseq
      %v1629 = vshrl.u32 %v1628, 7
      %v1630 = vsub.s32 2, %v1629
      %v1631 = vrot.slane %v720, %v1630
      %v1632 = vmul.f32 %v1596, %v1631
      %v1633 = vmul.f32 %v1597, %v1631
      %v1634 = vmul.f32 %v1598, %v1631
      %v1635 = vmul.f32 %v1599, %v1631
      %v1636 = vmul.f32 %v1600, %v1631
      %v1637 = vmul.f32 %v1601, %v1631
      %v1638 = vmul.f32 %v1602, %v1631
      %v1639 = vmul.f32 %v1603, %v1631
      %v1640 = vmul.f32 %v1604, %v1631
      %v1641 = vmul.f32 %v1605, %v1631
      %v1642 = vmul.f32 %v1606, %v1631
      %v1643 = vmul.f32 %v1607, %v1631
      %v1644 = vmul.f32 %v1608, %v1631
      %v1645 = vmul.f32 %v1609, %v1631
      %v1646 = vmul.f32 %v1610, %v1631
      %v1647 = vmul.f32 %v1611, %v1631
      %v1648 = vmul.f32 %v1612, %v1631
      %v1649 = vmul.f32 %v1613, %v1631
      %v1650 = vmul.f32 %v1614, %v1631
      %v1651 = vmul.f32 %v1615, %v1631
      %v1652 = vmul.f32 %v1616, %v1631
      %v1653 = vmul.f32 %v1617, %v1631
      %v1654 = vmul.f32 %v1618, %v1631
      %v1655 = vmul.f32 %v1619, %v1631
      %v1656 = vmul.f32 %v1620, %v1631
      %v1657 = vmul.f32 %v1621, %v1631
      %v1658 = vmul.f32 %v1622, %v1631
      %v1659 = vmul.f32 %v1623, %v1631
      %v1660 = vmul.f32 %v1624, %v1631
      %v1661 = vmul.f32 %v1625, %v1631
      %v1662 = vmul.f32 %v1626, %v1631
      %v1663 = vmul.f32 %v1627, %v1631
      %v1664 = vadd.f32 %v1464, %v1564
      %v1665 = vadd.f32 %v1465, %v1565
      %v1666 = vadd.f32 %v1466, %v1566
      %v1667 = vadd.f32 %v1467, %v1567
      %v1668 = vadd.f32 %v1468, %v1568
      %v1669 = vadd.f32 %v1469, %v1569
      %v1670 = vadd.f32 %v1470, %v1570
      %v1671 = vadd.f32 %v1471, %v1571
      %v1672 = vadd.f32 %v1472, %v1572
      %v1673 = vadd.f32 %v1473, %v1573
      %v1674 = vadd.f32 %v1474, %v1574
      %v1675 = vadd.f32 %v1475, %v1575
      %v1676 = vadd.f32 %v1476, %v1576
      %v1677 = vadd.f32 %v1477, %v1577
      %v1678 = vadd.f32 %v1478, %v1578
      %v1679 = vadd.f32 %v1479, %v1579
      %v1680 = vadd.f32 %v1480, %v1580
      %v1681 = vadd.f32 %v1481, %v1581
      %v1682 = vadd.f32 %v1482, %v1582
      %v1683 = vadd.f32 %v1483, %v1583
      %v1684 = vadd.f32 %v1484, %v1584
      %v1685 = vadd.f32 %v1485, %v1585
      %v1686 = vadd.f32 %v1486, %v1586
      %v1687 = vadd.f32 %v1487, %v1587
      %v1688 = vadd.f32 %v1488, %v1588
      %v1689 = vadd.f32 %v1489, %v1589
      %v1690 = vadd.f32 %v1490, %v1590
      %v1691 = vadd.f32 %v1491, %v1591
      %v1692 = vadd.f32 %v1492, %v1592
      %v1693 = vadd.f32 %v1493, %v1593
      %v1694 = vadd.f32 %v1494, %v1594
      %v1695 = vadd.f32 %v1495, %v1595
      %v1696 = vadd.f32 %v1496, %v1632
      %v1697 = vadd.f32 %v1497, %v1633
      %v1698 = vadd.f32 %v1498, %v1634
      %v1699 = vadd.f32 %v1499, %v1635
      %v1700 = vadd.f32 %v1500, %v1636
      %v1701 = vadd.f32 %v1501, %v1637
      %v1702 = vadd.f32 %v1502, %v1638
      %v1703 = vadd.f32 %v1503, %v1639
      %v1704 = vadd.f32 %v1504, %v1640
      %v1705 = vadd.f32 %v1505, %v1641
      %v1706 = vadd.f32 %v1506, %v1642
      %v1707 = vadd.f32 %v1507, %v1643
      %v1708 = vadd.f32 %v1508, %v1644
      %v1709 = vadd.f32 %v1509, %v1645
      %v1710 = vadd.f32 %v1510, %v1646
      %v1711 = vadd.f32 %v1511, %v1647
      %v1712 = vadd.f32 %v1512, %v1648
      %v1713 = vadd.f32 %v1513, %v1649
      %v1714 = vadd.f32 %v1514, %v1650
      %v1715 = vadd.f32 %v1515, %v1651
      %v1716 = vadd.f32 %v1516, %v1652
      %v1717 = vadd.f32 %v1517, %v1653
      %v1718 = vadd.f32 %v1518, %v1654
      %v1719 = vadd.f32 %v1519, %v1655
      %v1720 = vadd.f32 %v1520, %v1656
      %v1721 = vadd.f32 %v1521, %v1657
      %v1722 = vadd.f32 %v1522, %v1658
      %v1723 = vadd.f32 %v1523, %v1659
      %v1724 = vadd.f32 %v1524, %v1660
      %v1725 = vadd.f32 %v1525, %v1661
      %v1726 = vadd.f32 %v1526, %v1662
      %v1727 = vadd.f32 %v1527, %v1663
      %s1728 = scalar_lea.vmem [#allocation2], 96
      %v1729 = vld [vmem:[%s1728 + $0x7] sm:$0xff]
      %v1730 = vld [vmem:[%s1728 + $0xf] sm:$0xff]
      %v1731 = vld [vmem:[%s1728 + $0x27] sm:$0xff]
      %v1732 = vld [vmem:[%s1728 + $0x2f] sm:$0xff]
      %v1733 = vld [vmem:[%s1728 + $0x47] sm:$0xff]
      %v1734 = vld [vmem:[%s1728 + $0x4f] sm:$0xff]
      %v1735 = vld [vmem:[%s1728 + $0x67] sm:$0xff]
      %v1736 = vld [vmem:[%s1728 + $0x6f] sm:$0xff]
      %v1737 = vld [vmem:[%s1728 + $0x87] sm:$0xff]
      %v1738 = vld [vmem:[%s1728 + $0x8f] sm:$0xff]
      %v1739 = vld [vmem:[%s1728 + $0xa7] sm:$0xff]
      %v1740 = vld [vmem:[%s1728 + $0xaf] sm:$0xff]
      %v1741 = vld [vmem:[%s1728 + $0xc7] sm:$0xff]
      %v1742 = vld [vmem:[%s1728 + $0xcf] sm:$0xff]
      %v1743 = vld [vmem:[%s1728 + $0xe7] sm:$0xff]
      %v1744 = vld [vmem:[%s1728 + $0xef] sm:$0xff]
      %v1745 = vld [vmem:[%s1728 + $0x107] sm:$0xff]
      %v1746 = vld [vmem:[%s1728 + $0x10f] sm:$0xff]
      %v1747 = vld [vmem:[%s1728 + $0x127] sm:$0xff]
      %v1748 = vld [vmem:[%s1728 + $0x12f] sm:$0xff]
      %v1749 = vld [vmem:[%s1728 + $0x147] sm:$0xff]
      %v1750 = vld [vmem:[%s1728 + $0x14f] sm:$0xff]
      %v1751 = vld [vmem:[%s1728 + $0x167] sm:$0xff]
      %v1752 = vld [vmem:[%s1728 + $0x16f] sm:$0xff]
      %v1753 = vld [vmem:[%s1728 + $0x187] sm:$0xff]
      %v1754 = vld [vmem:[%s1728 + $0x18f] sm:$0xff]
      %v1755 = vld [vmem:[%s1728 + $0x1a7] sm:$0xff]
      %v1756 = vld [vmem:[%s1728 + $0x1af] sm:$0xff]
      %v1757 = vld [vmem:[%s1728 + $0x1c7] sm:$0xff]
      %v1758 = vld [vmem:[%s1728 + $0x1cf] sm:$0xff]
      %v1759 = vld [vmem:[%s1728 + $0x1e7] sm:$0xff]
      %v1760 = vld [vmem:[%s1728 + $0x1ef] sm:$0xff]
      %v1761 = vlaneseq
      %v1762 = vshrl.u32 %v1761, 7
      %v1763 = vsub.s32 0, %v1762
      %v1764 = vrot.slane %v718, %v1763
      %v1765 = vmul.f32 %v1729, %v1764
      %v1766 = vmul.f32 %v1730, %v1764
      %v1767 = vmul.f32 %v1731, %v1764
      %v1768 = vmul.f32 %v1732, %v1764
      %v1769 = vmul.f32 %v1733, %v1764
      %v1770 = vmul.f32 %v1734, %v1764
      %v1771 = vmul.f32 %v1735, %v1764
      %v1772 = vmul.f32 %v1736, %v1764
      %v1773 = vmul.f32 %v1737, %v1764
      %v1774 = vmul.f32 %v1738, %v1764
      %v1775 = vmul.f32 %v1739, %v1764
      %v1776 = vmul.f32 %v1740, %v1764
      %v1777 = vmul.f32 %v1741, %v1764
      %v1778 = vmul.f32 %v1742, %v1764
      %v1779 = vmul.f32 %v1743, %v1764
      %v1780 = vmul.f32 %v1744, %v1764
      %v1781 = vmul.f32 %v1745, %v1764
      %v1782 = vmul.f32 %v1746, %v1764
      %v1783 = vmul.f32 %v1747, %v1764
      %v1784 = vmul.f32 %v1748, %v1764
      %v1785 = vmul.f32 %v1749, %v1764
      %v1786 = vmul.f32 %v1750, %v1764
      %v1787 = vmul.f32 %v1751, %v1764
      %v1788 = vmul.f32 %v1752, %v1764
      %v1789 = vmul.f32 %v1753, %v1764
      %v1790 = vmul.f32 %v1754, %v1764
      %v1791 = vmul.f32 %v1755, %v1764
      %v1792 = vmul.f32 %v1756, %v1764
      %v1793 = vmul.f32 %v1757, %v1764
      %v1794 = vmul.f32 %v1758, %v1764
      %v1795 = vmul.f32 %v1759, %v1764
      %v1796 = vmul.f32 %v1760, %v1764
      %s1797 = scalar_lea.vmem [#allocation2], 128
      %v1798 = vld [vmem:[%s1797 + $0x6] sm:$0xff]
      %v1799 = vld [vmem:[%s1797 + $0xe] sm:$0xff]
      %v1800 = vld [vmem:[%s1797 + $0x26] sm:$0xff]
      %v1801 = vld [vmem:[%s1797 + $0x2e] sm:$0xff]
      %v1802 = vld [vmem:[%s1797 + $0x46] sm:$0xff]
      %v1803 = vld [vmem:[%s1797 + $0x4e] sm:$0xff]
      %v1804 = vld [vmem:[%s1797 + $0x66] sm:$0xff]
      %v1805 = vld [vmem:[%s1797 + $0x6e] sm:$0xff]
      %v1806 = vld [vmem:[%s1797 + $0x86] sm:$0xff]
      %v1807 = vld [vmem:[%s1797 + $0x8e] sm:$0xff]
      %v1808 = vld [vmem:[%s1797 + $0xa6] sm:$0xff]
      %v1809 = vld [vmem:[%s1797 + $0xae] sm:$0xff]
      %v1810 = vld [vmem:[%s1797 + $0xc6] sm:$0xff]
      %v1811 = vld [vmem:[%s1797 + $0xce] sm:$0xff]
      %v1812 = vld [vmem:[%s1797 + $0xe6] sm:$0xff]
      %v1813 = vld [vmem:[%s1797 + $0xee] sm:$0xff]
      %v1814 = vld [vmem:[%s1797 + $0x106] sm:$0xff]
      %v1815 = vld [vmem:[%s1797 + $0x10e] sm:$0xff]
      %v1816 = vld [vmem:[%s1797 + $0x126] sm:$0xff]
      %v1817 = vld [vmem:[%s1797 + $0x12e] sm:$0xff]
      %v1818 = vld [vmem:[%s1797 + $0x146] sm:$0xff]
      %v1819 = vld [vmem:[%s1797 + $0x14e] sm:$0xff]
      %v1820 = vld [vmem:[%s1797 + $0x166] sm:$0xff]
      %v1821 = vld [vmem:[%s1797 + $0x16e] sm:$0xff]
      %v1822 = vld [vmem:[%s1797 + $0x186] sm:$0xff]
      %v1823 = vld [vmem:[%s1797 + $0x18e] sm:$0xff]
      %v1824 = vld [vmem:[%s1797 + $0x1a6] sm:$0xff]
      %v1825 = vld [vmem:[%s1797 + $0x1ae] sm:$0xff]
      %v1826 = vld [vmem:[%s1797 + $0x1c6] sm:$0xff]
      %v1827 = vld [vmem:[%s1797 + $0x1ce] sm:$0xff]
      %v1828 = vld [vmem:[%s1797 + $0x1e6] sm:$0xff]
      %v1829 = vld [vmem:[%s1797 + $0x1ee] sm:$0xff]
      %v1830 = vlaneseq
      %v1831 = vshrl.u32 %v1830, 7
      %v1832 = vsub.s32 0, %v1831
      %v1833 = vrot.slane %v721, %v1832
      %v1834 = vmul.f32 %v1798, %v1833
      %v1835 = vmul.f32 %v1799, %v1833
      %v1836 = vmul.f32 %v1800, %v1833
      %v1837 = vmul.f32 %v1801, %v1833
      %v1838 = vmul.f32 %v1802, %v1833
      %v1839 = vmul.f32 %v1803, %v1833
      %v1840 = vmul.f32 %v1804, %v1833
      %v1841 = vmul.f32 %v1805, %v1833
      %v1842 = vmul.f32 %v1806, %v1833
      %v1843 = vmul.f32 %v1807, %v1833
      %v1844 = vmul.f32 %v1808, %v1833
      %v1845 = vmul.f32 %v1809, %v1833
      %v1846 = vmul.f32 %v1810, %v1833
      %v1847 = vmul.f32 %v1811, %v1833
      %v1848 = vmul.f32 %v1812, %v1833
      %v1849 = vmul.f32 %v1813, %v1833
      %v1850 = vmul.f32 %v1814, %v1833
      %v1851 = vmul.f32 %v1815, %v1833
      %v1852 = vmul.f32 %v1816, %v1833
      %v1853 = vmul.f32 %v1817, %v1833
      %v1854 = vmul.f32 %v1818, %v1833
      %v1855 = vmul.f32 %v1819, %v1833
      %v1856 = vmul.f32 %v1820, %v1833
      %v1857 = vmul.f32 %v1821, %v1833
      %v1858 = vmul.f32 %v1822, %v1833
      %v1859 = vmul.f32 %v1823, %v1833
      %v1860 = vmul.f32 %v1824, %v1833
      %v1861 = vmul.f32 %v1825, %v1833
      %v1862 = vmul.f32 %v1826, %v1833
      %v1863 = vmul.f32 %v1827, %v1833
      %v1864 = vmul.f32 %v1828, %v1833
      %v1865 = vmul.f32 %v1829, %v1833
      %v1866 = vadd.f32 %v1664, %v1765
      %v1867 = vadd.f32 %v1665, %v1766
      %v1868 = vadd.f32 %v1666, %v1767
      %v1869 = vadd.f32 %v1667, %v1768
      %v1870 = vadd.f32 %v1668, %v1769
      %v1871 = vadd.f32 %v1669, %v1770
      %v1872 = vadd.f32 %v1670, %v1771
      %v1873 = vadd.f32 %v1671, %v1772
      %v1874 = vadd.f32 %v1672, %v1773
      %v1875 = vadd.f32 %v1673, %v1774
      %v1876 = vadd.f32 %v1674, %v1775
      %v1877 = vadd.f32 %v1675, %v1776
      %v1878 = vadd.f32 %v1676, %v1777
      %v1879 = vadd.f32 %v1677, %v1778
      %v1880 = vadd.f32 %v1678, %v1779
      %v1881 = vadd.f32 %v1679, %v1780
      %v1882 = vadd.f32 %v1680, %v1781
      %v1883 = vadd.f32 %v1681, %v1782
      %v1884 = vadd.f32 %v1682, %v1783
      %v1885 = vadd.f32 %v1683, %v1784
      %v1886 = vadd.f32 %v1684, %v1785
      %v1887 = vadd.f32 %v1685, %v1786
      %v1888 = vadd.f32 %v1686, %v1787
      %v1889 = vadd.f32 %v1687, %v1788
      %v1890 = vadd.f32 %v1688, %v1789
      %v1891 = vadd.f32 %v1689, %v1790
      %v1892 = vadd.f32 %v1690, %v1791
      %v1893 = vadd.f32 %v1691, %v1792
      %v1894 = vadd.f32 %v1692, %v1793
      %v1895 = vadd.f32 %v1693, %v1794
      %v1896 = vadd.f32 %v1694, %v1795
      %v1897 = vadd.f32 %v1695, %v1796
      %v1898 = vadd.f32 %v1696, %v1834
      %v1899 = vadd.f32 %v1697, %v1835
      %v1900 = vadd.f32 %v1698, %v1836
      %v1901 = vadd.f32 %v1699, %v1837
      %v1902 = vadd.f32 %v1700, %v1838
      %v1903 = vadd.f32 %v1701, %v1839
      %v1904 = vadd.f32 %v1702, %v1840
      %v1905 = vadd.f32 %v1703, %v1841
      %v1906 = vadd.f32 %v1704, %v1842
      %v1907 = vadd.f32 %v1705, %v1843
      %v1908 = vadd.f32 %v1706, %v1844
      %v1909 = vadd.f32 %v1707, %v1845
      %v1910 = vadd.f32 %v1708, %v1846
      %v1911 = vadd.f32 %v1709, %v1847
      %v1912 = vadd.f32 %v1710, %v1848
      %v1913 = vadd.f32 %v1711, %v1849
      %v1914 = vadd.f32 %v1712, %v1850
      %v1915 = vadd.f32 %v1713, %v1851
      %v1916 = vadd.f32 %v1714, %v1852
      %v1917 = vadd.f32 %v1715, %v1853
      %v1918 = vadd.f32 %v1716, %v1854
      %v1919 = vadd.f32 %v1717, %v1855
      %v1920 = vadd.f32 %v1718, %v1856
      %v1921 = vadd.f32 %v1719, %v1857
      %v1922 = vadd.f32 %v1720, %v1858
      %v1923 = vadd.f32 %v1721, %v1859
      %v1924 = vadd.f32 %v1722, %v1860
      %v1925 = vadd.f32 %v1723, %v1861
      %v1926 = vadd.f32 %v1724, %v1862
      %v1927 = vadd.f32 %v1725, %v1863
      %v1928 = vadd.f32 %v1726, %v1864
      %v1929 = vadd.f32 %v1727, %v1865
      %v1930 = vld [vmem:[%s1728 + $0x8] sm:$0xff]
      %v1931 = vld [vmem:[%s1728 + $0x10] sm:$0xff]
      %v1932 = vld [vmem:[%s1728 + $0x28] sm:$0xff]
      %v1933 = vld [vmem:[%s1728 + $0x30] sm:$0xff]
      %v1934 = vld [vmem:[%s1728 + $0x48] sm:$0xff]
      %v1935 = vld [vmem:[%s1728 + $0x50] sm:$0xff]
      %v1936 = vld [vmem:[%s1728 + $0x68] sm:$0xff]
      %v1937 = vld [vmem:[%s1728 + $0x70] sm:$0xff]
      %v1938 = vld [vmem:[%s1728 + $0x88] sm:$0xff]
      %v1939 = vld [vmem:[%s1728 + $0x90] sm:$0xff]
      %v1940 = vld [vmem:[%s1728 + $0xa8] sm:$0xff]
      %v1941 = vld [vmem:[%s1728 + $0xb0] sm:$0xff]
      %v1942 = vld [vmem:[%s1728 + $0xc8] sm:$0xff]
      %v1943 = vld [vmem:[%s1728 + $0xd0] sm:$0xff]
      %v1944 = vld [vmem:[%s1728 + $0xe8] sm:$0xff]
      %v1945 = vld [vmem:[%s1728 + $0xf0] sm:$0xff]
      %v1946 = vld [vmem:[%s1728 + $0x108] sm:$0xff]
      %v1947 = vld [vmem:[%s1728 + $0x110] sm:$0xff]
      %v1948 = vld [vmem:[%s1728 + $0x128] sm:$0xff]
      %v1949 = vld [vmem:[%s1728 + $0x130] sm:$0xff]
      %v1950 = vld [vmem:[%s1728 + $0x148] sm:$0xff]
      %v1951 = vld [vmem:[%s1728 + $0x150] sm:$0xff]
      %v1952 = vld [vmem:[%s1728 + $0x168] sm:$0xff]
      %v1953 = vld [vmem:[%s1728 + $0x170] sm:$0xff]
      %v1954 = vld [vmem:[%s1728 + $0x188] sm:$0xff]
      %v1955 = vld [vmem:[%s1728 + $0x190] sm:$0xff]
      %v1956 = vld [vmem:[%s1728 + $0x1a8] sm:$0xff]
      %v1957 = vld [vmem:[%s1728 + $0x1b0] sm:$0xff]
      %v1958 = vld [vmem:[%s1728 + $0x1c8] sm:$0xff]
      %v1959 = vld [vmem:[%s1728 + $0x1d0] sm:$0xff]
      %v1960 = vld [vmem:[%s1728 + $0x1e8] sm:$0xff]
      %v1961 = vld [vmem:[%s1728 + $0x1f0] sm:$0xff]
      %v1962 = vlaneseq
      %v1963 = vshrl.u32 %v1962, 7
      %v1964 = vsub.s32 1, %v1963
      %v1965 = vrot.slane %v718, %v1964
      %v1966 = vmul.f32 %v1930, %v1965
      %v1967 = vmul.f32 %v1931, %v1965
      %v1968 = vmul.f32 %v1932, %v1965
      %v1969 = vmul.f32 %v1933, %v1965
      %v1970 = vmul.f32 %v1934, %v1965
      %v1971 = vmul.f32 %v1935, %v1965
      %v1972 = vmul.f32 %v1936, %v1965
      %v1973 = vmul.f32 %v1937, %v1965
      %v1974 = vmul.f32 %v1938, %v1965
      %v1975 = vmul.f32 %v1939, %v1965
      %v1976 = vmul.f32 %v1940, %v1965
      %v1977 = vmul.f32 %v1941, %v1965
      %v1978 = vmul.f32 %v1942, %v1965
      %v1979 = vmul.f32 %v1943, %v1965
      %v1980 = vmul.f32 %v1944, %v1965
      %v1981 = vmul.f32 %v1945, %v1965
      %v1982 = vmul.f32 %v1946, %v1965
      %v1983 = vmul.f32 %v1947, %v1965
      %v1984 = vmul.f32 %v1948, %v1965
      %v1985 = vmul.f32 %v1949, %v1965
      %v1986 = vmul.f32 %v1950, %v1965
      %v1987 = vmul.f32 %v1951, %v1965
      %v1988 = vmul.f32 %v1952, %v1965
      %v1989 = vmul.f32 %v1953, %v1965
      %v1990 = vmul.f32 %v1954, %v1965
      %v1991 = vmul.f32 %v1955, %v1965
      %v1992 = vmul.f32 %v1956, %v1965
      %v1993 = vmul.f32 %v1957, %v1965
      %v1994 = vmul.f32 %v1958, %v1965
      %v1995 = vmul.f32 %v1959, %v1965
      %v1996 = vmul.f32 %v1960, %v1965
      %v1997 = vmul.f32 %v1961, %v1965
      %v1998 = vld [vmem:[%s1797 + $0x8] sm:$0xff]
      %v1999 = vld [vmem:[%s1797 + $0x10] sm:$0xff]
      %v2000 = vld [vmem:[%s1797 + $0x28] sm:$0xff]
      %v2001 = vld [vmem:[%s1797 + $0x30] sm:$0xff]
      %v2002 = vld [vmem:[%s1797 + $0x48] sm:$0xff]
      %v2003 = vld [vmem:[%s1797 + $0x50] sm:$0xff]
      %v2004 = vld [vmem:[%s1797 + $0x68] sm:$0xff]
      %v2005 = vld [vmem:[%s1797 + $0x70] sm:$0xff]
      %v2006 = vld [vmem:[%s1797 + $0x88] sm:$0xff]
      %v2007 = vld [vmem:[%s1797 + $0x90] sm:$0xff]
      %v2008 = vld [vmem:[%s1797 + $0xa8] sm:$0xff]
      %v2009 = vld [vmem:[%s1797 + $0xb0] sm:$0xff]
      %v2010 = vld [vmem:[%s1797 + $0xc8] sm:$0xff]
      %v2011 = vld [vmem:[%s1797 + $0xd0] sm:$0xff]
      %v2012 = vld [vmem:[%s1797 + $0xe8] sm:$0xff]
      %v2013 = vld [vmem:[%s1797 + $0xf0] sm:$0xff]
      %v2014 = vld [vmem:[%s1797 + $0x108] sm:$0xff]
      %v2015 = vld [vmem:[%s1797 + $0x110] sm:$0xff]
      %v2016 = vld [vmem:[%s1797 + $0x128] sm:$0xff]
      %v2017 = vld [vmem:[%s1797 + $0x130] sm:$0xff]
      %v2018 = vld [vmem:[%s1797 + $0x148] sm:$0xff]
      %v2019 = vld [vmem:[%s1797 + $0x150] sm:$0xff]
      %v2020 = vld [vmem:[%s1797 + $0x168] sm:$0xff]
      %v2021 = vld [vmem:[%s1797 + $0x170] sm:$0xff]
      %v2022 = vld [vmem:[%s1797 + $0x188] sm:$0xff]
      %v2023 = vld [vmem:[%s1797 + $0x190] sm:$0xff]
      %v2024 = vld [vmem:[%s1797 + $0x1a8] sm:$0xff]
      %v2025 = vld [vmem:[%s1797 + $0x1b0] sm:$0xff]
      %v2026 = vld [vmem:[%s1797 + $0x1c8] sm:$0xff]
      %v2027 = vld [vmem:[%s1797 + $0x1d0] sm:$0xff]
      %v2028 = vld [vmem:[%s1797 + $0x1e8] sm:$0xff]
      %v2029 = vld [vmem:[%s1797 + $0x1f0] sm:$0xff]
      %v2030 = vlaneseq
      %v2031 = vshrl.u32 %v2030, 7
      %v2032 = vsub.s32 1, %v2031
      %v2033 = vrot.slane %v721, %v2032
      %v2034 = vmul.f32 %v1998, %v2033
      %v2035 = vmul.f32 %v1999, %v2033
      %v2036 = vmul.f32 %v2000, %v2033
      %v2037 = vmul.f32 %v2001, %v2033
      %v2038 = vmul.f32 %v2002, %v2033
      %v2039 = vmul.f32 %v2003, %v2033
      %v2040 = vmul.f32 %v2004, %v2033
      %v2041 = vmul.f32 %v2005, %v2033
      %v2042 = vmul.f32 %v2006, %v2033
      %v2043 = vmul.f32 %v2007, %v2033
      %v2044 = vmul.f32 %v2008, %v2033
      %v2045 = vmul.f32 %v2009, %v2033
      %v2046 = vmul.f32 %v2010, %v2033
      %v2047 = vmul.f32 %v2011, %v2033
      %v2048 = vmul.f32 %v2012, %v2033
      %v2049 = vmul.f32 %v2013, %v2033
      %v2050 = vmul.f32 %v2014, %v2033
      %v2051 = vmul.f32 %v2015, %v2033
      %v2052 = vmul.f32 %v2016, %v2033
      %v2053 = vmul.f32 %v2017, %v2033
      %v2054 = vmul.f32 %v2018, %v2033
      %v2055 = vmul.f32 %v2019, %v2033
      %v2056 = vmul.f32 %v2020, %v2033
      %v2057 = vmul.f32 %v2021, %v2033
      %v2058 = vmul.f32 %v2022, %v2033
      %v2059 = vmul.f32 %v2023, %v2033
      %v2060 = vmul.f32 %v2024, %v2033
      %v2061 = vmul.f32 %v2025, %v2033
      %v2062 = vmul.f32 %v2026, %v2033
      %v2063 = vmul.f32 %v2027, %v2033
      %v2064 = vmul.f32 %v2028, %v2033
      %v2065 = vmul.f32 %v2029, %v2033
      %v2066 = vadd.f32 %v1866, %v1966
      %v2067 = vadd.f32 %v1867, %v1967
      %v2068 = vadd.f32 %v1868, %v1968
      %v2069 = vadd.f32 %v1869, %v1969
      %v2070 = vadd.f32 %v1870, %v1970
      %v2071 = vadd.f32 %v1871, %v1971
      %v2072 = vadd.f32 %v1872, %v1972
      %v2073 = vadd.f32 %v1873, %v1973
      %v2074 = vadd.f32 %v1874, %v1974
      %v2075 = vadd.f32 %v1875, %v1975
      %v2076 = vadd.f32 %v1876, %v1976
      %v2077 = vadd.f32 %v1877, %v1977
      %v2078 = vadd.f32 %v1878, %v1978
      %v2079 = vadd.f32 %v1879, %v1979
      %v2080 = vadd.f32 %v1880, %v1980
      %v2081 = vadd.f32 %v1881, %v1981
      %v2082 = vadd.f32 %v1882, %v1982
      %v2083 = vadd.f32 %v1883, %v1983
      %v2084 = vadd.f32 %v1884, %v1984
      %v2085 = vadd.f32 %v1885, %v1985
      %v2086 = vadd.f32 %v1886, %v1986
      %v2087 = vadd.f32 %v1887, %v1987
      %v2088 = vadd.f32 %v1888, %v1988
      %v2089 = vadd.f32 %v1889, %v1989
      %v2090 = vadd.f32 %v1890, %v1990
      %v2091 = vadd.f32 %v1891, %v1991
      %v2092 = vadd.f32 %v1892, %v1992
      %v2093 = vadd.f32 %v1893, %v1993
      %v2094 = vadd.f32 %v1894, %v1994
      %v2095 = vadd.f32 %v1895, %v1995
      %v2096 = vadd.f32 %v1896, %v1996
      %v2097 = vadd.f32 %v1897, %v1997
      %v2098 = vadd.f32 %v1898, %v2034
      %v2099 = vadd.f32 %v1899, %v2035
      %v2100 = vadd.f32 %v1900, %v2036
      %v2101 = vadd.f32 %v1901, %v2037
      %v2102 = vadd.f32 %v1902, %v2038
      %v2103 = vadd.f32 %v1903, %v2039
      %v2104 = vadd.f32 %v1904, %v2040
      %v2105 = vadd.f32 %v1905, %v2041
      %v2106 = vadd.f32 %v1906, %v2042
      %v2107 = vadd.f32 %v1907, %v2043
      %v2108 = vadd.f32 %v1908, %v2044
      %v2109 = vadd.f32 %v1909, %v2045
      %v2110 = vadd.f32 %v1910, %v2046
      %v2111 = vadd.f32 %v1911, %v2047
      %v2112 = vadd.f32 %v1912, %v2048
      %v2113 = vadd.f32 %v1913, %v2049
      %v2114 = vadd.f32 %v1914, %v2050
      %v2115 = vadd.f32 %v1915, %v2051
      %v2116 = vadd.f32 %v1916, %v2052
      %v2117 = vadd.f32 %v1917, %v2053
      %v2118 = vadd.f32 %v1918, %v2054
      %v2119 = vadd.f32 %v1919, %v2055
      %v2120 = vadd.f32 %v1920, %v2056
      %v2121 = vadd.f32 %v1921, %v2057
      %v2122 = vadd.f32 %v1922, %v2058
      %v2123 = vadd.f32 %v1923, %v2059
      %v2124 = vadd.f32 %v1924, %v2060
      %v2125 = vadd.f32 %v1925, %v2061
      %v2126 = vadd.f32 %v1926, %v2062
      %v2127 = vadd.f32 %v1927, %v2063
      %v2128 = vadd.f32 %v1928, %v2064
      %v2129 = vadd.f32 %v1929, %v2065
      %v2130 = vld [vmem:[%s1728 + $0x9] sm:$0xff]
      %v2131 = vld [vmem:[%s1728 + $0x11] sm:$0xff]
      %v2132 = vld [vmem:[%s1728 + $0x29] sm:$0xff]
      %v2133 = vld [vmem:[%s1728 + $0x31] sm:$0xff]
      %v2134 = vld [vmem:[%s1728 + $0x49] sm:$0xff]
      %v2135 = vld [vmem:[%s1728 + $0x51] sm:$0xff]
      %v2136 = vld [vmem:[%s1728 + $0x69] sm:$0xff]
      %v2137 = vld [vmem:[%s1728 + $0x71] sm:$0xff]
      %v2138 = vld [vmem:[%s1728 + $0x89] sm:$0xff]
      %v2139 = vld [vmem:[%s1728 + $0x91] sm:$0xff]
      %v2140 = vld [vmem:[%s1728 + $0xa9] sm:$0xff]
      %v2141 = vld [vmem:[%s1728 + $0xb1] sm:$0xff]
      %v2142 = vld [vmem:[%s1728 + $0xc9] sm:$0xff]
      %v2143 = vld [vmem:[%s1728 + $0xd1] sm:$0xff]
      %v2144 = vld [vmem:[%s1728 + $0xe9] sm:$0xff]
      %v2145 = vld [vmem:[%s1728 + $0xf1] sm:$0xff]
      %v2146 = vld [vmem:[%s1728 + $0x109] sm:$0xff]
      %v2147 = vld [vmem:[%s1728 + $0x111] sm:$0xff]
      %v2148 = vld [vmem:[%s1728 + $0x129] sm:$0xff]
      %v2149 = vld [vmem:[%s1728 + $0x131] sm:$0xff]
      %v2150 = vld [vmem:[%s1728 + $0x149] sm:$0xff]
      %v2151 = vld [vmem:[%s1728 + $0x151] sm:$0xff]
      %v2152 = vld [vmem:[%s1728 + $0x169] sm:$0xff]
      %v2153 = vld [vmem:[%s1728 + $0x171] sm:$0xff]
      %v2154 = vld [vmem:[%s1728 + $0x189] sm:$0xff]
      %v2155 = vld [vmem:[%s1728 + $0x191] sm:$0xff]
      %v2156 = vld [vmem:[%s1728 + $0x1a9] sm:$0xff]
      %v2157 = vld [vmem:[%s1728 + $0x1b1] sm:$0xff]
      %v2158 = vld [vmem:[%s1728 + $0x1c9] sm:$0xff]
      %v2159 = vld [vmem:[%s1728 + $0x1d1] sm:$0xff]
      %v2160 = vld [vmem:[%s1728 + $0x1e9] sm:$0xff]
      %v2161 = vld [vmem:[%s1728 + $0x1f1] sm:$0xff]
      %v2162 = vlaneseq
      %v2163 = vshrl.u32 %v2162, 7
      %v2164 = vsub.s32 2, %v2163
      %v2165 = vrot.slane %v718, %v2164
      %v2166 = vmul.f32 %v2130, %v2165
      %v2167 = vmul.f32 %v2131, %v2165
      %v2168 = vmul.f32 %v2132, %v2165
      %v2169 = vmul.f32 %v2133, %v2165
      %v2170 = vmul.f32 %v2134, %v2165
      %v2171 = vmul.f32 %v2135, %v2165
      %v2172 = vmul.f32 %v2136, %v2165
      %v2173 = vmul.f32 %v2137, %v2165
      %v2174 = vmul.f32 %v2138, %v2165
      %v2175 = vmul.f32 %v2139, %v2165
      %v2176 = vmul.f32 %v2140, %v2165
      %v2177 = vmul.f32 %v2141, %v2165
      %v2178 = vmul.f32 %v2142, %v2165
      %v2179 = vmul.f32 %v2143, %v2165
      %v2180 = vmul.f32 %v2144, %v2165
      %v2181 = vmul.f32 %v2145, %v2165
      %v2182 = vmul.f32 %v2146, %v2165
      %v2183 = vmul.f32 %v2147, %v2165
      %v2184 = vmul.f32 %v2148, %v2165
      %v2185 = vmul.f32 %v2149, %v2165
      %v2186 = vmul.f32 %v2150, %v2165
      %v2187 = vmul.f32 %v2151, %v2165
      %v2188 = vmul.f32 %v2152, %v2165
      %v2189 = vmul.f32 %v2153, %v2165
      %v2190 = vmul.f32 %v2154, %v2165
      %v2191 = vmul.f32 %v2155, %v2165
      %v2192 = vmul.f32 %v2156, %v2165
      %v2193 = vmul.f32 %v2157, %v2165
      %v2194 = vmul.f32 %v2158, %v2165
      %v2195 = vmul.f32 %v2159, %v2165
      %v2196 = vmul.f32 %v2160, %v2165
      %v2197 = vmul.f32 %v2161, %v2165
      %v2198 = vld [vmem:[%s1797 + $0xa] sm:$0xff]
      %v2199 = vld [vmem:[%s1797 + $0x12] sm:$0xff]
      %v2200 = vld [vmem:[%s1797 + $0x2a] sm:$0xff]
      %v2201 = vld [vmem:[%s1797 + $0x32] sm:$0xff]
      %v2202 = vld [vmem:[%s1797 + $0x4a] sm:$0xff]
      %v2203 = vld [vmem:[%s1797 + $0x52] sm:$0xff]
      %v2204 = vld [vmem:[%s1797 + $0x6a] sm:$0xff]
      %v2205 = vld [vmem:[%s1797 + $0x72] sm:$0xff]
      %v2206 = vld [vmem:[%s1797 + $0x8a] sm:$0xff]
      %v2207 = vld [vmem:[%s1797 + $0x92] sm:$0xff]
      %v2208 = vld [vmem:[%s1797 + $0xaa] sm:$0xff]
      %v2209 = vld [vmem:[%s1797 + $0xb2] sm:$0xff]
      %v2210 = vld [vmem:[%s1797 + $0xca] sm:$0xff]
      %v2211 = vld [vmem:[%s1797 + $0xd2] sm:$0xff]
      %v2212 = vld [vmem:[%s1797 + $0xea] sm:$0xff]
      %v2213 = vld [vmem:[%s1797 + $0xf2] sm:$0xff]
      %v2214 = vld [vmem:[%s1797 + $0x10a] sm:$0xff]
      %v2215 = vld [vmem:[%s1797 + $0x112] sm:$0xff]
      %v2216 = vld [vmem:[%s1797 + $0x12a] sm:$0xff]
      %v2217 = vld [vmem:[%s1797 + $0x132] sm:$0xff]
      %v2218 = vld [vmem:[%s1797 + $0x14a] sm:$0xff]
      %v2219 = vld [vmem:[%s1797 + $0x152] sm:$0xff]
      %v2220 = vld [vmem:[%s1797 + $0x16a] sm:$0xff]
      %v2221 = vld [vmem:[%s1797 + $0x172] sm:$0xff]
      %v2222 = vld [vmem:[%s1797 + $0x18a] sm:$0xff]
      %v2223 = vld [vmem:[%s1797 + $0x192] sm:$0xff]
      %v2224 = vld [vmem:[%s1797 + $0x1aa] sm:$0xff]
      %v2225 = vld [vmem:[%s1797 + $0x1b2] sm:$0xff]
      %v2226 = vld [vmem:[%s1797 + $0x1ca] sm:$0xff]
      %v2227 = vld [vmem:[%s1797 + $0x1d2] sm:$0xff]
      %v2228 = vld [vmem:[%s1797 + $0x1ea] sm:$0xff]
      %v2229 = vld [vmem:[%s1797 + $0x1f2] sm:$0xff]
      %v2230 = vlaneseq
      %v2231 = vshrl.u32 %v2230, 7
      %v2232 = vsub.s32 2, %v2231
      %v2233 = vrot.slane %v721, %v2232
      %v2234 = vmul.f32 %v2198, %v2233
      %v2235 = vmul.f32 %v2199, %v2233
      %v2236 = vmul.f32 %v2200, %v2233
      %v2237 = vmul.f32 %v2201, %v2233
      %v2238 = vmul.f32 %v2202, %v2233
      %v2239 = vmul.f32 %v2203, %v2233
      %v2240 = vmul.f32 %v2204, %v2233
      %v2241 = vmul.f32 %v2205, %v2233
      %v2242 = vmul.f32 %v2206, %v2233
      %v2243 = vmul.f32 %v2207, %v2233
      %v2244 = vmul.f32 %v2208, %v2233
      %v2245 = vmul.f32 %v2209, %v2233
      %v2246 = vmul.f32 %v2210, %v2233
      %v2247 = vmul.f32 %v2211, %v2233
      %v2248 = vmul.f32 %v2212, %v2233
      %v2249 = vmul.f32 %v2213, %v2233
      %v2250 = vmul.f32 %v2214, %v2233
      %v2251 = vmul.f32 %v2215, %v2233
      %v2252 = vmul.f32 %v2216, %v2233
      %v2253 = vmul.f32 %v2217, %v2233
      %v2254 = vmul.f32 %v2218, %v2233
      %v2255 = vmul.f32 %v2219, %v2233
      %v2256 = vmul.f32 %v2220, %v2233
      %v2257 = vmul.f32 %v2221, %v2233
      %v2258 = vmul.f32 %v2222, %v2233
      %v2259 = vmul.f32 %v2223, %v2233
      %v2260 = vmul.f32 %v2224, %v2233
      %v2261 = vmul.f32 %v2225, %v2233
      %v2262 = vmul.f32 %v2226, %v2233
      %v2263 = vmul.f32 %v2227, %v2233
      %v2264 = vmul.f32 %v2228, %v2233
      %v2265 = vmul.f32 %v2229, %v2233
      %v2266 = vadd.f32 %v2066, %v2166
      %v2267 = vadd.f32 %v2067, %v2167
      %v2268 = vadd.f32 %v2068, %v2168
      %v2269 = vadd.f32 %v2069, %v2169
      %v2270 = vadd.f32 %v2070, %v2170
      %v2271 = vadd.f32 %v2071, %v2171
      %v2272 = vadd.f32 %v2072, %v2172
      %v2273 = vadd.f32 %v2073, %v2173
      %v2274 = vadd.f32 %v2074, %v2174
      %v2275 = vadd.f32 %v2075, %v2175
      %v2276 = vadd.f32 %v2076, %v2176
      %v2277 = vadd.f32 %v2077, %v2177
      %v2278 = vadd.f32 %v2078, %v2178
      %v2279 = vadd.f32 %v2079, %v2179
      %v2280 = vadd.f32 %v2080, %v2180
      %v2281 = vadd.f32 %v2081, %v2181
      %v2282 = vadd.f32 %v2082, %v2182
      %v2283 = vadd.f32 %v2083, %v2183
      %v2284 = vadd.f32 %v2084, %v2184
      %v2285 = vadd.f32 %v2085, %v2185
      %v2286 = vadd.f32 %v2086, %v2186
      %v2287 = vadd.f32 %v2087, %v2187
      %v2288 = vadd.f32 %v2088, %v2188
      %v2289 = vadd.f32 %v2089, %v2189
      %v2290 = vadd.f32 %v2090, %v2190
      %v2291 = vadd.f32 %v2091, %v2191
      %v2292 = vadd.f32 %v2092, %v2192
      %v2293 = vadd.f32 %v2093, %v2193
      %v2294 = vadd.f32 %v2094, %v2194
      %v2295 = vadd.f32 %v2095, %v2195
      %v2296 = vadd.f32 %v2096, %v2196
      %v2297 = vadd.f32 %v2097, %v2197
      %v2298 = vadd.f32 %v2098, %v2234
      %v2299 = vadd.f32 %v2099, %v2235
      %v2300 = vadd.f32 %v2100, %v2236
      %v2301 = vadd.f32 %v2101, %v2237
      %v2302 = vadd.f32 %v2102, %v2238
      %v2303 = vadd.f32 %v2103, %v2239
      %v2304 = vadd.f32 %v2104, %v2240
      %v2305 = vadd.f32 %v2105, %v2241
      %v2306 = vadd.f32 %v2106, %v2242
      %v2307 = vadd.f32 %v2107, %v2243
      %v2308 = vadd.f32 %v2108, %v2244
      %v2309 = vadd.f32 %v2109, %v2245
      %v2310 = vadd.f32 %v2110, %v2246
      %v2311 = vadd.f32 %v2111, %v2247
      %v2312 = vadd.f32 %v2112, %v2248
      %v2313 = vadd.f32 %v2113, %v2249
      %v2314 = vadd.f32 %v2114, %v2250
      %v2315 = vadd.f32 %v2115, %v2251
      %v2316 = vadd.f32 %v2116, %v2252
      %v2317 = vadd.f32 %v2117, %v2253
      %v2318 = vadd.f32 %v2118, %v2254
      %v2319 = vadd.f32 %v2119, %v2255
      %v2320 = vadd.f32 %v2120, %v2256
      %v2321 = vadd.f32 %v2121, %v2257
      %v2322 = vadd.f32 %v2122, %v2258
      %v2323 = vadd.f32 %v2123, %v2259
      %v2324 = vadd.f32 %v2124, %v2260
      %v2325 = vadd.f32 %v2125, %v2261
      %v2326 = vadd.f32 %v2126, %v2262
      %v2327 = vadd.f32 %v2127, %v2263
      %v2328 = vadd.f32 %v2128, %v2264
      %v2329 = vadd.f32 %v2129, %v2265
      %v2330 = vadd.f32 %v2266, %v2298
      %v2331 = vadd.f32 %v2267, %v2299
      %v2332 = vadd.f32 %v2268, %v2300
      %v2333 = vadd.f32 %v2269, %v2301
      %v2334 = vadd.f32 %v2270, %v2302
      %v2335 = vadd.f32 %v2271, %v2303
      %v2336 = vadd.f32 %v2272, %v2304
      %v2337 = vadd.f32 %v2273, %v2305
      %v2338 = vadd.f32 %v2274, %v2306
      %v2339 = vadd.f32 %v2275, %v2307
      %v2340 = vadd.f32 %v2276, %v2308
      %v2341 = vadd.f32 %v2277, %v2309
      %v2342 = vadd.f32 %v2278, %v2310
      %v2343 = vadd.f32 %v2279, %v2311
      %v2344 = vadd.f32 %v2280, %v2312
      %v2345 = vadd.f32 %v2281, %v2313
      %v2346 = vadd.f32 %v2282, %v2314
      %v2347 = vadd.f32 %v2283, %v2315
      %v2348 = vadd.f32 %v2284, %v2316
      %v2349 = vadd.f32 %v2285, %v2317
      %v2350 = vadd.f32 %v2286, %v2318
      %v2351 = vadd.f32 %v2287, %v2319
      %v2352 = vadd.f32 %v2288, %v2320
      %v2353 = vadd.f32 %v2289, %v2321
      %v2354 = vadd.f32 %v2290, %v2322
      %v2355 = vadd.f32 %v2291, %v2323
      %v2356 = vadd.f32 %v2292, %v2324
      %v2357 = vadd.f32 %v2293, %v2325
      %v2358 = vadd.f32 %v2294, %v2326
      %v2359 = vadd.f32 %v2295, %v2327
      %v2360 = vadd.f32 %v2296, %v2328
      %v2361 = vadd.f32 %v2297, %v2329
      %2362 = vst.msk [vmem:[%s262] sm:$0xff] %vm269, %v2330
      %2363 = vst.msk [vmem:[%s262 + $0x8] sm:$0xff] %vm269, %v2331
      %2364 = vst.msk [vmem:[%s262 + $0x10] sm:$0xff] %vm269, %v2332
      %2365 = vst.msk [vmem:[%s262 + $0x18] sm:$0xff] %vm269, %v2333
      %2366 = vst.msk [vmem:[%s262 + $0x20] sm:$0xff] %vm269, %v2334
      %2367 = vst.msk [vmem:[%s262 + $0x28] sm:$0xff] %vm269, %v2335
      %2368 = vst.msk [vmem:[%s262 + $0x30] sm:$0xff] %vm269, %v2336
      %2369 = vst.msk [vmem:[%s262 + $0x38] sm:$0xff] %vm269, %v2337
      %2370 = vst.msk [vmem:[%s262 + $0x40] sm:$0xff] %vm269, %v2338
      %2371 = vst.msk [vmem:[%s262 + $0x48] sm:$0xff] %vm269, %v2339
      %2372 = vst.msk [vmem:[%s262 + $0x50] sm:$0xff] %vm269, %v2340
      %2373 = vst.msk [vmem:[%s262 + $0x58] sm:$0xff] %vm269, %v2341
      %2374 = vst.msk [vmem:[%s262 + $0x60] sm:$0xff] %vm269, %v2342
      %2375 = vst.msk [vmem:[%s262 + $0x68] sm:$0xff] %vm269, %v2343
      %2376 = vst.msk [vmem:[%s262 + $0x70] sm:$0xff] %vm269, %v2344
      %2377 = vst.msk [vmem:[%s262 + $0x78] sm:$0xff] %vm269, %v2345
      %2378 = vst.msk [vmem:[%s262 + $0x80] sm:$0xff] %vm269, %v2346
      %2379 = vst.msk [vmem:[%s262 + $0x88] sm:$0xff] %vm269, %v2347
      %2380 = vst.msk [vmem:[%s262 + $0x90] sm:$0xff] %vm269, %v2348
      %2381 = vst.msk [vmem:[%s262 + $0x98] sm:$0xff] %vm269, %v2349
      %2382 = vst.msk [vmem:[%s262 + $0xa0] sm:$0xff] %vm269, %v2350
      %2383 = vst.msk [vmem:[%s262 + $0xa8] sm:$0xff] %vm269, %v2351
      %2384 = vst.msk [vmem:[%s262 + $0xb0] sm:$0xff] %vm269, %v2352
      %2385 = vst.msk [vmem:[%s262 + $0xb8] sm:$0xff] %vm269, %v2353
      %2386 = vst.msk [vmem:[%s262 + $0xc0] sm:$0xff] %vm269, %v2354
      %2387 = vst.msk [vmem:[%s262 + $0xc8] sm:$0xff] %vm269, %v2355
      %2388 = vst.msk [vmem:[%s262 + $0xd0] sm:$0xff] %vm269, %v2356
      %2389 = vst.msk [vmem:[%s262 + $0xd8] sm:$0xff] %vm269, %v2357
      %2390 = vst.msk [vmem:[%s262 + $0xe0] sm:$0xff] %vm269, %v2358
      %2391 = vst.msk [vmem:[%s262 + $0xe8] sm:$0xff] %vm269, %v2359
      %2392 = vst.msk [vmem:[%s262 + $0xf0] sm:$0xff] %vm269, %v2360
      %2393 = vst.msk [vmem:[%s262 + $0xf8] sm:$0xff] %vm269, %v2361
      %v2394 = vsel %vm269, %v2330, 0.0
      %v2395 = vsel %vm269, %v2332, 0.0
      %v2396 = vadd.f32 %v2394, %v2395
      %v2397 = vsel %vm269, %v2334, 0.0
      %v2398 = vadd.f32 %v2396, %v2397
      %v2399 = vsel %vm269, %v2336, 0.0
      %v2400 = vadd.f32 %v2398, %v2399
      %v2401 = vsel %vm269, %v2338, 0.0
      %v2402 = vadd.f32 %v2400, %v2401
      %v2403 = vsel %vm269, %v2340, 0.0
      %v2404 = vadd.f32 %v2402, %v2403
      %v2405 = vsel %vm269, %v2342, 0.0
      %v2406 = vadd.f32 %v2404, %v2405
      %v2407 = vsel %vm269, %v2344, 0.0
      %v2408 = vadd.f32 %v2406, %v2407
      %v2409 = vsel %vm269, %v2346, 0.0
      %v2410 = vadd.f32 %v2408, %v2409
      %v2411 = vsel %vm269, %v2348, 0.0
      %v2412 = vadd.f32 %v2410, %v2411
      %v2413 = vsel %vm269, %v2350, 0.0
      %v2414 = vadd.f32 %v2412, %v2413
      %v2415 = vsel %vm269, %v2352, 0.0
      %v2416 = vadd.f32 %v2414, %v2415
      %v2417 = vsel %vm269, %v2354, 0.0
      %v2418 = vadd.f32 %v2416, %v2417
      %v2419 = vsel %vm269, %v2356, 0.0
      %v2420 = vadd.f32 %v2418, %v2419
      %v2421 = vsel %vm269, %v2358, 0.0
      %v2422 = vadd.f32 %v2420, %v2421
      %v2423 = vsel %vm269, %v2360, 0.0
      %v2424 = vadd.f32 %v2422, %v2423
      %v2425 = vsel %vm269, %v2331, 0.0
      %v2426 = vsel %vm269, %v2333, 0.0
      %v2427 = vadd.f32 %v2425, %v2426
      %v2428 = vsel %vm269, %v2335, 0.0
      %v2429 = vadd.f32 %v2427, %v2428
      %v2430 = vsel %vm269, %v2337, 0.0
      %v2431 = vadd.f32 %v2429, %v2430
      %v2432 = vsel %vm269, %v2339, 0.0
      %v2433 = vadd.f32 %v2431, %v2432
      %v2434 = vsel %vm269, %v2341, 0.0
      %v2435 = vadd.f32 %v2433, %v2434
      %v2436 = vsel %vm269, %v2343, 0.0
      %v2437 = vadd.f32 %v2435, %v2436
      %v2438 = vsel %vm269, %v2345, 0.0
      %v2439 = vadd.f32 %v2437, %v2438
      %v2440 = vsel %vm269, %v2347, 0.0
      %v2441 = vadd.f32 %v2439, %v2440
      %v2442 = vsel %vm269, %v2349, 0.0
      %v2443 = vadd.f32 %v2441, %v2442
      %v2444 = vsel %vm269, %v2351, 0.0
      %v2445 = vadd.f32 %v2443, %v2444
      %v2446 = vsel %vm269, %v2353, 0.0
      %v2447 = vadd.f32 %v2445, %v2446
      %v2448 = vsel %vm269, %v2355, 0.0
      %v2449 = vadd.f32 %v2447, %v2448
      %v2450 = vsel %vm269, %v2357, 0.0
      %v2451 = vadd.f32 %v2449, %v2450
      %v2452 = vsel %vm269, %v2359, 0.0
      %v2453 = vadd.f32 %v2451, %v2452
      %v2454 = vsel %vm269, %v2361, 0.0
      %v2455 = vadd.f32 %v2453, %v2454
      %v2456 = vsel %vm269, %v2424, 0.0
      %v2457 = vsel %vm269, %v2455, 0.0
      %v2458 = vadd.f32 %v2456, %v2457
      %v2459 = vrot.slane %v2458, 4
      %v2460 = vadd.f32 %v2458, %v2459
      %v2461 = vrot.slane %v2460, 2
      %v2462 = vadd.f32 %v2460, %v2461
      %v2463 = vrot.slane %v2462, 1
      %v2464 = vadd.f32 %v2462, %v2463
      %vm2465 = vcmask 253952
      %2466 = vst.msk [vmem:[%s265] sm:$0x1] %vm2465, %v2464
      %v2467 = vmul.f32 %v2330, %v2330
      %v2468 = vmul.f32 %v2331, %v2331
      %v2469 = vmul.f32 %v2332, %v2332
      %v2470 = vmul.f32 %v2333, %v2333
      %v2471 = vmul.f32 %v2334, %v2334
      %v2472 = vmul.f32 %v2335, %v2335
      %v2473 = vmul.f32 %v2336, %v2336
      %v2474 = vmul.f32 %v2337, %v2337
      %v2475 = vmul.f32 %v2338, %v2338
      %v2476 = vmul.f32 %v2339, %v2339
      %v2477 = vmul.f32 %v2340, %v2340
      %v2478 = vmul.f32 %v2341, %v2341
      %v2479 = vmul.f32 %v2342, %v2342
      %v2480 = vmul.f32 %v2343, %v2343
      %v2481 = vmul.f32 %v2344, %v2344
      %v2482 = vmul.f32 %v2345, %v2345
      %v2483 = vmul.f32 %v2346, %v2346
      %v2484 = vmul.f32 %v2347, %v2347
      %v2485 = vmul.f32 %v2348, %v2348
      %v2486 = vmul.f32 %v2349, %v2349
      %v2487 = vmul.f32 %v2350, %v2350
      %v2488 = vmul.f32 %v2351, %v2351
      %v2489 = vmul.f32 %v2352, %v2352
      %v2490 = vmul.f32 %v2353, %v2353
      %v2491 = vmul.f32 %v2354, %v2354
      %v2492 = vmul.f32 %v2355, %v2355
      %v2493 = vmul.f32 %v2356, %v2356
      %v2494 = vmul.f32 %v2357, %v2357
      %v2495 = vmul.f32 %v2358, %v2358
      %v2496 = vmul.f32 %v2359, %v2359
      %v2497 = vmul.f32 %v2360, %v2360
      %v2498 = vmul.f32 %v2361, %v2361
      %v2499 = vsel %vm269, %v2467, 0.0
      %v2500 = vsel %vm269, %v2469, 0.0
      %v2501 = vadd.f32 %v2499, %v2500
      %v2502 = vsel %vm269, %v2471, 0.0
      %v2503 = vadd.f32 %v2501, %v2502
      %v2504 = vsel %vm269, %v2473, 0.0
      %v2505 = vadd.f32 %v2503, %v2504
      %v2506 = vsel %vm269, %v2475, 0.0
      %v2507 = vadd.f32 %v2505, %v2506
      %v2508 = vsel %vm269, %v2477, 0.0
      %v2509 = vadd.f32 %v2507, %v2508
      %v2510 = vsel %vm269, %v2479, 0.0
      %v2511 = vadd.f32 %v2509, %v2510
      %v2512 = vsel %vm269, %v2481, 0.0
      %v2513 = vadd.f32 %v2511, %v2512
      %v2514 = vsel %vm269, %v2483, 0.0
      %v2515 = vadd.f32 %v2513, %v2514
      %v2516 = vsel %vm269, %v2485, 0.0
      %v2517 = vadd.f32 %v2515, %v2516
      %v2518 = vsel %vm269, %v2487, 0.0
      %v2519 = vadd.f32 %v2517, %v2518
      %v2520 = vsel %vm269, %v2489, 0.0
      %v2521 = vadd.f32 %v2519, %v2520
      %v2522 = vsel %vm269, %v2491, 0.0
      %v2523 = vadd.f32 %v2521, %v2522
      %v2524 = vsel %vm269, %v2493, 0.0
      %v2525 = vadd.f32 %v2523, %v2524
      %v2526 = vsel %vm269, %v2495, 0.0
      %v2527 = vadd.f32 %v2525, %v2526
      %v2528 = vsel %vm269, %v2497, 0.0
      %v2529 = vadd.f32 %v2527, %v2528
      %v2530 = vsel %vm269, %v2468, 0.0
      %v2531 = vsel %vm269, %v2470, 0.0
      %v2532 = vadd.f32 %v2530, %v2531
      %v2533 = vsel %vm269, %v2472, 0.0
      %v2534 = vadd.f32 %v2532, %v2533
      %v2535 = vsel %vm269, %v2474, 0.0
      %v2536 = vadd.f32 %v2534, %v2535
      %v2537 = vsel %vm269, %v2476, 0.0
      %v2538 = vadd.f32 %v2536, %v2537
      %v2539 = vsel %vm269, %v2478, 0.0
      %v2540 = vadd.f32 %v2538, %v2539
      %v2541 = vsel %vm269, %v2480, 0.0
      %v2542 = vadd.f32 %v2540, %v2541
      %v2543 = vsel %vm269, %v2482, 0.0
      %v2544 = vadd.f32 %v2542, %v2543
      %v2545 = vsel %vm269, %v2484, 0.0
      %v2546 = vadd.f32 %v2544, %v2545
      %v2547 = vsel %vm269, %v2486, 0.0
      %v2548 = vadd.f32 %v2546, %v2547
      %v2549 = vsel %vm269, %v2488, 0.0
      %v2550 = vadd.f32 %v2548, %v2549
      %v2551 = vsel %vm269, %v2490, 0.0
      %v2552 = vadd.f32 %v2550, %v2551
      %v2553 = vsel %vm269, %v2492, 0.0
      %v2554 = vadd.f32 %v2552, %v2553
      %v2555 = vsel %vm269, %v2494, 0.0
      %v2556 = vadd.f32 %v2554, %v2555
      %v2557 = vsel %vm269, %v2496, 0.0
      %v2558 = vadd.f32 %v2556, %v2557
      %v2559 = vsel %vm269, %v2498, 0.0
      %v2560 = vadd.f32 %v2558, %v2559
      %v2561 = vsel %vm269, %v2529, 0.0
      %v2562 = vsel %vm269, %v2560, 0.0
      %v2563 = vadd.f32 %v2561, %v2562
      %v2564 = vrot.slane %v2563, 4
      %v2565 = vadd.f32 %v2563, %v2564
      %v2566 = vrot.slane %v2565, 2
      %v2567 = vadd.f32 %v2565, %v2566
      %v2568 = vrot.slane %v2567, 1
      %v2569 = vadd.f32 %v2567, %v2568
      %2570 = vst.msk [vmem:[%s268] sm:$0x1] %vm2465, %v2569
      %p2571 = scmp.lt.s32.totalorder %s18, 1
      %s2572 = scalar_select %p2571, %s18, 1
      %s2573 = smul.addr %s2572, 32
      %s2574 = smul.addr %s2573, 8
      %s2575 = scalar_lea.vmem %s4, %s2574
      %p2576 = scmp.lt.s32.totalorder %s18, 1
      %s2577 = scalar_select %p2576, %s18, 1
      %s2578 = scalar_lea.vmem %s5, %s2577
      %p2579 = scmp.lt.s32.totalorder %s18, 1
      %s2580 = scalar_select %p2579, %s18, 1
      %s2581 = scalar_lea.vmem %s6, %s2580
      // Predicated region
      $region37: #{dilated_parallel_conv_block_d2.2} parent=35 // pred_check
        %p2582 = pneg %p125
      $region38: #{dilated_parallel_conv_block_d2.2} parent=35 // pred_check_branch
        %2584 = sbr.rel (%p2582) target = $region40
      $region39: #{dilated_parallel_conv_block_d2.2} parent=35 // pred_region
        _
      $region40: #{dilated_parallel_conv_block_d2.2} parent=35 // pred_fallthru
        _
      // Predicated region
      $region41: #{dilated_parallel_conv_block_d2.2} parent=35 // pred_check
        %p2585 = pneg %p151
      $region42: #{dilated_parallel_conv_block_d2.2} parent=35 // pred_check_branch
        %2587 = sbr.rel (%p2585) target = $region44
      $region43: #{dilated_parallel_conv_block_d2.2} parent=35 // pred_region
        _
      $region44: #{dilated_parallel_conv_block_d2.2} parent=35 // pred_fallthru
        _
      // Predicated region
      $region45: #{dilated_parallel_conv_block_d2.2} parent=35 // pred_check
        %p2588 = pneg %p177
      $region46: #{dilated_parallel_conv_block_d2.2} parent=35 // pred_check_branch
        %2590 = sbr.rel (%p2588) target = $region48
      $region47: #{dilated_parallel_conv_block_d2.2} parent=35 // pred_region
        _
      $region48: #{dilated_parallel_conv_block_d2.2} parent=35 // pred_fallthru
        _
    $region36: #{dilated_parallel_conv_block_d2.2} parent=5 // pred_fallthru
      _
    %p2591 = scmp.le.s32.totalorder 2, %s13
    // Predicated region
    $region49: #{dilated_parallel_conv_block_d2.2} parent=5 // pred_check
      %p2592 = pneg %p2591
    $region50: #{dilated_parallel_conv_block_d2.2} parent=5 // pred_check_branch
      %2594 = sbr.rel (%p2592) target = $region52
    $region51: #{dilated_parallel_conv_block_d2.2} parent=5 // pred_region
      %s2595 = ssub.s32 %s13, 2
      // Predicated region
      $region53: #{dilated_parallel_conv_block_d2.2} parent=51 // pred_check
        %p2596 = pneg %p131
      $region54: #{dilated_parallel_conv_block_d2.2} parent=51 // pred_check_branch
        %2598 = sbr.rel (%p2596) target = $region56
      $region55: #{dilated_parallel_conv_block_d2.2} parent=51 // pred_region
        %p2599 = scmp.lt.s32.totalorder %s19, 1
        %s2600 = scalar_select %p2599, %s19, 1
        %s2601 = smul.addr %s2600, 32
        %s2602 = smul.addr %s2601, 8
        %s2603 = scalar_lea.vmem %s4, %s2602
      $region56: #{dilated_parallel_conv_block_d2.2} parent=51 // pred_fallthru
        _
      // Predicated region
      $region57: #{dilated_parallel_conv_block_d2.2} parent=51 // pred_check
        %p2604 = pneg %p157
      $region58: #{dilated_parallel_conv_block_d2.2} parent=51 // pred_check_branch
        %2606 = sbr.rel (%p2604) target = $region60
      $region59: #{dilated_parallel_conv_block_d2.2} parent=51 // pred_region
        %p2607 = scmp.lt.s32.totalorder %s19, 1
        %s2608 = scalar_select %p2607, %s19, 1
        %s2609 = scalar_lea.vmem %s5, %s2608
      $region60: #{dilated_parallel_conv_block_d2.2} parent=51 // pred_fallthru
        _
      // Predicated region
      $region61: #{dilated_parallel_conv_block_d2.2} parent=51 // pred_check
        %p2610 = pneg %p183
      $region62: #{dilated_parallel_conv_block_d2.2} parent=51 // pred_check_branch
        %2612 = sbr.rel (%p2610) target = $region64
      $region63: #{dilated_parallel_conv_block_d2.2} parent=51 // pred_region
        %p2613 = scmp.lt.s32.totalorder %s19, 1
        %s2614 = scalar_select %p2613, %s19, 1
        %s2615 = scalar_lea.vmem %s6, %s2614
      $region64: #{dilated_parallel_conv_block_d2.2} parent=51 // pred_fallthru
        _
    $region52: #{dilated_parallel_conv_block_d2.2} parent=5 // pred_fallthru
      _
  $region6: #{dilated_parallel_conv_block_d2.2} parent=0 // loop_footer
    %s17 = sadd.s32 1, %s13
  $region7: #{dilated_parallel_conv_block_d2.2} parent=0 // loop_footer_branch
    %12 = sbr.rel target = $region3
  $region8: #{dilated_parallel_conv_block_d2.2} parent=0 // loop_exit
    _

</llo_original>
